<compile_context>
chip_gen: v7x
topology: tpu7x:2x2x1
jax: 0.10.0
libtpu: 0.0.40
codegen_flags: <defaults>
</compile_context>

<pallas_src>
import numpy as np
import jax
import jax.numpy as jnp
from jax.experimental import pallas as pl
from jax.experimental.pallas import tpu as pltpu


def _make_border_masks(H, W):
    """(5, (H+2)*(W+2)) f32 indicator planes over the flat padded geometry.

    Row 0: interior (the valid HxW pixels, used for InstanceNorm statistics).
    Rows 1-4: top / bottom / left / right 1-pixel pad ring (used to rebuild the
    reflect padding of the intermediate activation in-place)."""
    Hp, Wp = H + 2, W + 2
    m = np.zeros((5, Hp, Wp), np.float32)
    m[0, 1:H + 1, 1:W + 1] = 1.0
    m[1, 0, :] = 1.0
    m[2, Hp - 1, :] = 1.0
    m[3, :, 0] = 1.0
    m[4, :, Wp - 1] = 1.0
    return jnp.asarray(m.reshape(5, Hp * Wp))


def _make_resblock_kernel(C, H, W, matmul_dtype):
    Hp, Wp = H + 2, W + 2
    n_flat = Hp * Wp
    inv_hw = 1.0 / float(H * W)
    # tap offsets in the flat padded plane, (dy, dx) in row-major 3x3 order
    offsets = [(dy - 1) * Wp + (dx - 1) for dy in range(3) for dx in range(3)]

    def conv3x3(z, wt_ref):
        # 9 shifted taps via XLU lane rolls over the flat padded plane (no
        # strided-window relayouts, no (9C, HW) im2col temporary); one
        # (C, C) x (C, Hp*Wp) MXU matmul per tap, accumulated in f32.
        zc = z.astype(matmul_dtype)
        acc = None
        for t, off in enumerate(offsets):
            tap = zc if off == 0 else pltpu.roll(zc, (-off) % n_flat, axis=1)
            d = jnp.dot(wt_ref[t], tap, preferred_element_type=jnp.float32)
            acc = d if acc is None else acc + d
        return acc

    def kernel(x_ref, wt1_ref, wt2_ref, masks_ref, o_ref):
        # x_ref   : (C, Hp*Wp) f32 reflect-padded input plane (one image / step)
        # wt?_ref : (9, C, C)  per-tap weight blocks, (tap, C_out, C_in)
        # masks   : (5, Hp*Wp) f32 indicator planes (see _make_border_masks)
        # o_ref   : (C, Hp*Wp) padded-plane output; the wrapper crops the ring
        x = x_ref[...]
        interior = masks_ref[0:1, :]
        top, bot = masks_ref[1:2, :], masks_ref[2:3, :]
        left, right = masks_ref[3:4, :], masks_ref[4:5, :]

        def instance_norm(y):
            # InstanceNorm2d defaults (affine=False, biased var, eps=1e-5);
            # one-pass masked sum / sum-of-squares over the HxW interior.
            ym = y * interior
            s = jnp.sum(ym, axis=1, keepdims=True)
            ss = jnp.sum(ym * y, axis=1, keepdims=True)
            mean = s * inv_hw
            var = ss * inv_hw - mean * mean
            return (y - mean) * jax.lax.rsqrt(var + 1e-5)

        # block 1: conv -> IN -> LeakyReLU(0.2); conv bias cancelled by IN.
        y = conv3x3(x, wt1_ref)
        y = instance_norm(y)
        y = jnp.where(y > 0, y, 0.2 * y)

        # Rebuild the reflect padding of the intermediate directly in the flat
        # padded layout (rows first, then columns so corners match PyTorch
        # ReflectionPad2d). Pad-ring values are garbage before this point and
        # are excluded from the IN statistics above.
        def blend(z, m, rolled):
            return z + m * (rolled - z)

        y = blend(y, top, pltpu.roll(y, (-2 * Wp) % n_flat, axis=1))   # row 0    <- row 2
        y = blend(y, bot, pltpu.roll(y, 2 * Wp, axis=1))               # row Hp-1 <- row Hp-3
        y = blend(y, left, pltpu.roll(y, (-2) % n_flat, axis=1))       # col 0    <- col 2
        y = blend(y, right, pltpu.roll(y, 2, axis=1))                  # col Wp-1 <- col Wp-3

        # block 2: conv -> IN (no activation); residual add over the padded
        # plane (the 1-pixel ring is cropped by the wrapper).
        y2 = instance_norm(conv3x3(y, wt2_ref))
        o_ref[...] = (x + y2).astype(o_ref.dtype)

    return kernel


def residual_block(x_nchw, w1, b1, w2, b2, *, matmul_dtype=jnp.bfloat16):
    """x_nchw: (N, C, H, W); w: (3, 3, C_in, C_out) HWIO; b: (1, C).

    Biases are accepted for signature compatibility but unused in the kernel:
    they are mathematically cancelled by the affine=False InstanceNorm that
    immediately follows each conv.
    """
    del b1, b2
    N, C, H, W = x_nchw.shape
    Hp, Wp = H + 2, W + 2
    n_flat = Hp * Wp

    # Reflect-pad once on the XLA/HBM side and flatten to a lane-dense
    # (C, Hp*Wp) plane; the kernel forms conv taps with cheap XLU lane rolls.
    xpad = jnp.pad(x_nchw, ((0, 0), (0, 0), (1, 1), (1, 1)), mode="reflect")
    xpad = xpad.reshape(N, C, n_flat)

    # (3, 3, C_in, C_out) -> (9, C_out, C_in) per-tap weight blocks (bf16).
    wt1 = jnp.transpose(w1.reshape(9, C, C), (0, 2, 1)).astype(matmul_dtype)
    wt2 = jnp.transpose(w2.reshape(9, C, C), (0, 2, 1)).astype(matmul_dtype)
    masks = _make_border_masks(H, W)

    kernel = _make_resblock_kernel(C, H, W, matmul_dtype)

    # VMEM budget: double-buffered x/out blocks + weights (fetched once) +
    # in-kernel temporaries; clamped to [32, 64] MiB (safe on v5e/v6e/v7x).
    itemsize = jnp.dtype(matmul_dtype).itemsize
    plane = C * n_flat * 4
    wt_total = 2 * 9 * C * C * itemsize
    est_vmem = 4 * plane + 2 * wt_total + 10 * plane + 8 * n_flat + (2 << 20)
    vmem_limit = int(min(max(est_vmem, 32 * 1024 * 1024), 64 * 1024 * 1024))

    cost = pl.CostEstimate(
        flops=int(N * (2 * 2 * 9 * C * C * n_flat + 24 * C * n_flat)),
        transcendentals=int(2 * N * C),
        bytes_accessed=int(2 * N * plane + wt_total + 4 * 5 * n_flat),
    )

    # TODO(synk): for per-device N == 1 on v7x (2 TensorCores) or very large
    # C*H*W, add an H-strip grid axis (1-row halo + two-pass InstanceNorm
    # sum/sumsq) so both cores stay busy and blocks fit 64 MiB VMEM.
    out_flat = pl.pallas_call(
        kernel,
        out_shape=jax.ShapeDtypeStruct((N, C, n_flat), x_nchw.dtype),
        grid=(N,),
        in_specs=[
            pl.BlockSpec((None, C, n_flat), lambda n: (n, 0, 0)),
            pl.BlockSpec((9, C, C), lambda n: (0, 0, 0)),
            pl.BlockSpec((9, C, C), lambda n: (0, 0, 0)),
            pl.BlockSpec((5, n_flat), lambda n: (0, 0)),
        ],
        out_specs=pl.BlockSpec((None, C, n_flat), lambda n: (n, 0, 0)),
        compiler_params=pltpu.CompilerParams(
            dimension_semantics=("parallel",),
            vmem_limit_bytes=vmem_limit,
        ),
        cost_estimate=cost,
    )(xpad, wt1, wt2, masks)

    # Crop the 1-pixel pad ring (free reshape + a thin XLA slice that fuses
    # into the consumer); the kernel itself never does a strided relayout.
    return out_flat.reshape(N, C, Hp, Wp)[:, :, 1:H + 1, 1:W + 1]


def _ref_residual_block(x_nchw, w1, b1, w2, b2):
    # pure-JAX reference (XLA convs, biases included) for verification
    x = jnp.transpose(x_nchw, (0, 2, 3, 1))

    def conv(inp, w, b):
        xp = jnp.pad(inp, ((0, 0), (1, 1), (1, 1), (0, 0)), mode='reflect')
        y = jax.lax.conv_general_dilated(
            xp, w, (1, 1), 'VALID',
            dimension_numbers=('NHWC', 'HWIO', 'NHWC'))
        return y + b.reshape(1, 1, 1, -1)

    def inorm(y, eps=1e-5):
        mean = jnp.mean(y, axis=(1, 2), keepdims=True)
        var = jnp.mean((y - mean) ** 2, axis=(1, 2), keepdims=True)
        return (y - mean) * jax.lax.rsqrt(var + eps)

    y = conv(x, w1, b1)
    y = inorm(y)
    y = jnp.where(y > 0, y, 0.2 * y)
    y = conv(y, w2, b2)
    y = inorm(y)
    return jnp.transpose(x + y, (0, 3, 1, 2))


if __name__ == "__main__":
    key = jax.random.PRNGKey(0)
    N, C, H, W = 2, 4, 16, 16

    k_x, k_w1, k_b1, k_w2, k_b2 = jax.random.split(key, 5)
    x = jax.random.normal(k_x, (N, C, H, W), dtype=jnp.float32)

    # deterministic synthetic parameters (Conv2d-style fan_in scaling)
    fan_in = C * 3 * 3
    bound = 1.0 / np.sqrt(fan_in)
    w1 = jax.random.uniform(k_w1, (3, 3, C, C), jnp.float32, -bound, bound)
    b1 = jax.random.uniform(k_b1, (1, C), jnp.float32, -bound, bound)
    w2 = jax.random.uniform(k_w2, (3, 3, C, C), jnp.float32, -bound, bound)
    b2 = jax.random.uniform(k_b2, (1, C), jnp.float32, -bound, bound)

    ref = jax.block_until_ready(_ref_residual_block(x, w1, b1, w2, b2))

    # f32-matmul mode: tight check of the roll / mask / layout logic.
    out_f32 = jax.block_until_ready(
        residual_block(x, w1, b1, w2, b2, matmul_dtype=jnp.float32))
    np.testing.assert_allclose(np.asarray(out_f32), np.asarray(ref),
                               rtol=5e-4, atol=5e-4)

    # default bf16-matmul mode (MXU-native on v6e/v7x), f32 accumulation.
    out = jax.block_until_ready(residual_block(x, w1, b1, w2, b2))
    np.testing.assert_allclose(np.asarray(out), np.asarray(ref),
                               rtol=5e-2, atol=5e-2)
    print("KERNEL_OK")
</pallas_src>

<mosaic_0001>
module attributes {stable_mosaic.version = 11 : i64} {
  func.func @kernel(%arg0: i32, %arg1: memref<1x4x324xf32, #tpu.memory_space<vmem>>, %arg2: memref<9x4x4xf32, #tpu.memory_space<vmem>>, %arg3: memref<9x4x4xf32, #tpu.memory_space<vmem>>, %arg4: memref<5x324xf32, #tpu.memory_space<vmem>>, %arg5: memref<1x4x324xf32, #tpu.memory_space<vmem>>) attributes {dimension_semantics = [#tpu.dimension_semantics<parallel>], iteration_bounds = array<i64: 2>, scalar_prefetch = 0 : i64, scratch_operands = 0 : i64, tpu.core_type = #tpu.core_type<tc>, window_params = [{transform_indices = @transform_0, window_bounds = array<i64: 1, 4, 324>}, {pipeline_mode = #tpu.pipeline_mode<synchronous>, transform_indices = @transform_1, window_bounds = array<i64: 9, 4, 4>}, {pipeline_mode = #tpu.pipeline_mode<synchronous>, transform_indices = @transform_2, window_bounds = array<i64: 9, 4, 4>}, {pipeline_mode = #tpu.pipeline_mode<synchronous>, transform_indices = @transform_3, window_bounds = array<i64: 5, 324>}, {transform_indices = @transform_4, window_bounds = array<i64: 1, 4, 324>}]} {
    %c0 = arith.constant 0 : index
    %c0_0 = arith.constant 0 : index
    %c0_1 = arith.constant 0 : index
    %0 = vector.load %arg1[%c0, %c0_0, %c0_1] : memref<1x4x324xf32, #tpu.memory_space<vmem>>, vector<1x4x324xf32>
    %1 = vector.shape_cast %0 : vector<1x4x324xf32> to vector<4x324xf32>
    %c0_2 = arith.constant 0 : index
    %c0_3 = arith.constant 0 : index
    %2 = vector.load %arg4[%c0_2, %c0_3] : memref<5x324xf32, #tpu.memory_space<vmem>>, vector<1x324xf32>
    %c1 = arith.constant 1 : index
    %c0_4 = arith.constant 0 : index
    %3 = vector.load %arg4[%c1, %c0_4] : memref<5x324xf32, #tpu.memory_space<vmem>>, vector<1x324xf32>
    %c2 = arith.constant 2 : index
    %c0_5 = arith.constant 0 : index
    %4 = vector.load %arg4[%c2, %c0_5] : memref<5x324xf32, #tpu.memory_space<vmem>>, vector<1x324xf32>
    %c3 = arith.constant 3 : index
    %c0_6 = arith.constant 0 : index
    %5 = vector.load %arg4[%c3, %c0_6] : memref<5x324xf32, #tpu.memory_space<vmem>>, vector<1x324xf32>
    %c4 = arith.constant 4 : index
    %c0_7 = arith.constant 0 : index
    %6 = vector.load %arg4[%c4, %c0_7] : memref<5x324xf32, #tpu.memory_space<vmem>>, vector<1x324xf32>
    %c19_i32 = arith.constant 19 : i32
    %7 = tpu.dynamic_rotate %1 by %c19_i32 dim 1 : vector<4x324xf32>, i32 -> vector<4x324xf32>
    %c0_8 = arith.constant 0 : index
    %c0_9 = arith.constant 0 : index
    %c0_10 = arith.constant 0 : index
    %8 = vector.load %arg2[%c0_8, %c0_9, %c0_10] : memref<9x4x4xf32, #tpu.memory_space<vmem>>, vector<1x4x4xf32>
    %9 = vector.shape_cast %8 : vector<1x4x4xf32> to vector<4x4xf32>
    %cst = arith.constant dense<0.000000e+00> : vector<4x324xf32>
    %10 = tpu.matmul %9, %7, %cst {dimension_numbers = #tpu.dot_dimension_numbers<[1], [0], [0], [1], [0, 0, 1, 1], [], []>} : vector<4x4xf32>, vector<4x324xf32>, vector<4x324xf32> -> vector<4x324xf32>
    %c18_i32 = arith.constant 18 : i32
    %11 = tpu.dynamic_rotate %1 by %c18_i32 dim 1 : vector<4x324xf32>, i32 -> vector<4x324xf32>
    %c1_11 = arith.constant 1 : index
    %c0_12 = arith.constant 0 : index
    %c0_13 = arith.constant 0 : index
    %12 = vector.load %arg2[%c1_11, %c0_12, %c0_13] : memref<9x4x4xf32, #tpu.memory_space<vmem>>, vector<1x4x4xf32>
    %13 = vector.shape_cast %12 : vector<1x4x4xf32> to vector<4x4xf32>
    %cst_14 = arith.constant dense<0.000000e+00> : vector<4x324xf32>
    %14 = tpu.matmul %13, %11, %cst_14 {dimension_numbers = #tpu.dot_dimension_numbers<[1], [0], [0], [1], [0, 0, 1, 1], [], []>} : vector<4x4xf32>, vector<4x324xf32>, vector<4x324xf32> -> vector<4x324xf32>
    %15 = arith.addf %10, %14 : vector<4x324xf32>
    %c17_i32 = arith.constant 17 : i32
    %16 = tpu.dynamic_rotate %1 by %c17_i32 dim 1 : vector<4x324xf32>, i32 -> vector<4x324xf32>
    %c2_15 = arith.constant 2 : index
    %c0_16 = arith.constant 0 : index
    %c0_17 = arith.constant 0 : index
    %17 = vector.load %arg2[%c2_15, %c0_16, %c0_17] : memref<9x4x4xf32, #tpu.memory_space<vmem>>, vector<1x4x4xf32>
    %18 = vector.shape_cast %17 : vector<1x4x4xf32> to vector<4x4xf32>
    %cst_18 = arith.constant dense<0.000000e+00> : vector<4x324xf32>
    %19 = tpu.matmul %18, %16, %cst_18 {dimension_numbers = #tpu.dot_dimension_numbers<[1], [0], [0], [1], [0, 0, 1, 1], [], []>} : vector<4x4xf32>, vector<4x324xf32>, vector<4x324xf32> -> vector<4x324xf32>
    %20 = arith.addf %15, %19 : vector<4x324xf32>
    %c1_i32 = arith.constant 1 : i32
    %21 = tpu.dynamic_rotate %1 by %c1_i32 dim 1 : vector<4x324xf32>, i32 -> vector<4x324xf32>
    %c3_19 = arith.constant 3 : index
    %c0_20 = arith.constant 0 : index
    %c0_21 = arith.constant 0 : index
    %22 = vector.load %arg2[%c3_19, %c0_20, %c0_21] : memref<9x4x4xf32, #tpu.memory_space<vmem>>, vector<1x4x4xf32>
    %23 = vector.shape_cast %22 : vector<1x4x4xf32> to vector<4x4xf32>
    %cst_22 = arith.constant dense<0.000000e+00> : vector<4x324xf32>
    %24 = tpu.matmul %23, %21, %cst_22 {dimension_numbers = #tpu.dot_dimension_numbers<[1], [0], [0], [1], [0, 0, 1, 1], [], []>} : vector<4x4xf32>, vector<4x324xf32>, vector<4x324xf32> -> vector<4x324xf32>
    %25 = arith.addf %20, %24 : vector<4x324xf32>
    %c4_23 = arith.constant 4 : index
    %c0_24 = arith.constant 0 : index
    %c0_25 = arith.constant 0 : index
    %26 = vector.load %arg2[%c4_23, %c0_24, %c0_25] : memref<9x4x4xf32, #tpu.memory_space<vmem>>, vector<1x4x4xf32>
    %27 = vector.shape_cast %26 : vector<1x4x4xf32> to vector<4x4xf32>
    %cst_26 = arith.constant dense<0.000000e+00> : vector<4x324xf32>
    %28 = tpu.matmul %27, %1, %cst_26 {dimension_numbers = #tpu.dot_dimension_numbers<[1], [0], [0], [1], [0, 0, 1, 1], [], []>} : vector<4x4xf32>, vector<4x324xf32>, vector<4x324xf32> -> vector<4x324xf32>
    %29 = arith.addf %25, %28 : vector<4x324xf32>
    %c323_i32 = arith.constant 323 : i32
    %30 = tpu.dynamic_rotate %1 by %c323_i32 dim 1 : vector<4x324xf32>, i32 -> vector<4x324xf32>
    %c5 = arith.constant 5 : index
    %c0_27 = arith.constant 0 : index
    %c0_28 = arith.constant 0 : index
    %31 = vector.load %arg2[%c5, %c0_27, %c0_28] : memref<9x4x4xf32, #tpu.memory_space<vmem>>, vector<1x4x4xf32>
    %32 = vector.shape_cast %31 : vector<1x4x4xf32> to vector<4x4xf32>
    %cst_29 = arith.constant dense<0.000000e+00> : vector<4x324xf32>
    %33 = tpu.matmul %32, %30, %cst_29 {dimension_numbers = #tpu.dot_dimension_numbers<[1], [0], [0], [1], [0, 0, 1, 1], [], []>} : vector<4x4xf32>, vector<4x324xf32>, vector<4x324xf32> -> vector<4x324xf32>
    %34 = arith.addf %29, %33 : vector<4x324xf32>
    %c307_i32 = arith.constant 307 : i32
    %35 = tpu.dynamic_rotate %1 by %c307_i32 dim 1 : vector<4x324xf32>, i32 -> vector<4x324xf32>
    %c6 = arith.constant 6 : index
    %c0_30 = arith.constant 0 : index
    %c0_31 = arith.constant 0 : index
    %36 = vector.load %arg2[%c6, %c0_30, %c0_31] : memref<9x4x4xf32, #tpu.memory_space<vmem>>, vector<1x4x4xf32>
    %37 = vector.shape_cast %36 : vector<1x4x4xf32> to vector<4x4xf32>
    %cst_32 = arith.constant dense<0.000000e+00> : vector<4x324xf32>
    %38 = tpu.matmul %37, %35, %cst_32 {dimension_numbers = #tpu.dot_dimension_numbers<[1], [0], [0], [1], [0, 0, 1, 1], [], []>} : vector<4x4xf32>, vector<4x324xf32>, vector<4x324xf32> -> vector<4x324xf32>
    %39 = arith.addf %34, %38 : vector<4x324xf32>
    %c306_i32 = arith.constant 306 : i32
    %40 = tpu.dynamic_rotate %1 by %c306_i32 dim 1 : vector<4x324xf32>, i32 -> vector<4x324xf32>
    %c7 = arith.constant 7 : index
    %c0_33 = arith.constant 0 : index
    %c0_34 = arith.constant 0 : index
    %41 = vector.load %arg2[%c7, %c0_33, %c0_34] : memref<9x4x4xf32, #tpu.memory_space<vmem>>, vector<1x4x4xf32>
    %42 = vector.shape_cast %41 : vector<1x4x4xf32> to vector<4x4xf32>
    %cst_35 = arith.constant dense<0.000000e+00> : vector<4x324xf32>
    %43 = tpu.matmul %42, %40, %cst_35 {dimension_numbers = #tpu.dot_dimension_numbers<[1], [0], [0], [1], [0, 0, 1, 1], [], []>} : vector<4x4xf32>, vector<4x324xf32>, vector<4x324xf32> -> vector<4x324xf32>
    %44 = arith.addf %39, %43 : vector<4x324xf32>
    %c305_i32 = arith.constant 305 : i32
    %45 = tpu.dynamic_rotate %1 by %c305_i32 dim 1 : vector<4x324xf32>, i32 -> vector<4x324xf32>
    %c8 = arith.constant 8 : index
    %c0_36 = arith.constant 0 : index
    %c0_37 = arith.constant 0 : index
    %46 = vector.load %arg2[%c8, %c0_36, %c0_37] : memref<9x4x4xf32, #tpu.memory_space<vmem>>, vector<1x4x4xf32>
    %47 = vector.shape_cast %46 : vector<1x4x4xf32> to vector<4x4xf32>
    %cst_38 = arith.constant dense<0.000000e+00> : vector<4x324xf32>
    %48 = tpu.matmul %47, %45, %cst_38 {dimension_numbers = #tpu.dot_dimension_numbers<[1], [0], [0], [1], [0, 0, 1, 1], [], []>} : vector<4x4xf32>, vector<4x324xf32>, vector<4x324xf32> -> vector<4x324xf32>
    %49 = arith.addf %44, %48 : vector<4x324xf32>
    %50 = vector.broadcast %2 : vector<1x324xf32> to vector<4x324xf32>
    %51 = arith.mulf %49, %50 : vector<4x324xf32>
    %cst_39 = arith.constant dense<0.000000e+00> : vector<4xf32>
    %52 = vector.multi_reduction <add>, %51, %cst_39 [1] : vector<4x324xf32> to vector<4xf32>
    %53 = vector.shape_cast %52 : vector<4xf32> to vector<4x1xf32>
    %54 = arith.mulf %51, %49 : vector<4x324xf32>
    %cst_40 = arith.constant dense<0.000000e+00> : vector<4xf32>
    %55 = vector.multi_reduction <add>, %54, %cst_40 [1] : vector<4x324xf32> to vector<4xf32>
    %56 = vector.shape_cast %55 : vector<4xf32> to vector<4x1xf32>
    %cst_41 = arith.constant 3.906250e-03 : f32
    %57 = vector.broadcast %cst_41 : f32 to vector<4x1xf32>
    %58 = arith.mulf %53, %57 : vector<4x1xf32>
    %cst_42 = arith.constant 3.906250e-03 : f32
    %59 = vector.broadcast %cst_42 : f32 to vector<4x1xf32>
    %60 = arith.mulf %56, %59 : vector<4x1xf32>
    %61 = arith.mulf %58, %58 : vector<4x1xf32>
    %62 = arith.subf %60, %61 : vector<4x1xf32>
    %63 = vector.broadcast %58 : vector<4x1xf32> to vector<4x324xf32>
    %64 = arith.subf %49, %63 : vector<4x324xf32>
    %cst_43 = arith.constant 9.99999974E-6 : f32
    %65 = vector.broadcast %cst_43 : f32 to vector<4x1xf32>
    %66 = arith.addf %62, %65 : vector<4x1xf32>
    %67 = math.rsqrt %66 : vector<4x1xf32>
    %68 = vector.broadcast %67 : vector<4x1xf32> to vector<4x324xf32>
    %69 = arith.mulf %64, %68 : vector<4x324xf32>
    %cst_44 = arith.constant 0.000000e+00 : f32
    %70 = vector.broadcast %cst_44 : f32 to vector<4x324xf32>
    %71 = arith.cmpf ogt, %69, %70 : vector<4x324xf32>
    %cst_45 = arith.constant 2.000000e-01 : f32
    %72 = vector.broadcast %cst_45 : f32 to vector<4x324xf32>
    %73 = arith.mulf %72, %69 : vector<4x324xf32>
    %74 = arith.select %71, %69, %73 : vector<4x324xi1>, vector<4x324xf32>
    %c288_i32 = arith.constant 288 : i32
    %75 = tpu.dynamic_rotate %74 by %c288_i32 dim 1 : vector<4x324xf32>, i32 -> vector<4x324xf32>
    %76 = arith.subf %75, %74 : vector<4x324xf32>
    %77 = vector.broadcast %3 : vector<1x324xf32> to vector<4x324xf32>
    %78 = arith.mulf %77, %76 : vector<4x324xf32>
    %79 = arith.addf %74, %78 : vector<4x324xf32>
    %c36_i32 = arith.constant 36 : i32
    %80 = tpu.dynamic_rotate %79 by %c36_i32 dim 1 : vector<4x324xf32>, i32 -> vector<4x324xf32>
    %81 = arith.subf %80, %79 : vector<4x324xf32>
    %82 = vector.broadcast %4 : vector<1x324xf32> to vector<4x324xf32>
    %83 = arith.mulf %82, %81 : vector<4x324xf32>
    %84 = arith.addf %79, %83 : vector<4x324xf32>
    %c322_i32 = arith.constant 322 : i32
    %85 = tpu.dynamic_rotate %84 by %c322_i32 dim 1 : vector<4x324xf32>, i32 -> vector<4x324xf32>
    %86 = arith.subf %85, %84 : vector<4x324xf32>
    %87 = vector.broadcast %5 : vector<1x324xf32> to vector<4x324xf32>
    %88 = arith.mulf %87, %86 : vector<4x324xf32>
    %89 = arith.addf %84, %88 : vector<4x324xf32>
    %c2_i32 = arith.constant 2 : i32
    %90 = tpu.dynamic_rotate %89 by %c2_i32 dim 1 : vector<4x324xf32>, i32 -> vector<4x324xf32>
    %91 = arith.subf %90, %89 : vector<4x324xf32>
    %92 = vector.broadcast %6 : vector<1x324xf32> to vector<4x324xf32>
    %93 = arith.mulf %92, %91 : vector<4x324xf32>
    %94 = arith.addf %89, %93 : vector<4x324xf32>
    %c19_i32_46 = arith.constant 19 : i32
    %95 = tpu.dynamic_rotate %94 by %c19_i32_46 dim 1 : vector<4x324xf32>, i32 -> vector<4x324xf32>
    %c0_47 = arith.constant 0 : index
    %c0_48 = arith.constant 0 : index
    %c0_49 = arith.constant 0 : index
    %96 = vector.load %arg3[%c0_47, %c0_48, %c0_49] : memref<9x4x4xf32, #tpu.memory_space<vmem>>, vector<1x4x4xf32>
    %97 = vector.shape_cast %96 : vector<1x4x4xf32> to vector<4x4xf32>
    %cst_50 = arith.constant dense<0.000000e+00> : vector<4x324xf32>
    %98 = tpu.matmul %97, %95, %cst_50 {dimension_numbers = #tpu.dot_dimension_numbers<[1], [0], [0], [1], [0, 0, 1, 1], [], []>} : vector<4x4xf32>, vector<4x324xf32>, vector<4x324xf32> -> vector<4x324xf32>
    %c18_i32_51 = arith.constant 18 : i32
    %99 = tpu.dynamic_rotate %94 by %c18_i32_51 dim 1 : vector<4x324xf32>, i32 -> vector<4x324xf32>
    %c1_52 = arith.constant 1 : index
    %c0_53 = arith.constant 0 : index
    %c0_54 = arith.constant 0 : index
    %100 = vector.load %arg3[%c1_52, %c0_53, %c0_54] : memref<9x4x4xf32, #tpu.memory_space<vmem>>, vector<1x4x4xf32>
    %101 = vector.shape_cast %100 : vector<1x4x4xf32> to vector<4x4xf32>
    %cst_55 = arith.constant dense<0.000000e+00> : vector<4x324xf32>
    %102 = tpu.matmul %101, %99, %cst_55 {dimension_numbers = #tpu.dot_dimension_numbers<[1], [0], [0], [1], [0, 0, 1, 1], [], []>} : vector<4x4xf32>, vector<4x324xf32>, vector<4x324xf32> -> vector<4x324xf32>
    %103 = arith.addf %98, %102 : vector<4x324xf32>
    %c17_i32_56 = arith.constant 17 : i32
    %104 = tpu.dynamic_rotate %94 by %c17_i32_56 dim 1 : vector<4x324xf32>, i32 -> vector<4x324xf32>
    %c2_57 = arith.constant 2 : index
    %c0_58 = arith.constant 0 : index
    %c0_59 = arith.constant 0 : index
    %105 = vector.load %arg3[%c2_57, %c0_58, %c0_59] : memref<9x4x4xf32, #tpu.memory_space<vmem>>, vector<1x4x4xf32>
    %106 = vector.shape_cast %105 : vector<1x4x4xf32> to vector<4x4xf32>
    %cst_60 = arith.constant dense<0.000000e+00> : vector<4x324xf32>
    %107 = tpu.matmul %106, %104, %cst_60 {dimension_numbers = #tpu.dot_dimension_numbers<[1], [0], [0], [1], [0, 0, 1, 1], [], []>} : vector<4x4xf32>, vector<4x324xf32>, vector<4x324xf32> -> vector<4x324xf32>
    %108 = arith.addf %103, %107 : vector<4x324xf32>
    %c1_i32_61 = arith.constant 1 : i32
    %109 = tpu.dynamic_rotate %94 by %c1_i32_61 dim 1 : vector<4x324xf32>, i32 -> vector<4x324xf32>
    %c3_62 = arith.constant 3 : index
    %c0_63 = arith.constant 0 : index
    %c0_64 = arith.constant 0 : index
    %110 = vector.load %arg3[%c3_62, %c0_63, %c0_64] : memref<9x4x4xf32, #tpu.memory_space<vmem>>, vector<1x4x4xf32>
    %111 = vector.shape_cast %110 : vector<1x4x4xf32> to vector<4x4xf32>
    %cst_65 = arith.constant dense<0.000000e+00> : vector<4x324xf32>
    %112 = tpu.matmul %111, %109, %cst_65 {dimension_numbers = #tpu.dot_dimension_numbers<[1], [0], [0], [1], [0, 0, 1, 1], [], []>} : vector<4x4xf32>, vector<4x324xf32>, vector<4x324xf32> -> vector<4x324xf32>
    %113 = arith.addf %108, %112 : vector<4x324xf32>
    %c4_66 = arith.constant 4 : index
    %c0_67 = arith.constant 0 : index
    %c0_68 = arith.constant 0 : index
    %114 = vector.load %arg3[%c4_66, %c0_67, %c0_68] : memref<9x4x4xf32, #tpu.memory_space<vmem>>, vector<1x4x4xf32>
    %115 = vector.shape_cast %114 : vector<1x4x4xf32> to vector<4x4xf32>
    %cst_69 = arith.constant dense<0.000000e+00> : vector<4x324xf32>
    %116 = tpu.matmul %115, %94, %cst_69 {dimension_numbers = #tpu.dot_dimension_numbers<[1], [0], [0], [1], [0, 0, 1, 1], [], []>} : vector<4x4xf32>, vector<4x324xf32>, vector<4x324xf32> -> vector<4x324xf32>
    %117 = arith.addf %113, %116 : vector<4x324xf32>
    %c323_i32_70 = arith.constant 323 : i32
    %118 = tpu.dynamic_rotate %94 by %c323_i32_70 dim 1 : vector<4x324xf32>, i32 -> vector<4x324xf32>
    %c5_71 = arith.constant 5 : index
    %c0_72 = arith.constant 0 : index
    %c0_73 = arith.constant 0 : index
    %119 = vector.load %arg3[%c5_71, %c0_72, %c0_73] : memref<9x4x4xf32, #tpu.memory_space<vmem>>, vector<1x4x4xf32>
    %120 = vector.shape_cast %119 : vector<1x4x4xf32> to vector<4x4xf32>
    %cst_74 = arith.constant dense<0.000000e+00> : vector<4x324xf32>
    %121 = tpu.matmul %120, %118, %cst_74 {dimension_numbers = #tpu.dot_dimension_numbers<[1], [0], [0], [1], [0, 0, 1, 1], [], []>} : vector<4x4xf32>, vector<4x324xf32>, vector<4x324xf32> -> vector<4x324xf32>
    %122 = arith.addf %117, %121 : vector<4x324xf32>
    %c307_i32_75 = arith.constant 307 : i32
    %123 = tpu.dynamic_rotate %94 by %c307_i32_75 dim 1 : vector<4x324xf32>, i32 -> vector<4x324xf32>
    %c6_76 = arith.constant 6 : index
    %c0_77 = arith.constant 0 : index
    %c0_78 = arith.constant 0 : index
    %124 = vector.load %arg3[%c6_76, %c0_77, %c0_78] : memref<9x4x4xf32, #tpu.memory_space<vmem>>, vector<1x4x4xf32>
    %125 = vector.shape_cast %124 : vector<1x4x4xf32> to vector<4x4xf32>
    %cst_79 = arith.constant dense<0.000000e+00> : vector<4x324xf32>
    %126 = tpu.matmul %125, %123, %cst_79 {dimension_numbers = #tpu.dot_dimension_numbers<[1], [0], [0], [1], [0, 0, 1, 1], [], []>} : vector<4x4xf32>, vector<4x324xf32>, vector<4x324xf32> -> vector<4x324xf32>
    %127 = arith.addf %122, %126 : vector<4x324xf32>
    %c306_i32_80 = arith.constant 306 : i32
    %128 = tpu.dynamic_rotate %94 by %c306_i32_80 dim 1 : vector<4x324xf32>, i32 -> vector<4x324xf32>
    %c7_81 = arith.constant 7 : index
    %c0_82 = arith.constant 0 : index
    %c0_83 = arith.constant 0 : index
    %129 = vector.load %arg3[%c7_81, %c0_82, %c0_83] : memref<9x4x4xf32, #tpu.memory_space<vmem>>, vector<1x4x4xf32>
    %130 = vector.shape_cast %129 : vector<1x4x4xf32> to vector<4x4xf32>
    %cst_84 = arith.constant dense<0.000000e+00> : vector<4x324xf32>
    %131 = tpu.matmul %130, %128, %cst_84 {dimension_numbers = #tpu.dot_dimension_numbers<[1], [0], [0], [1], [0, 0, 1, 1], [], []>} : vector<4x4xf32>, vector<4x324xf32>, vector<4x324xf32> -> vector<4x324xf32>
    %132 = arith.addf %127, %131 : vector<4x324xf32>
    %c305_i32_85 = arith.constant 305 : i32
    %133 = tpu.dynamic_rotate %94 by %c305_i32_85 dim 1 : vector<4x324xf32>, i32 -> vector<4x324xf32>
    %c8_86 = arith.constant 8 : index
    %c0_87 = arith.constant 0 : index
    %c0_88 = arith.constant 0 : index
    %134 = vector.load %arg3[%c8_86, %c0_87, %c0_88] : memref<9x4x4xf32, #tpu.memory_space<vmem>>, vector<1x4x4xf32>
    %135 = vector.shape_cast %134 : vector<1x4x4xf32> to vector<4x4xf32>
    %cst_89 = arith.constant dense<0.000000e+00> : vector<4x324xf32>
    %136 = tpu.matmul %135, %133, %cst_89 {dimension_numbers = #tpu.dot_dimension_numbers<[1], [0], [0], [1], [0, 0, 1, 1], [], []>} : vector<4x4xf32>, vector<4x324xf32>, vector<4x324xf32> -> vector<4x324xf32>
    %137 = arith.addf %132, %136 : vector<4x324xf32>
    %138 = vector.broadcast %2 : vector<1x324xf32> to vector<4x324xf32>
    %139 = arith.mulf %137, %138 : vector<4x324xf32>
    %cst_90 = arith.constant dense<0.000000e+00> : vector<4xf32>
    %140 = vector.multi_reduction <add>, %139, %cst_90 [1] : vector<4x324xf32> to vector<4xf32>
    %141 = vector.shape_cast %140 : vector<4xf32> to vector<4x1xf32>
    %142 = arith.mulf %139, %137 : vector<4x324xf32>
    %cst_91 = arith.constant dense<0.000000e+00> : vector<4xf32>
    %143 = vector.multi_reduction <add>, %142, %cst_91 [1] : vector<4x324xf32> to vector<4xf32>
    %144 = vector.shape_cast %143 : vector<4xf32> to vector<4x1xf32>
    %cst_92 = arith.constant 3.906250e-03 : f32
    %145 = vector.broadcast %cst_92 : f32 to vector<4x1xf32>
    %146 = arith.mulf %141, %145 : vector<4x1xf32>
    %cst_93 = arith.constant 3.906250e-03 : f32
    %147 = vector.broadcast %cst_93 : f32 to vector<4x1xf32>
    %148 = arith.mulf %144, %147 : vector<4x1xf32>
    %149 = arith.mulf %146, %146 : vector<4x1xf32>
    %150 = arith.subf %148, %149 : vector<4x1xf32>
    %151 = vector.broadcast %146 : vector<4x1xf32> to vector<4x324xf32>
    %152 = arith.subf %137, %151 : vector<4x324xf32>
    %cst_94 = arith.constant 9.99999974E-6 : f32
    %153 = vector.broadcast %cst_94 : f32 to vector<4x1xf32>
    %154 = arith.addf %150, %153 : vector<4x1xf32>
    %155 = math.rsqrt %154 : vector<4x1xf32>
    %156 = vector.broadcast %155 : vector<4x1xf32> to vector<4x324xf32>
    %157 = arith.mulf %152, %156 : vector<4x324xf32>
    %158 = arith.addf %1, %157 : vector<4x324xf32>
    %c0_95 = arith.constant 0 : index
    %c0_96 = arith.constant 0 : index
    %c0_97 = arith.constant 0 : index
    %159 = vector.load %arg5[%c0_95, %c0_96, %c0_97] : memref<1x4x324xf32, #tpu.memory_space<vmem>>, vector<1x4x324xf32>
    %160 = vector.shape_cast %159 : vector<1x4x324xf32> to vector<4x324xf32>
    %161 = vector.shape_cast %158 : vector<4x324xf32> to vector<1x4x324xf32>
    tpu.vector_store %arg5[%c0_95, %c0_96, %c0_97], %161 {strides = array<i32>} : memref<1x4x324xf32, #tpu.memory_space<vmem>>, vector<1x4x324xf32>,
    return
  }
  func.func @transform_0(%arg0: i32) -> (i32, i32, i32) {
    %c0_i32 = arith.constant 0 : i32
    %c0_i32_0 = arith.constant 0 : i32
    %c0_i32_1 = arith.constant 0 : i32
    return %arg0, %c0_i32, %c0_i32_0 : i32, i32, i32
  }
  func.func @transform_1(%arg0: i32) -> (i32, i32, i32) {
    %c0_i32 = arith.constant 0 : i32
    %c0_i32_0 = arith.constant 0 : i32
    %c0_i32_1 = arith.constant 0 : i32
    %c0_i32_2 = arith.constant 0 : i32
    return %c0_i32, %c0_i32_0, %c0_i32_1 : i32, i32, i32
  }
  func.func @transform_2(%arg0: i32) -> (i32, i32, i32) {
    %c0_i32 = arith.constant 0 : i32
    %c0_i32_0 = arith.constant 0 : i32
    %c0_i32_1 = arith.constant 0 : i32
    %c0_i32_2 = arith.constant 0 : i32
    return %c0_i32, %c0_i32_0, %c0_i32_1 : i32, i32, i32
  }
  func.func @transform_3(%arg0: i32) -> (i32, i32) {
    %c0_i32 = arith.constant 0 : i32
    %c0_i32_0 = arith.constant 0 : i32
    %c0_i32_1 = arith.constant 0 : i32
    return %c0_i32, %c0_i32_0 : i32, i32
  }
  func.func @transform_4(%arg0: i32) -> (i32, i32, i32) {
    %c0_i32 = arith.constant 0 : i32
    %c0_i32_0 = arith.constant 0 : i32
    %c0_i32_1 = arith.constant 0 : i32
    return %arg0, %c0_i32, %c0_i32_0 : i32, i32, i32
  }
}

</mosaic_0001>

<llo_original>
// kernel: tpu_custom_call.1
$region0: #{tpu_custom_call.1}
  #allocation0 [shape = 'u32[]', space=smem, size = 0x4, offset = 0x4, fixed_abs, tag = 'smem constant byte address 0x4 - core index']
  #allocation1 [shape = 'u32[144,128]{1,0:T(1,128)}', space=vmem, size = 0x12000, scoped, tag = 'internal scratch']
  %s0 = inlined_call_operand.vmem [shape: f32[2,4,324], index: 0, kind: input, shape index: {}]
  %s1 = inlined_call_operand.vmem [shape: f32[9,4,4], index: 1, kind: input, shape index: {}]
  %s2 = inlined_call_operand.vmem [shape: f32[9,4,4], index: 2, kind: input, shape index: {}]
  %s3 = inlined_call_operand.vmem [shape: f32[5,324], index: 3, kind: input, shape index: {}]
  %s4 = inlined_call_operand.hbm [shape: f32[2,4,324], index: 4, kind: output, shape index: {}]
  %s5 = sld [smem:[#allocation0]]
  $region49: #{tpu_custom_call.1} parent=0
    _
  %s7 = ssub.s32 1, %s5
  %s8 = scalar_select 0, %s7, %s5
  $region1: #{tpu_custom_call.1} parent=0
    #allocation2 [shape = 'u8[12288]{0}', space=vmem, size = 0x3000, scoped, tag = 'output window, operand 0']
    #allocation3 [shape = 's32[2]{0}', space=sflag, size = 0x8, scoped, tag = 'scoped memory for tpu_custom_call.1']
    %9 = vsyncpa [#allocation3], 0
    %s10 = scalar_lea.sflag [#allocation3], 1
    %11 = vsyncpa %s10, 0
    loop: start=0, step=1, limit=4
    $region2: #{tpu_custom_call.1} parent=1 // loop_pre_header
      _
    $region3: #{tpu_custom_call.1} parent=1 // loop_header
      %s13 = sphi 0, %s17
      %p14 = scmp.ge.s32.totalorder %s13, 4
      %s23 = sphi 0, %s25
      %s26 = sphi 0, %s23
      %s27 = sphi 0, %s26
      %s43 = sphi 0, %s27
      %s47 = sphi 0, %s47
      %s49 = sphi 0, %s47
      %s50 = sphi 0, %s49
      %s64 = sphi 0, %s50
      %s68 = sphi 0, %s68
      %s70 = sphi 0, %s68
      %s71 = sphi 0, %s70
      %s85 = sphi 0, %s71
      %s89 = sphi 0, %s89
      %s91 = sphi 0, %s89
      %s92 = sphi 0, %s91
      %s106 = sphi 0, %s92
      %s112 = sphi 0, %s114
      %s115 = sphi 0, %s112
      %s116 = sphi 0, %s115
      %s132 = sphi 0, %s116
    $region4: #{tpu_custom_call.1} parent=1 // loop_header_branch
      %16 = sbr.rel (%p14) target = $region8
    $region5: #{tpu_custom_call.1} parent=1 // loop_body
      %s18 = ssub.s32 %s13, 1
      %s19 = ssub.s32 %s13, 2
      %s20 = sadd.s32 %s13, 1
      %s21 = ssub.s32 %s13, %s20
      %p22 = scmp.eq.s32.totalorder %s21, 0
      %s24 = sadd.s32 %s23, 1
      %s25 = scalar_select %p22, %s23, %s24
      %p28 = pneg %p22
      %p29 = scmp.eq.s32.totalorder %s13, 1
      %p30 = por %p28, %p29
      %p31 = scmp.ne.s32.totalorder %s23, %s26
      %p32 = scmp.eq.s32.totalorder %s13, 0
      %p33 = por %p31, %p32
      %p34 = scmp.ne.s32.totalorder %s23, %s26
      %p35 = scmp.eq.s32.totalorder %s18, 1
      %p36 = por %p34, %p35
      %p37 = scmp.ne.s32.totalorder %s26, %s27
      %p38 = scmp.eq.s32.totalorder %s18, 0
      %p39 = por %p37, %p38
      %p40 = scmp.ne.s32.totalorder %s26, %s27
      %p41 = scmp.eq.s32.totalorder %s19, 1
      %p42 = por %p40, %p41
      %p44 = scmp.ne.s32.totalorder %s27, %s43
      %p45 = scmp.eq.s32.totalorder %s19, 0
      %p46 = por %p44, %p45
      %s48 = sadd.s32 %s47, 1
      %p51 = scmp.eq.s32.totalorder %s13, 1
      %p52 = scmp.ne.s32.totalorder %s47, %s49
      %p53 = scmp.eq.s32.totalorder %s13, 0
      %p54 = por %p52, %p53
      %p55 = scmp.ne.s32.totalorder %s47, %s49
      %p56 = scmp.eq.s32.totalorder %s18, 1
      %p57 = por %p55, %p56
      %p58 = scmp.ne.s32.totalorder %s49, %s50
      %p59 = scmp.eq.s32.totalorder %s18, 0
      %p60 = por %p58, %p59
      %p61 = scmp.ne.s32.totalorder %s49, %s50
      %p62 = scmp.eq.s32.totalorder %s19, 1
      %p63 = por %p61, %p62
      %p65 = scmp.ne.s32.totalorder %s50, %s64
      %p66 = scmp.eq.s32.totalorder %s19, 0
      %p67 = por %p65, %p66
      %s69 = sadd.s32 %s68, 1
      %p72 = scmp.eq.s32.totalorder %s13, 1
      %p73 = scmp.ne.s32.totalorder %s68, %s70
      %p74 = scmp.eq.s32.totalorder %s13, 0
      %p75 = por %p73, %p74
      %p76 = scmp.ne.s32.totalorder %s68, %s70
      %p77 = scmp.eq.s32.totalorder %s18, 1
      %p78 = por %p76, %p77
      %p79 = scmp.ne.s32.totalorder %s70, %s71
      %p80 = scmp.eq.s32.totalorder %s18, 0
      %p81 = por %p79, %p80
      %p82 = scmp.ne.s32.totalorder %s70, %s71
      %p83 = scmp.eq.s32.totalorder %s19, 1
      %p84 = por %p82, %p83
      %p86 = scmp.ne.s32.totalorder %s71, %s85
      %p87 = scmp.eq.s32.totalorder %s19, 0
      %p88 = por %p86, %p87
      %s90 = sadd.s32 %s89, 1
      %p93 = scmp.eq.s32.totalorder %s13, 1
      %p94 = scmp.ne.s32.totalorder %s89, %s91
      %p95 = scmp.eq.s32.totalorder %s13, 0
      %p96 = por %p94, %p95
      %p97 = scmp.ne.s32.totalorder %s89, %s91
      %p98 = scmp.eq.s32.totalorder %s18, 1
      %p99 = por %p97, %p98
      %p100 = scmp.ne.s32.totalorder %s91, %s92
      %p101 = scmp.eq.s32.totalorder %s18, 0
      %p102 = por %p100, %p101
      %p103 = scmp.ne.s32.totalorder %s91, %s92
      %p104 = scmp.eq.s32.totalorder %s19, 1
      %p105 = por %p103, %p104
      %p107 = scmp.ne.s32.totalorder %s92, %s106
      %p108 = scmp.eq.s32.totalorder %s19, 0
      %p109 = por %p107, %p108
      %s110 = ssub.s32 %s13, %s20
      %p111 = scmp.eq.s32.totalorder %s110, 0
      %s113 = sadd.s32 %s112, 1
      %s114 = scalar_select %p111, %s112, %s113
      %p117 = pneg %p111
      %p118 = scmp.eq.s32.totalorder %s13, 1
      %p119 = por %p117, %p118
      %p120 = scmp.ne.s32.totalorder %s112, %s115
      %p121 = scmp.eq.s32.totalorder %s13, 0
      %p122 = por %p120, %p121
      %p123 = scmp.ne.s32.totalorder %s112, %s115
      %p124 = scmp.eq.s32.totalorder %s18, 1
      %p125 = por %p123, %p124
      %p126 = scmp.ne.s32.totalorder %s115, %s116
      %p127 = scmp.eq.s32.totalorder %s18, 0
      %p128 = por %p126, %p127
      %p129 = scmp.ne.s32.totalorder %s115, %s116
      %p130 = scmp.eq.s32.totalorder %s19, 1
      %p131 = por %p129, %p130
      %p133 = scmp.ne.s32.totalorder %s116, %s132
      %p134 = scmp.eq.s32.totalorder %s19, 0
      %p135 = por %p133, %p134
      %p136 = scmp.le.s32.totalorder 1, %s13
      %p137 = scmp.lt.s32.totalorder %s13, 3
      %p138 = pnand %p136, %p137
      %p139 = pneg %p138
      // Predicated region
      $region9: #{tpu_custom_call.1} parent=5 // pred_check
        _
      $region10: #{tpu_custom_call.1} parent=5 // pred_check_branch
        %141 = sbr.rel (%p138) target = $region12
      $region11: #{tpu_custom_call.1} parent=5 // pred_region
        %s142 = ssub.s32 %s13, 1
        // Predicated region
        $region13: #{tpu_custom_call.1} parent=11 // pred_check
          %p143 = pneg %p60
        $region14: #{tpu_custom_call.1} parent=11 // pred_check_branch
          %145 = sbr.rel (%p143) target = $region16
        $region15: #{tpu_custom_call.1} parent=11 // pred_region
          _
        $region16: #{tpu_custom_call.1} parent=11 // pred_fallthru
          _
        // Predicated region
        $region17: #{tpu_custom_call.1} parent=11 // pred_check
          %p146 = pneg %p81
        $region18: #{tpu_custom_call.1} parent=11 // pred_check_branch
          %148 = sbr.rel (%p146) target = $region20
        $region19: #{tpu_custom_call.1} parent=11 // pred_region
          _
        $region20: #{tpu_custom_call.1} parent=11 // pred_fallthru
          _
        // Predicated region
        $region21: #{tpu_custom_call.1} parent=11 // pred_check
          %p149 = pneg %p102
        $region22: #{tpu_custom_call.1} parent=11 // pred_check_branch
          %151 = sbr.rel (%p149) target = $region24
        $region23: #{tpu_custom_call.1} parent=11 // pred_region
          _
        $region24: #{tpu_custom_call.1} parent=11 // pred_fallthru
          _
      $region12: #{tpu_custom_call.1} parent=5 // pred_fallthru
        _
      %p152 = scmp.lt.s32.totalorder %s13, 2
      // Predicated region
      $region25: #{tpu_custom_call.1} parent=5 // pred_check
        %p153 = pneg %p152
      $region26: #{tpu_custom_call.1} parent=5 // pred_check_branch
        %155 = sbr.rel (%p153) target = $region28
      $region27: #{tpu_custom_call.1} parent=5 // pred_region
        // Predicated region
        $region29: #{tpu_custom_call.1} parent=27 // pred_check
          %p156 = pneg %p33
        $region30: #{tpu_custom_call.1} parent=27 // pred_check_branch
          %158 = sbr.rel (%p156) target = $region32
        $region31: #{tpu_custom_call.1} parent=27 // pred_region
          %p159 = scmp.lt.s32.totalorder %s13, 1
          %s160 = scalar_select %p159, %s13, 1
          %s161 = smul.addr %s160, 3
          %s162 = smul.addr %s161, 4
          %s163 = scalar_lea.vmem %s0, %s162
        $region32: #{tpu_custom_call.1} parent=27 // pred_fallthru
          _
      $region28: #{tpu_custom_call.1} parent=5 // pred_fallthru
        _
      %p164 = scmp.le.s32.totalorder 1, %s13
      %p165 = scmp.lt.s32.totalorder %s13, 3
      %p166 = pnand %p164, %p165
      %p167 = pneg %p166
      // Predicated region
      $region33: #{tpu_custom_call.1} parent=5 // pred_check
        _
      $region34: #{tpu_custom_call.1} parent=5 // pred_check_branch
        %169 = sbr.rel (%p166) target = $region36
      $region35: #{tpu_custom_call.1} parent=5 // pred_region
        %s170 = ssub.s32 %s13, 1
        %p171 = scmp.lt.s32.totalorder %s18, 1
        %s172 = scalar_select %p171, %s18, 1
        %s173 = smul.addr %s172, 3
        %s174 = smul.addr %s173, 4
        %s175 = scalar_lea.vmem %s0, %s174
        %p176 = pneg %p39
        %p177 = pneg %p36
        %p178 = pneg %p60
        %p179 = pneg %p57
        %p180 = pneg %p81
        %p181 = pneg %p78
        %p182 = pneg %p102
        %p183 = pneg %p99
        %p184 = pneg %p128
        %p185 = pneg %p125
        %s186 = sand.u32 %s115, 1
        %s187 = scalar_lea.sflag [#allocation3], %s186
        %s188 = sand.u32 %s115, 1
        %s189 = smul.addr %s188, 12
        %s190 = scalar_lea.vmem [#allocation2], %s189
        %p191 = scmp.lt.s32.totalorder %s18, 1
        %s192 = scalar_select %p191, %s18, 1
        %s193 = smul.addr %s192, 3
        %s194 = smul.addr %s193, 4
        %s195 = scalar_lea.vmem %s0, %s194
        %v196 = vld [vmem:[%s195] sm:$0xff]
        %v197 = vld [vmem:[%s195 + $0x8] sm:$0xf]
        %v198 = vld [vmem:[%s3] ss:$8 sm:$0x7]
        %s199 = scalar_lea.vmem %s3, 1
        %v200 = vld [vmem:[%s199] ss:$8 sm:$0x7]
        %s201 = scalar_lea.vmem %s3, 2
        %v202 = vld [vmem:[%s201] ss:$8 sm:$0x7]
        %s203 = scalar_lea.vmem %s3, 3
        %v204 = vld [vmem:[%s203] ss:$8 sm:$0x7]
        %s205 = scalar_lea.vmem %s3, 4
        %v206 = vld [vmem:[%s205] ss:$8 sm:$0x7]
        %v209 = vcombine.high %v196, %v196
        %vm211 = vcmask 1048096
        %212 = vrot.lane.b32.xlu0 %v196, 68
        %v213 = vpop.permute.xlu0 %212
        %v214 = vsel %vm211, %v213, %v197
        %215 = vrot.lane.b32.xlu0 %v209, 68
        %v216 = vpop.permute.xlu0 %215
        %217 = vrot.lane.b32.xlu0 %v214, 68
        %v218 = vpop.permute.xlu0 %217
        %v219 = vsel %vm211, %v216, %v213
        %v220 = vsel %vm211, %v218, %v216
        %v221 = vld [vmem:[%s1] sm:$0xf]
        %s222 = scalar_lea.vmem %s1, 4
        %v223 = vld [vmem:[%s222] sm:$0xf]
        %227 = vrot.lane.b32.xlu0 %v214, 78
        %v228 = vpop.permute.xlu0 %227
        %229 = vrot.lane.b32.xlu0 %v219, 78
        %v230 = vpop.permute.xlu0 %229
        %231 = vrot.lane.b32.xlu0 %v220, 78
        %v232 = vpop.permute.xlu0 %231
        %vm233 = vcmask 637952
        %v234 = vsel %vm233, %v228, %v230
        %v235 = vsel %vm233, %v230, %v232
        %vm236 = vcmask 31744
        %v238 = vsel %vm236, %v223, 0
        %vm240 = vcmask 1043456
        %v241 = vsel %vm240, %v234, 0
        %v243 = vsel %vm240, %v235, 0
        %v245 = vsel %vm240, %v232, 0
        %247 = vmatprep.subr.mxu0 %v243
        %248 = vmatpush1.msra.mxu0 %v241
        %249 = vmatprep.subr.mxu0 0.0
        %250 = vmatpush1.msra.mxu0 0.0
        %251 = vmatprep.subr.mxu0 0.0
        %252 = vmatpush1.msra.mxu0 0.0
        %253 = vmatprep.subr.mxu0 0.0
        %254 = vmatpush1.msra.mxu0 0.0
        %255 = vmatprep.subr.mxu0 0.0
        %256 = vmatpush1.msra.mxu0 0.0
        %257 = vmatprep.subr.mxu0 0.0
        %258 = vmatpush1.msra.mxu0 0.0
        %259 = vmatprep.subr.mxu0 0.0
        %260 = vmatpush1.msra.mxu0 0.0
        %261 = vmatprep.subr.mxu0 0.0
        %262 = vmatpush1.msra.mxu0 0.0
        %263 = vmatprep.subr.mxu0 0.0
        %264 = vmatpush1.msra.mxu0 0.0
        %265 = vmatprep.subr.mxu0 0.0
        %266 = vmatpush1.msra.mxu0 0.0
        %267 = vmatprep.subr.mxu0 0.0
        %268 = vmatpush1.msra.mxu0 0.0
        %269 = vmatprep.subr.mxu0 0.0
        %270 = vmatpush1.msra.mxu0 0.0
        %271 = vmatprep.subr.mxu0 0.0
        %272 = vmatpush1.msra.mxu0 0.0
        %273 = vmatprep.subr.mxu0 0.0
        %274 = vmatpush1.msra.mxu0 0.0
        %275 = vmatprep.subr.mxu0 0.0
        %276 = vmatpush1.msra.mxu0 0.0
        %277 = vmatprep.subr.mxu0 0.0
        %278 = vmatpush1.msra.mxu0 0.0
        %279 = vmatprep.subr.mxu0 0.0
        %280 = vmatpush1.msra.mxu0 0.0
        %281 = vmatprep.subr.mxu0 0.0
        %282 = vmatpush1.msra.mxu0 0.0
        %283 = vmatprep.subr.mxu0 0.0
        %284 = vmatpush1.msra.mxu0 0.0
        %285 = vmatprep.subr.mxu0 0.0
        %286 = vmatpush1.msra.mxu0 0.0
        %287 = vmatprep.subr.mxu0 0.0
        %288 = vmatpush1.msra.mxu0 0.0
        %289 = vmatprep.subr.mxu0 0.0
        %290 = vmatpush1.msra.mxu0 0.0
        %291 = vmatprep.subr.mxu0 0.0
        %292 = vmatpush1.msra.mxu0 0.0
        %293 = vmatprep.subr.mxu0 0.0
        %294 = vmatpush1.msra.mxu0 0.0
        %295 = vmatprep.subr.mxu0 0.0
        %296 = vmatpush1.msra.mxu0 0.0
        %297 = vmatprep.subr.mxu0 0.0
        %298 = vmatpush1.msra.mxu0 0.0
        %299 = vmatprep.subr.mxu0 0.0
        %300 = vmatpush1.msra.mxu0 0.0
        %301 = vmatprep.subr.mxu0 0.0
        %302 = vmatpush1.msra.mxu0 0.0
        %303 = vmatprep.subr.mxu0 0.0
        %304 = vmatpush1.msra.mxu0 0.0
        %305 = vmatprep.subr.mxu0 0.0
        %306 = vmatpush1.msra.mxu0 0.0
        %307 = vmatprep.subr.mxu0 0.0
        %308 = vmatpush1.msra.mxu0 0.0
        %309 = vmatprep.subr.mxu0 0.0
        %310 = vmatpush1.msra.mxu0 0.0
        %311 = vmatprep.mubr.f32.mxu0 0.0
        %312 = vmatmul.mubr.f32.gmra.mrb[0].mxu0 %v238
        %v313 = vpop.f32.mrb[0].mxu0
        %v314 = vadd.f32 0.0, %v313
        %v315 = vpop.f32.mrb[0].mxu0
        %v316 = vadd.f32 0.0, %v315
        %317 = vdwg.mxu0
        %318 = vmatprep.subr.mxu0 0.0
        %319 = vmatpush1.msra.mxu0 %v245
        %320 = vmatprep.subr.mxu0 0.0
        %321 = vmatpush1.msra.mxu0 0.0
        %322 = vmatprep.subr.mxu0 0.0
        %323 = vmatpush1.msra.mxu0 0.0
        %324 = vmatprep.subr.mxu0 0.0
        %325 = vmatpush1.msra.mxu0 0.0
        %326 = vmatprep.subr.mxu0 0.0
        %327 = vmatpush1.msra.mxu0 0.0
        %328 = vmatprep.subr.mxu0 0.0
        %329 = vmatpush1.msra.mxu0 0.0
        %330 = vmatprep.subr.mxu0 0.0
        %331 = vmatpush1.msra.mxu0 0.0
        %332 = vmatprep.subr.mxu0 0.0
        %333 = vmatpush1.msra.mxu0 0.0
        %334 = vmatprep.subr.mxu0 0.0
        %335 = vmatpush1.msra.mxu0 0.0
        %336 = vmatprep.subr.mxu0 0.0
        %337 = vmatpush1.msra.mxu0 0.0
        %338 = vmatprep.subr.mxu0 0.0
        %339 = vmatpush1.msra.mxu0 0.0
        %340 = vmatprep.subr.mxu0 0.0
        %341 = vmatpush1.msra.mxu0 0.0
        %342 = vmatprep.subr.mxu0 0.0
        %343 = vmatpush1.msra.mxu0 0.0
        %344 = vmatprep.subr.mxu0 0.0
        %345 = vmatpush1.msra.mxu0 0.0
        %346 = vmatprep.subr.mxu0 0.0
        %347 = vmatpush1.msra.mxu0 0.0
        %348 = vmatprep.subr.mxu0 0.0
        %349 = vmatpush1.msra.mxu0 0.0
        %350 = vmatprep.subr.mxu0 0.0
        %351 = vmatpush1.msra.mxu0 0.0
        %352 = vmatprep.subr.mxu0 0.0
        %353 = vmatpush1.msra.mxu0 0.0
        %354 = vmatprep.subr.mxu0 0.0
        %355 = vmatpush1.msra.mxu0 0.0
        %356 = vmatprep.subr.mxu0 0.0
        %357 = vmatpush1.msra.mxu0 0.0
        %358 = vmatprep.subr.mxu0 0.0
        %359 = vmatpush1.msra.mxu0 0.0
        %360 = vmatprep.subr.mxu0 0.0
        %361 = vmatpush1.msra.mxu0 0.0
        %362 = vmatprep.subr.mxu0 0.0
        %363 = vmatpush1.msra.mxu0 0.0
        %364 = vmatprep.subr.mxu0 0.0
        %365 = vmatpush1.msra.mxu0 0.0
        %366 = vmatprep.subr.mxu0 0.0
        %367 = vmatpush1.msra.mxu0 0.0
        %368 = vmatprep.subr.mxu0 0.0
        %369 = vmatpush1.msra.mxu0 0.0
        %370 = vmatprep.subr.mxu0 0.0
        %371 = vmatpush1.msra.mxu0 0.0
        %372 = vmatprep.subr.mxu0 0.0
        %373 = vmatpush1.msra.mxu0 0.0
        %374 = vmatprep.subr.mxu0 0.0
        %375 = vmatpush1.msra.mxu0 0.0
        %376 = vmatprep.subr.mxu0 0.0
        %377 = vmatpush1.msra.mxu0 0.0
        %378 = vmatprep.subr.mxu0 0.0
        %379 = vmatpush1.msra.mxu0 0.0
        %380 = vmatprep.subr.mxu0 0.0
        %381 = vmatpush1.msra.mxu0 0.0
        %382 = vmatprep.mubr.f32.mxu0 0.0
        %383 = vmatmul.mubr.f32.gmra.mrb[0].mxu0 %v238
        %v384 = vpop.f32.mrb[0].mxu0
        %v385 = vadd.f32 0.0, %v384
        %v386 = vpop.f32.mrb[0].mxu0
        %387 = vdwg.mxu0
        %388 = vrot.lane.b32.xlu0 %v214, 79
        %v389 = vpop.permute.xlu0 %388
        %390 = vrot.lane.b32.xlu0 %v219, 79
        %v391 = vpop.permute.xlu0 %390
        %392 = vrot.lane.b32.xlu0 %v220, 79
        %v393 = vpop.permute.xlu0 %392
        %vm394 = vcmask 646144
        %v395 = vsel %vm394, %v389, %v391
        %v396 = vsel %vm394, %v391, %v393
        %v398 = vsel %vm236, %v221, 0
        %v400 = vsel %vm240, %v395, 0
        %v402 = vsel %vm240, %v396, 0
        %v404 = vsel %vm240, %v393, 0
        %406 = vmatprep.subr.mxu0 %v402
        %407 = vmatpush1.msra.mxu0 %v400
        %408 = vmatprep.subr.mxu0 0.0
        %409 = vmatpush1.msra.mxu0 0.0
        %410 = vmatprep.subr.mxu0 0.0
        %411 = vmatpush1.msra.mxu0 0.0
        %412 = vmatprep.subr.mxu0 0.0
        %413 = vmatpush1.msra.mxu0 0.0
        %414 = vmatprep.subr.mxu0 0.0
        %415 = vmatpush1.msra.mxu0 0.0
        %416 = vmatprep.subr.mxu0 0.0
        %417 = vmatpush1.msra.mxu0 0.0
        %418 = vmatprep.subr.mxu0 0.0
        %419 = vmatpush1.msra.mxu0 0.0
        %420 = vmatprep.subr.mxu0 0.0
        %421 = vmatpush1.msra.mxu0 0.0
        %422 = vmatprep.subr.mxu0 0.0
        %423 = vmatpush1.msra.mxu0 0.0
        %424 = vmatprep.subr.mxu0 0.0
        %425 = vmatpush1.msra.mxu0 0.0
        %426 = vmatprep.subr.mxu0 0.0
        %427 = vmatpush1.msra.mxu0 0.0
        %428 = vmatprep.subr.mxu0 0.0
        %429 = vmatpush1.msra.mxu0 0.0
        %430 = vmatprep.subr.mxu0 0.0
        %431 = vmatpush1.msra.mxu0 0.0
        %432 = vmatprep.subr.mxu0 0.0
        %433 = vmatpush1.msra.mxu0 0.0
        %434 = vmatprep.subr.mxu0 0.0
        %435 = vmatpush1.msra.mxu0 0.0
        %436 = vmatprep.subr.mxu0 0.0
        %437 = vmatpush1.msra.mxu0 0.0
        %438 = vmatprep.subr.mxu0 0.0
        %439 = vmatpush1.msra.mxu0 0.0
        %440 = vmatprep.subr.mxu0 0.0
        %441 = vmatpush1.msra.mxu0 0.0
        %442 = vmatprep.subr.mxu0 0.0
        %443 = vmatpush1.msra.mxu0 0.0
        %444 = vmatprep.subr.mxu0 0.0
        %445 = vmatpush1.msra.mxu0 0.0
        %446 = vmatprep.subr.mxu0 0.0
        %447 = vmatpush1.msra.mxu0 0.0
        %448 = vmatprep.subr.mxu0 0.0
        %449 = vmatpush1.msra.mxu0 0.0
        %450 = vmatprep.subr.mxu0 0.0
        %451 = vmatpush1.msra.mxu0 0.0
        %452 = vmatprep.subr.mxu0 0.0
        %453 = vmatpush1.msra.mxu0 0.0
        %454 = vmatprep.subr.mxu0 0.0
        %455 = vmatpush1.msra.mxu0 0.0
        %456 = vmatprep.subr.mxu0 0.0
        %457 = vmatpush1.msra.mxu0 0.0
        %458 = vmatprep.subr.mxu0 0.0
        %459 = vmatpush1.msra.mxu0 0.0
        %460 = vmatprep.subr.mxu0 0.0
        %461 = vmatpush1.msra.mxu0 0.0
        %462 = vmatprep.subr.mxu0 0.0
        %463 = vmatpush1.msra.mxu0 0.0
        %464 = vmatprep.subr.mxu0 0.0
        %465 = vmatpush1.msra.mxu0 0.0
        %466 = vmatprep.subr.mxu0 0.0
        %467 = vmatpush1.msra.mxu0 0.0
        %468 = vmatprep.subr.mxu0 0.0
        %469 = vmatpush1.msra.mxu0 0.0
        %470 = vmatprep.mubr.f32.mxu0 0.0
        %471 = vmatmul.mubr.f32.gmra.mrb[0].mxu0 %v398
        %v472 = vpop.f32.mrb[0].mxu0
        %v473 = vadd.f32 %v314, %v472
        %v474 = vpop.f32.mrb[0].mxu0
        %v475 = vadd.f32 %v316, %v474
        %476 = vdwg.mxu0
        %477 = vmatprep.subr.mxu0 0.0
        %478 = vmatpush1.msra.mxu0 %v404
        %479 = vmatprep.subr.mxu0 0.0
        %480 = vmatpush1.msra.mxu0 0.0
        %481 = vmatprep.subr.mxu0 0.0
        %482 = vmatpush1.msra.mxu0 0.0
        %483 = vmatprep.subr.mxu0 0.0
        %484 = vmatpush1.msra.mxu0 0.0
        %485 = vmatprep.subr.mxu0 0.0
        %486 = vmatpush1.msra.mxu0 0.0
        %487 = vmatprep.subr.mxu0 0.0
        %488 = vmatpush1.msra.mxu0 0.0
        %489 = vmatprep.subr.mxu0 0.0
        %490 = vmatpush1.msra.mxu0 0.0
        %491 = vmatprep.subr.mxu0 0.0
        %492 = vmatpush1.msra.mxu0 0.0
        %493 = vmatprep.subr.mxu0 0.0
        %494 = vmatpush1.msra.mxu0 0.0
        %495 = vmatprep.subr.mxu0 0.0
        %496 = vmatpush1.msra.mxu0 0.0
        %497 = vmatprep.subr.mxu0 0.0
        %498 = vmatpush1.msra.mxu0 0.0
        %499 = vmatprep.subr.mxu0 0.0
        %500 = vmatpush1.msra.mxu0 0.0
        %501 = vmatprep.subr.mxu0 0.0
        %502 = vmatpush1.msra.mxu0 0.0
        %503 = vmatprep.subr.mxu0 0.0
        %504 = vmatpush1.msra.mxu0 0.0
        %505 = vmatprep.subr.mxu0 0.0
        %506 = vmatpush1.msra.mxu0 0.0
        %507 = vmatprep.subr.mxu0 0.0
        %508 = vmatpush1.msra.mxu0 0.0
        %509 = vmatprep.subr.mxu0 0.0
        %510 = vmatpush1.msra.mxu0 0.0
        %511 = vmatprep.subr.mxu0 0.0
        %512 = vmatpush1.msra.mxu0 0.0
        %513 = vmatprep.subr.mxu0 0.0
        %514 = vmatpush1.msra.mxu0 0.0
        %515 = vmatprep.subr.mxu0 0.0
        %516 = vmatpush1.msra.mxu0 0.0
        %517 = vmatprep.subr.mxu0 0.0
        %518 = vmatpush1.msra.mxu0 0.0
        %519 = vmatprep.subr.mxu0 0.0
        %520 = vmatpush1.msra.mxu0 0.0
        %521 = vmatprep.subr.mxu0 0.0
        %522 = vmatpush1.msra.mxu0 0.0
        %523 = vmatprep.subr.mxu0 0.0
        %524 = vmatpush1.msra.mxu0 0.0
        %525 = vmatprep.subr.mxu0 0.0
        %526 = vmatpush1.msra.mxu0 0.0
        %527 = vmatprep.subr.mxu0 0.0
        %528 = vmatpush1.msra.mxu0 0.0
        %529 = vmatprep.subr.mxu0 0.0
        %530 = vmatpush1.msra.mxu0 0.0
        %531 = vmatprep.subr.mxu0 0.0
        %532 = vmatpush1.msra.mxu0 0.0
        %533 = vmatprep.subr.mxu0 0.0
        %534 = vmatpush1.msra.mxu0 0.0
        %535 = vmatprep.subr.mxu0 0.0
        %536 = vmatpush1.msra.mxu0 0.0
        %537 = vmatprep.subr.mxu0 0.0
        %538 = vmatpush1.msra.mxu0 0.0
        %539 = vmatprep.subr.mxu0 0.0
        %540 = vmatpush1.msra.mxu0 0.0
        %541 = vmatprep.mubr.f32.mxu0 0.0
        %542 = vmatmul.mubr.f32.gmra.mrb[0].mxu0 %v398
        %v543 = vpop.f32.mrb[0].mxu0
        %v544 = vadd.f32 %v385, %v543
        %v545 = vpop.f32.mrb[0].mxu0
        %546 = vdwg.mxu0
        %s547 = scalar_lea.vmem %s1, 8
        %v548 = vld [vmem:[%s547] sm:$0xf]
        %549 = vrot.lane.b32.xlu0 %v214, 77
        %v550 = vpop.permute.xlu0 %549
        %551 = vrot.lane.b32.xlu0 %v219, 77
        %v552 = vpop.permute.xlu0 %551
        %553 = vrot.lane.b32.xlu0 %v220, 77
        %v554 = vpop.permute.xlu0 %553
        %vm555 = vcmask 629760
        %v556 = vsel %vm555, %v550, %v552
        %v557 = vsel %vm555, %v552, %v554
        %v559 = vsel %vm236, %v548, 0
        %v561 = vsel %vm240, %v556, 0
        %v563 = vsel %vm240, %v557, 0
        %v565 = vsel %vm240, %v554, 0
        %567 = vmatprep.subr.mxu0 %v563
        %568 = vmatpush1.msra.mxu0 %v561
        %569 = vmatprep.subr.mxu0 0.0
        %570 = vmatpush1.msra.mxu0 0.0
        %571 = vmatprep.subr.mxu0 0.0
        %572 = vmatpush1.msra.mxu0 0.0
        %573 = vmatprep.subr.mxu0 0.0
        %574 = vmatpush1.msra.mxu0 0.0
        %575 = vmatprep.subr.mxu0 0.0
        %576 = vmatpush1.msra.mxu0 0.0
        %577 = vmatprep.subr.mxu0 0.0
        %578 = vmatpush1.msra.mxu0 0.0
        %579 = vmatprep.subr.mxu0 0.0
        %580 = vmatpush1.msra.mxu0 0.0
        %581 = vmatprep.subr.mxu0 0.0
        %582 = vmatpush1.msra.mxu0 0.0
        %583 = vmatprep.subr.mxu0 0.0
        %584 = vmatpush1.msra.mxu0 0.0
        %585 = vmatprep.subr.mxu0 0.0
        %586 = vmatpush1.msra.mxu0 0.0
        %587 = vmatprep.subr.mxu0 0.0
        %588 = vmatpush1.msra.mxu0 0.0
        %589 = vmatprep.subr.mxu0 0.0
        %590 = vmatpush1.msra.mxu0 0.0
        %591 = vmatprep.subr.mxu0 0.0
        %592 = vmatpush1.msra.mxu0 0.0
        %593 = vmatprep.subr.mxu0 0.0
        %594 = vmatpush1.msra.mxu0 0.0
        %595 = vmatprep.subr.mxu0 0.0
        %596 = vmatpush1.msra.mxu0 0.0
        %597 = vmatprep.subr.mxu0 0.0
        %598 = vmatpush1.msra.mxu0 0.0
        %599 = vmatprep.subr.mxu0 0.0
        %600 = vmatpush1.msra.mxu0 0.0
        %601 = vmatprep.subr.mxu0 0.0
        %602 = vmatpush1.msra.mxu0 0.0
        %603 = vmatprep.subr.mxu0 0.0
        %604 = vmatpush1.msra.mxu0 0.0
        %605 = vmatprep.subr.mxu0 0.0
        %606 = vmatpush1.msra.mxu0 0.0
        %607 = vmatprep.subr.mxu0 0.0
        %608 = vmatpush1.msra.mxu0 0.0
        %609 = vmatprep.subr.mxu0 0.0
        %610 = vmatpush1.msra.mxu0 0.0
        %611 = vmatprep.subr.mxu0 0.0
        %612 = vmatpush1.msra.mxu0 0.0
        %613 = vmatprep.subr.mxu0 0.0
        %614 = vmatpush1.msra.mxu0 0.0
        %615 = vmatprep.subr.mxu0 0.0
        %616 = vmatpush1.msra.mxu0 0.0
        %617 = vmatprep.subr.mxu0 0.0
        %618 = vmatpush1.msra.mxu0 0.0
        %619 = vmatprep.subr.mxu0 0.0
        %620 = vmatpush1.msra.mxu0 0.0
        %621 = vmatprep.subr.mxu0 0.0
        %622 = vmatpush1.msra.mxu0 0.0
        %623 = vmatprep.subr.mxu0 0.0
        %624 = vmatpush1.msra.mxu0 0.0
        %625 = vmatprep.subr.mxu0 0.0
        %626 = vmatpush1.msra.mxu0 0.0
        %627 = vmatprep.subr.mxu0 0.0
        %628 = vmatpush1.msra.mxu0 0.0
        %629 = vmatprep.subr.mxu0 0.0
        %630 = vmatpush1.msra.mxu0 0.0
        %631 = vmatprep.mubr.f32.mxu0 0.0
        %632 = vmatmul.mubr.f32.gmra.mrb[0].mxu0 %v559
        %v633 = vpop.f32.mrb[0].mxu0
        %v634 = vadd.f32 0.0, %v633
        %v635 = vpop.f32.mrb[0].mxu0
        %v636 = vadd.f32 0.0, %v635
        %637 = vdwg.mxu0
        %638 = vmatprep.subr.mxu0 0.0
        %639 = vmatpush1.msra.mxu0 %v565
        %640 = vmatprep.subr.mxu0 0.0
        %641 = vmatpush1.msra.mxu0 0.0
        %642 = vmatprep.subr.mxu0 0.0
        %643 = vmatpush1.msra.mxu0 0.0
        %644 = vmatprep.subr.mxu0 0.0
        %645 = vmatpush1.msra.mxu0 0.0
        %646 = vmatprep.subr.mxu0 0.0
        %647 = vmatpush1.msra.mxu0 0.0
        %648 = vmatprep.subr.mxu0 0.0
        %649 = vmatpush1.msra.mxu0 0.0
        %650 = vmatprep.subr.mxu0 0.0
        %651 = vmatpush1.msra.mxu0 0.0
        %652 = vmatprep.subr.mxu0 0.0
        %653 = vmatpush1.msra.mxu0 0.0
        %654 = vmatprep.subr.mxu0 0.0
        %655 = vmatpush1.msra.mxu0 0.0
        %656 = vmatprep.subr.mxu0 0.0
        %657 = vmatpush1.msra.mxu0 0.0
        %658 = vmatprep.subr.mxu0 0.0
        %659 = vmatpush1.msra.mxu0 0.0
        %660 = vmatprep.subr.mxu0 0.0
        %661 = vmatpush1.msra.mxu0 0.0
        %662 = vmatprep.subr.mxu0 0.0
        %663 = vmatpush1.msra.mxu0 0.0
        %664 = vmatprep.subr.mxu0 0.0
        %665 = vmatpush1.msra.mxu0 0.0
        %666 = vmatprep.subr.mxu0 0.0
        %667 = vmatpush1.msra.mxu0 0.0
        %668 = vmatprep.subr.mxu0 0.0
        %669 = vmatpush1.msra.mxu0 0.0
        %670 = vmatprep.subr.mxu0 0.0
        %671 = vmatpush1.msra.mxu0 0.0
        %672 = vmatprep.subr.mxu0 0.0
        %673 = vmatpush1.msra.mxu0 0.0
        %674 = vmatprep.subr.mxu0 0.0
        %675 = vmatpush1.msra.mxu0 0.0
        %676 = vmatprep.subr.mxu0 0.0
        %677 = vmatpush1.msra.mxu0 0.0
        %678 = vmatprep.subr.mxu0 0.0
        %679 = vmatpush1.msra.mxu0 0.0
        %680 = vmatprep.subr.mxu0 0.0
        %681 = vmatpush1.msra.mxu0 0.0
        %682 = vmatprep.subr.mxu0 0.0
        %683 = vmatpush1.msra.mxu0 0.0
        %684 = vmatprep.subr.mxu0 0.0
        %685 = vmatpush1.msra.mxu0 0.0
        %686 = vmatprep.subr.mxu0 0.0
        %687 = vmatpush1.msra.mxu0 0.0
        %688 = vmatprep.subr.mxu0 0.0
        %689 = vmatpush1.msra.mxu0 0.0
        %690 = vmatprep.subr.mxu0 0.0
        %691 = vmatpush1.msra.mxu0 0.0
        %692 = vmatprep.subr.mxu0 0.0
        %693 = vmatpush1.msra.mxu0 0.0
        %694 = vmatprep.subr.mxu0 0.0
        %695 = vmatpush1.msra.mxu0 0.0
        %696 = vmatprep.subr.mxu0 0.0
        %697 = vmatpush1.msra.mxu0 0.0
        %698 = vmatprep.subr.mxu0 0.0
        %699 = vmatpush1.msra.mxu0 0.0
        %700 = vmatprep.subr.mxu0 0.0
        %701 = vmatpush1.msra.mxu0 0.0
        %702 = vmatprep.mubr.f32.mxu0 0.0
        %703 = vmatmul.mubr.f32.gmra.mrb[0].mxu0 %v559
        %v704 = vpop.f32.mrb[0].mxu0
        %v705 = vadd.f32 0.0, %v704
        %v706 = vpop.f32.mrb[0].mxu0
        %707 = vdwg.mxu0
        %v708 = vadd.f32 %v473, %v634
        %v709 = vadd.f32 %v475, %v636
        %v710 = vadd.f32 %v544, %v705
        %s711 = scalar_lea.vmem %s1, 12
        %v712 = vld [vmem:[%s711] sm:$0xf]
        %714 = vrot.lane.b32.xlu0 %v214, 61
        %v715 = vpop.permute.xlu0 %714
        %716 = vrot.lane.b32.xlu0 %v219, 61
        %v717 = vpop.permute.xlu0 %716
        %718 = vrot.lane.b32.xlu0 %v220, 61
        %v719 = vpop.permute.xlu0 %718
        %720 = vrot.lane.b32.xlu0 %v218, 61
        %v721 = vpop.permute.xlu0 %720
        %vm722 = vcmask 498688
        %v723 = vsel %vm722, %v715, %v717
        %v724 = vsel %vm722, %v717, %v719
        %v725 = vsel %vm722, %v719, %v721
        %v727 = vsel %vm236, %v712, 0
        %v729 = vsel %vm240, %v723, 0
        %v731 = vsel %vm240, %v724, 0
        %v733 = vsel %vm240, %v725, 0
        %735 = vmatprep.subr.mxu0 %v731
        %736 = vmatpush1.msra.mxu0 %v729
        %737 = vmatprep.subr.mxu0 0.0
        %738 = vmatpush1.msra.mxu0 0.0
        %739 = vmatprep.subr.mxu0 0.0
        %740 = vmatpush1.msra.mxu0 0.0
        %741 = vmatprep.subr.mxu0 0.0
        %742 = vmatpush1.msra.mxu0 0.0
        %743 = vmatprep.subr.mxu0 0.0
        %744 = vmatpush1.msra.mxu0 0.0
        %745 = vmatprep.subr.mxu0 0.0
        %746 = vmatpush1.msra.mxu0 0.0
        %747 = vmatprep.subr.mxu0 0.0
        %748 = vmatpush1.msra.mxu0 0.0
        %749 = vmatprep.subr.mxu0 0.0
        %750 = vmatpush1.msra.mxu0 0.0
        %751 = vmatprep.subr.mxu0 0.0
        %752 = vmatpush1.msra.mxu0 0.0
        %753 = vmatprep.subr.mxu0 0.0
        %754 = vmatpush1.msra.mxu0 0.0
        %755 = vmatprep.subr.mxu0 0.0
        %756 = vmatpush1.msra.mxu0 0.0
        %757 = vmatprep.subr.mxu0 0.0
        %758 = vmatpush1.msra.mxu0 0.0
        %759 = vmatprep.subr.mxu0 0.0
        %760 = vmatpush1.msra.mxu0 0.0
        %761 = vmatprep.subr.mxu0 0.0
        %762 = vmatpush1.msra.mxu0 0.0
        %763 = vmatprep.subr.mxu0 0.0
        %764 = vmatpush1.msra.mxu0 0.0
        %765 = vmatprep.subr.mxu0 0.0
        %766 = vmatpush1.msra.mxu0 0.0
        %767 = vmatprep.subr.mxu0 0.0
        %768 = vmatpush1.msra.mxu0 0.0
        %769 = vmatprep.subr.mxu0 0.0
        %770 = vmatpush1.msra.mxu0 0.0
        %771 = vmatprep.subr.mxu0 0.0
        %772 = vmatpush1.msra.mxu0 0.0
        %773 = vmatprep.subr.mxu0 0.0
        %774 = vmatpush1.msra.mxu0 0.0
        %775 = vmatprep.subr.mxu0 0.0
        %776 = vmatpush1.msra.mxu0 0.0
        %777 = vmatprep.subr.mxu0 0.0
        %778 = vmatpush1.msra.mxu0 0.0
        %779 = vmatprep.subr.mxu0 0.0
        %780 = vmatpush1.msra.mxu0 0.0
        %781 = vmatprep.subr.mxu0 0.0
        %782 = vmatpush1.msra.mxu0 0.0
        %783 = vmatprep.subr.mxu0 0.0
        %784 = vmatpush1.msra.mxu0 0.0
        %785 = vmatprep.subr.mxu0 0.0
        %786 = vmatpush1.msra.mxu0 0.0
        %787 = vmatprep.subr.mxu0 0.0
        %788 = vmatpush1.msra.mxu0 0.0
        %789 = vmatprep.subr.mxu0 0.0
        %790 = vmatpush1.msra.mxu0 0.0
        %791 = vmatprep.subr.mxu0 0.0
        %792 = vmatpush1.msra.mxu0 0.0
        %793 = vmatprep.subr.mxu0 0.0
        %794 = vmatpush1.msra.mxu0 0.0
        %795 = vmatprep.subr.mxu0 0.0
        %796 = vmatpush1.msra.mxu0 0.0
        %797 = vmatprep.subr.mxu0 0.0
        %798 = vmatpush1.msra.mxu0 0.0
        %799 = vmatprep.mubr.f32.mxu0 0.0
        %800 = vmatmul.mubr.f32.gmra.mrb[0].mxu0 %v727
        %v801 = vpop.f32.mrb[0].mxu0
        %v802 = vadd.f32 0.0, %v801
        %v803 = vpop.f32.mrb[0].mxu0
        %v804 = vadd.f32 0.0, %v803
        %805 = vdwg.mxu0
        %806 = vmatprep.subr.mxu0 0.0
        %807 = vmatpush1.msra.mxu0 %v733
        %808 = vmatprep.subr.mxu0 0.0
        %809 = vmatpush1.msra.mxu0 0.0
        %810 = vmatprep.subr.mxu0 0.0
        %811 = vmatpush1.msra.mxu0 0.0
        %812 = vmatprep.subr.mxu0 0.0
        %813 = vmatpush1.msra.mxu0 0.0
        %814 = vmatprep.subr.mxu0 0.0
        %815 = vmatpush1.msra.mxu0 0.0
        %816 = vmatprep.subr.mxu0 0.0
        %817 = vmatpush1.msra.mxu0 0.0
        %818 = vmatprep.subr.mxu0 0.0
        %819 = vmatpush1.msra.mxu0 0.0
        %820 = vmatprep.subr.mxu0 0.0
        %821 = vmatpush1.msra.mxu0 0.0
        %822 = vmatprep.subr.mxu0 0.0
        %823 = vmatpush1.msra.mxu0 0.0
        %824 = vmatprep.subr.mxu0 0.0
        %825 = vmatpush1.msra.mxu0 0.0
        %826 = vmatprep.subr.mxu0 0.0
        %827 = vmatpush1.msra.mxu0 0.0
        %828 = vmatprep.subr.mxu0 0.0
        %829 = vmatpush1.msra.mxu0 0.0
        %830 = vmatprep.subr.mxu0 0.0
        %831 = vmatpush1.msra.mxu0 0.0
        %832 = vmatprep.subr.mxu0 0.0
        %833 = vmatpush1.msra.mxu0 0.0
        %834 = vmatprep.subr.mxu0 0.0
        %835 = vmatpush1.msra.mxu0 0.0
        %836 = vmatprep.subr.mxu0 0.0
        %837 = vmatpush1.msra.mxu0 0.0
        %838 = vmatprep.subr.mxu0 0.0
        %839 = vmatpush1.msra.mxu0 0.0
        %840 = vmatprep.subr.mxu0 0.0
        %841 = vmatpush1.msra.mxu0 0.0
        %842 = vmatprep.subr.mxu0 0.0
        %843 = vmatpush1.msra.mxu0 0.0
        %844 = vmatprep.subr.mxu0 0.0
        %845 = vmatpush1.msra.mxu0 0.0
        %846 = vmatprep.subr.mxu0 0.0
        %847 = vmatpush1.msra.mxu0 0.0
        %848 = vmatprep.subr.mxu0 0.0
        %849 = vmatpush1.msra.mxu0 0.0
        %850 = vmatprep.subr.mxu0 0.0
        %851 = vmatpush1.msra.mxu0 0.0
        %852 = vmatprep.subr.mxu0 0.0
        %853 = vmatpush1.msra.mxu0 0.0
        %854 = vmatprep.subr.mxu0 0.0
        %855 = vmatpush1.msra.mxu0 0.0
        %856 = vmatprep.subr.mxu0 0.0
        %857 = vmatpush1.msra.mxu0 0.0
        %858 = vmatprep.subr.mxu0 0.0
        %859 = vmatpush1.msra.mxu0 0.0
        %860 = vmatprep.subr.mxu0 0.0
        %861 = vmatpush1.msra.mxu0 0.0
        %862 = vmatprep.subr.mxu0 0.0
        %863 = vmatpush1.msra.mxu0 0.0
        %864 = vmatprep.subr.mxu0 0.0
        %865 = vmatpush1.msra.mxu0 0.0
        %866 = vmatprep.subr.mxu0 0.0
        %867 = vmatpush1.msra.mxu0 0.0
        %868 = vmatprep.subr.mxu0 0.0
        %869 = vmatpush1.msra.mxu0 0.0
        %870 = vmatprep.mubr.f32.mxu0 0.0
        %871 = vmatmul.mubr.f32.gmra.mrb[0].mxu0 %v727
        %v872 = vpop.f32.mrb[0].mxu0
        %v873 = vadd.f32 0.0, %v872
        %v874 = vpop.f32.mrb[0].mxu0
        %875 = vdwg.mxu0
        %v876 = vadd.f32 %v708, %v802
        %v877 = vadd.f32 %v709, %v804
        %v878 = vadd.f32 %v710, %v873
        %s879 = scalar_lea.vmem %s1, 16
        %v880 = vld [vmem:[%s879] sm:$0xf]
        %v882 = vsel %vm236, %v880, 0
        %v884 = vsel %vm240, %v196, 0
        %v886 = vsel %vm240, %v209, 0
        %v888 = vsel %vm240, %v197, 0
        %890 = vmatprep.subr.mxu0 %v886
        %891 = vmatpush1.msra.mxu0 %v884
        %892 = vmatprep.subr.mxu0 0.0
        %893 = vmatpush1.msra.mxu0 0.0
        %894 = vmatprep.subr.mxu0 0.0
        %895 = vmatpush1.msra.mxu0 0.0
        %896 = vmatprep.subr.mxu0 0.0
        %897 = vmatpush1.msra.mxu0 0.0
        %898 = vmatprep.subr.mxu0 0.0
        %899 = vmatpush1.msra.mxu0 0.0
        %900 = vmatprep.subr.mxu0 0.0
        %901 = vmatpush1.msra.mxu0 0.0
        %902 = vmatprep.subr.mxu0 0.0
        %903 = vmatpush1.msra.mxu0 0.0
        %904 = vmatprep.subr.mxu0 0.0
        %905 = vmatpush1.msra.mxu0 0.0
        %906 = vmatprep.subr.mxu0 0.0
        %907 = vmatpush1.msra.mxu0 0.0
        %908 = vmatprep.subr.mxu0 0.0
        %909 = vmatpush1.msra.mxu0 0.0
        %910 = vmatprep.subr.mxu0 0.0
        %911 = vmatpush1.msra.mxu0 0.0
        %912 = vmatprep.subr.mxu0 0.0
        %913 = vmatpush1.msra.mxu0 0.0
        %914 = vmatprep.subr.mxu0 0.0
        %915 = vmatpush1.msra.mxu0 0.0
        %916 = vmatprep.subr.mxu0 0.0
        %917 = vmatpush1.msra.mxu0 0.0
        %918 = vmatprep.subr.mxu0 0.0
        %919 = vmatpush1.msra.mxu0 0.0
        %920 = vmatprep.subr.mxu0 0.0
        %921 = vmatpush1.msra.mxu0 0.0
        %922 = vmatprep.subr.mxu0 0.0
        %923 = vmatpush1.msra.mxu0 0.0
        %924 = vmatprep.subr.mxu0 0.0
        %925 = vmatpush1.msra.mxu0 0.0
        %926 = vmatprep.subr.mxu0 0.0
        %927 = vmatpush1.msra.mxu0 0.0
        %928 = vmatprep.subr.mxu0 0.0
        %929 = vmatpush1.msra.mxu0 0.0
        %930 = vmatprep.subr.mxu0 0.0
        %931 = vmatpush1.msra.mxu0 0.0
        %932 = vmatprep.subr.mxu0 0.0
        %933 = vmatpush1.msra.mxu0 0.0
        %934 = vmatprep.subr.mxu0 0.0
        %935 = vmatpush1.msra.mxu0 0.0
        %936 = vmatprep.subr.mxu0 0.0
        %937 = vmatpush1.msra.mxu0 0.0
        %938 = vmatprep.subr.mxu0 0.0
        %939 = vmatpush1.msra.mxu0 0.0
        %940 = vmatprep.subr.mxu0 0.0
        %941 = vmatpush1.msra.mxu0 0.0
        %942 = vmatprep.subr.mxu0 0.0
        %943 = vmatpush1.msra.mxu0 0.0
        %944 = vmatprep.subr.mxu0 0.0
        %945 = vmatpush1.msra.mxu0 0.0
        %946 = vmatprep.subr.mxu0 0.0
        %947 = vmatpush1.msra.mxu0 0.0
        %948 = vmatprep.subr.mxu0 0.0
        %949 = vmatpush1.msra.mxu0 0.0
        %950 = vmatprep.subr.mxu0 0.0
        %951 = vmatpush1.msra.mxu0 0.0
        %952 = vmatprep.subr.mxu0 0.0
        %953 = vmatpush1.msra.mxu0 0.0
        %954 = vmatprep.mubr.f32.mxu0 0.0
        %955 = vmatmul.mubr.f32.gmra.mrb[0].mxu0 %v882
        %v956 = vpop.f32.mrb[0].mxu0
        %v957 = vadd.f32 0.0, %v956
        %v958 = vpop.f32.mrb[0].mxu0
        %v959 = vadd.f32 0.0, %v958
        %960 = vdwg.mxu0
        %961 = vmatprep.subr.mxu0 0.0
        %962 = vmatpush1.msra.mxu0 %v888
        %963 = vmatprep.subr.mxu0 0.0
        %964 = vmatpush1.msra.mxu0 0.0
        %965 = vmatprep.subr.mxu0 0.0
        %966 = vmatpush1.msra.mxu0 0.0
        %967 = vmatprep.subr.mxu0 0.0
        %968 = vmatpush1.msra.mxu0 0.0
        %969 = vmatprep.subr.mxu0 0.0
        %970 = vmatpush1.msra.mxu0 0.0
        %971 = vmatprep.subr.mxu0 0.0
        %972 = vmatpush1.msra.mxu0 0.0
        %973 = vmatprep.subr.mxu0 0.0
        %974 = vmatpush1.msra.mxu0 0.0
        %975 = vmatprep.subr.mxu0 0.0
        %976 = vmatpush1.msra.mxu0 0.0
        %977 = vmatprep.subr.mxu0 0.0
        %978 = vmatpush1.msra.mxu0 0.0
        %979 = vmatprep.subr.mxu0 0.0
        %980 = vmatpush1.msra.mxu0 0.0
        %981 = vmatprep.subr.mxu0 0.0
        %982 = vmatpush1.msra.mxu0 0.0
        %983 = vmatprep.subr.mxu0 0.0
        %984 = vmatpush1.msra.mxu0 0.0
        %985 = vmatprep.subr.mxu0 0.0
        %986 = vmatpush1.msra.mxu0 0.0
        %987 = vmatprep.subr.mxu0 0.0
        %988 = vmatpush1.msra.mxu0 0.0
        %989 = vmatprep.subr.mxu0 0.0
        %990 = vmatpush1.msra.mxu0 0.0
        %991 = vmatprep.subr.mxu0 0.0
        %992 = vmatpush1.msra.mxu0 0.0
        %993 = vmatprep.subr.mxu0 0.0
        %994 = vmatpush1.msra.mxu0 0.0
        %995 = vmatprep.subr.mxu0 0.0
        %996 = vmatpush1.msra.mxu0 0.0
        %997 = vmatprep.subr.mxu0 0.0
        %998 = vmatpush1.msra.mxu0 0.0
        %999 = vmatprep.subr.mxu0 0.0
        %1000 = vmatpush1.msra.mxu0 0.0
        %1001 = vmatprep.subr.mxu0 0.0
        %1002 = vmatpush1.msra.mxu0 0.0
        %1003 = vmatprep.subr.mxu0 0.0
        %1004 = vmatpush1.msra.mxu0 0.0
        %1005 = vmatprep.subr.mxu0 0.0
        %1006 = vmatpush1.msra.mxu0 0.0
        %1007 = vmatprep.subr.mxu0 0.0
        %1008 = vmatpush1.msra.mxu0 0.0
        %1009 = vmatprep.subr.mxu0 0.0
        %1010 = vmatpush1.msra.mxu0 0.0
        %1011 = vmatprep.subr.mxu0 0.0
        %1012 = vmatpush1.msra.mxu0 0.0
        %1013 = vmatprep.subr.mxu0 0.0
        %1014 = vmatpush1.msra.mxu0 0.0
        %1015 = vmatprep.subr.mxu0 0.0
        %1016 = vmatpush1.msra.mxu0 0.0
        %1017 = vmatprep.subr.mxu0 0.0
        %1018 = vmatpush1.msra.mxu0 0.0
        %1019 = vmatprep.subr.mxu0 0.0
        %1020 = vmatpush1.msra.mxu0 0.0
        %1021 = vmatprep.subr.mxu0 0.0
        %1022 = vmatpush1.msra.mxu0 0.0
        %1023 = vmatprep.subr.mxu0 0.0
        %1024 = vmatpush1.msra.mxu0 0.0
        %1025 = vmatprep.mubr.f32.mxu0 0.0
        %1026 = vmatmul.mubr.f32.gmra.mrb[0].mxu0 %v882
        %v1027 = vpop.f32.mrb[0].mxu0
        %v1028 = vadd.f32 0.0, %v1027
        %v1029 = vpop.f32.mrb[0].mxu0
        %1030 = vdwg.mxu0
        %v1031 = vadd.f32 %v876, %v957
        %v1032 = vadd.f32 %v877, %v959
        %v1033 = vadd.f32 %v878, %v1028
        %s1034 = scalar_lea.vmem %s1, 20
        %v1035 = vld [vmem:[%s1034] sm:$0xf]
        %1036 = vrot.lane.b32.xlu0 %v196, 127
        %v1037 = vpop.permute.xlu0 %1036
        %1038 = vrot.lane.b32.xlu0 %v209, 127
        %v1039 = vpop.permute.xlu0 %1038
        %1040 = vrot.lane.b32.xlu0 %v214, 127
        %v1041 = vpop.permute.xlu0 %1040
        %vm1042 = vcmask 1039360
        %v1043 = vsel %vm1042, %v1037, %v1039
        %v1044 = vsel %vm1042, %v1039, %v1041
        %v1046 = vsel %vm236, %v1035, 0
        %v1048 = vsel %vm240, %v1043, 0
        %v1050 = vsel %vm240, %v1044, 0
        %v1052 = vsel %vm240, %v1041, 0
        %1054 = vmatprep.subr.mxu0 %v1050
        %1055 = vmatpush1.msra.mxu0 %v1048
        %1056 = vmatprep.subr.mxu0 0.0
        %1057 = vmatpush1.msra.mxu0 0.0
        %1058 = vmatprep.subr.mxu0 0.0
        %1059 = vmatpush1.msra.mxu0 0.0
        %1060 = vmatprep.subr.mxu0 0.0
        %1061 = vmatpush1.msra.mxu0 0.0
        %1062 = vmatprep.subr.mxu0 0.0
        %1063 = vmatpush1.msra.mxu0 0.0
        %1064 = vmatprep.subr.mxu0 0.0
        %1065 = vmatpush1.msra.mxu0 0.0
        %1066 = vmatprep.subr.mxu0 0.0
        %1067 = vmatpush1.msra.mxu0 0.0
        %1068 = vmatprep.subr.mxu0 0.0
        %1069 = vmatpush1.msra.mxu0 0.0
        %1070 = vmatprep.subr.mxu0 0.0
        %1071 = vmatpush1.msra.mxu0 0.0
        %1072 = vmatprep.subr.mxu0 0.0
        %1073 = vmatpush1.msra.mxu0 0.0
        %1074 = vmatprep.subr.mxu0 0.0
        %1075 = vmatpush1.msra.mxu0 0.0
        %1076 = vmatprep.subr.mxu0 0.0
        %1077 = vmatpush1.msra.mxu0 0.0
        %1078 = vmatprep.subr.mxu0 0.0
        %1079 = vmatpush1.msra.mxu0 0.0
        %1080 = vmatprep.subr.mxu0 0.0
        %1081 = vmatpush1.msra.mxu0 0.0
        %1082 = vmatprep.subr.mxu0 0.0
        %1083 = vmatpush1.msra.mxu0 0.0
        %1084 = vmatprep.subr.mxu0 0.0
        %1085 = vmatpush1.msra.mxu0 0.0
        %1086 = vmatprep.subr.mxu0 0.0
        %1087 = vmatpush1.msra.mxu0 0.0
        %1088 = vmatprep.subr.mxu0 0.0
        %1089 = vmatpush1.msra.mxu0 0.0
        %1090 = vmatprep.subr.mxu0 0.0
        %1091 = vmatpush1.msra.mxu0 0.0
        %1092 = vmatprep.subr.mxu0 0.0
        %1093 = vmatpush1.msra.mxu0 0.0
        %1094 = vmatprep.subr.mxu0 0.0
        %1095 = vmatpush1.msra.mxu0 0.0
        %1096 = vmatprep.subr.mxu0 0.0
        %1097 = vmatpush1.msra.mxu0 0.0
        %1098 = vmatprep.subr.mxu0 0.0
        %1099 = vmatpush1.msra.mxu0 0.0
        %1100 = vmatprep.subr.mxu0 0.0
        %1101 = vmatpush1.msra.mxu0 0.0
        %1102 = vmatprep.subr.mxu0 0.0
        %1103 = vmatpush1.msra.mxu0 0.0
        %1104 = vmatprep.subr.mxu0 0.0
        %1105 = vmatpush1.msra.mxu0 0.0
        %1106 = vmatprep.subr.mxu0 0.0
        %1107 = vmatpush1.msra.mxu0 0.0
        %1108 = vmatprep.subr.mxu0 0.0
        %1109 = vmatpush1.msra.mxu0 0.0
        %1110 = vmatprep.subr.mxu0 0.0
        %1111 = vmatpush1.msra.mxu0 0.0
        %1112 = vmatprep.subr.mxu0 0.0
        %1113 = vmatpush1.msra.mxu0 0.0
        %1114 = vmatprep.subr.mxu0 0.0
        %1115 = vmatpush1.msra.mxu0 0.0
        %1116 = vmatprep.subr.mxu0 0.0
        %1117 = vmatpush1.msra.mxu0 0.0
        %1118 = vmatprep.mubr.f32.mxu0 0.0
        %1119 = vmatmul.mubr.f32.gmra.mrb[0].mxu0 %v1046
        %v1120 = vpop.f32.mrb[0].mxu0
        %v1121 = vadd.f32 0.0, %v1120
        %v1122 = vpop.f32.mrb[0].mxu0
        %v1123 = vadd.f32 0.0, %v1122
        %1124 = vdwg.mxu0
        %1125 = vmatprep.subr.mxu0 0.0
        %1126 = vmatpush1.msra.mxu0 %v1052
        %1127 = vmatprep.subr.mxu0 0.0
        %1128 = vmatpush1.msra.mxu0 0.0
        %1129 = vmatprep.subr.mxu0 0.0
        %1130 = vmatpush1.msra.mxu0 0.0
        %1131 = vmatprep.subr.mxu0 0.0
        %1132 = vmatpush1.msra.mxu0 0.0
        %1133 = vmatprep.subr.mxu0 0.0
        %1134 = vmatpush1.msra.mxu0 0.0
        %1135 = vmatprep.subr.mxu0 0.0
        %1136 = vmatpush1.msra.mxu0 0.0
        %1137 = vmatprep.subr.mxu0 0.0
        %1138 = vmatpush1.msra.mxu0 0.0
        %1139 = vmatprep.subr.mxu0 0.0
        %1140 = vmatpush1.msra.mxu0 0.0
        %1141 = vmatprep.subr.mxu0 0.0
        %1142 = vmatpush1.msra.mxu0 0.0
        %1143 = vmatprep.subr.mxu0 0.0
        %1144 = vmatpush1.msra.mxu0 0.0
        %1145 = vmatprep.subr.mxu0 0.0
        %1146 = vmatpush1.msra.mxu0 0.0
        %1147 = vmatprep.subr.mxu0 0.0
        %1148 = vmatpush1.msra.mxu0 0.0
        %1149 = vmatprep.subr.mxu0 0.0
        %1150 = vmatpush1.msra.mxu0 0.0
        %1151 = vmatprep.subr.mxu0 0.0
        %1152 = vmatpush1.msra.mxu0 0.0
        %1153 = vmatprep.subr.mxu0 0.0
        %1154 = vmatpush1.msra.mxu0 0.0
        %1155 = vmatprep.subr.mxu0 0.0
        %1156 = vmatpush1.msra.mxu0 0.0
        %1157 = vmatprep.subr.mxu0 0.0
        %1158 = vmatpush1.msra.mxu0 0.0
        %1159 = vmatprep.subr.mxu0 0.0
        %1160 = vmatpush1.msra.mxu0 0.0
        %1161 = vmatprep.subr.mxu0 0.0
        %1162 = vmatpush1.msra.mxu0 0.0
        %1163 = vmatprep.subr.mxu0 0.0
        %1164 = vmatpush1.msra.mxu0 0.0
        %1165 = vmatprep.subr.mxu0 0.0
        %1166 = vmatpush1.msra.mxu0 0.0
        %1167 = vmatprep.subr.mxu0 0.0
        %1168 = vmatpush1.msra.mxu0 0.0
        %1169 = vmatprep.subr.mxu0 0.0
        %1170 = vmatpush1.msra.mxu0 0.0
        %1171 = vmatprep.subr.mxu0 0.0
        %1172 = vmatpush1.msra.mxu0 0.0
        %1173 = vmatprep.subr.mxu0 0.0
        %1174 = vmatpush1.msra.mxu0 0.0
        %1175 = vmatprep.subr.mxu0 0.0
        %1176 = vmatpush1.msra.mxu0 0.0
        %1177 = vmatprep.subr.mxu0 0.0
        %1178 = vmatpush1.msra.mxu0 0.0
        %1179 = vmatprep.subr.mxu0 0.0
        %1180 = vmatpush1.msra.mxu0 0.0
        %1181 = vmatprep.subr.mxu0 0.0
        %1182 = vmatpush1.msra.mxu0 0.0
        %1183 = vmatprep.subr.mxu0 0.0
        %1184 = vmatpush1.msra.mxu0 0.0
        %1185 = vmatprep.subr.mxu0 0.0
        %1186 = vmatpush1.msra.mxu0 0.0
        %1187 = vmatprep.subr.mxu0 0.0
        %1188 = vmatpush1.msra.mxu0 0.0
        %1189 = vmatprep.mubr.f32.mxu0 0.0
        %1190 = vmatmul.mubr.f32.gmra.mrb[0].mxu0 %v1046
        %v1191 = vpop.f32.mrb[0].mxu0
        %v1192 = vadd.f32 0.0, %v1191
        %v1193 = vpop.f32.mrb[0].mxu0
        %1194 = vdwg.mxu0
        %v1195 = vadd.f32 %v1031, %v1121
        %v1196 = vadd.f32 %v1032, %v1123
        %v1197 = vadd.f32 %v1033, %v1192
        %s1198 = scalar_lea.vmem %s1, 24
        %v1199 = vld [vmem:[%s1198] sm:$0xf]
        %1200 = vrot.lane.b32.xlu0 %v196, 111
        %v1201 = vpop.permute.xlu0 %1200
        %1202 = vrot.lane.b32.xlu0 %v209, 111
        %v1203 = vpop.permute.xlu0 %1202
        %1204 = vrot.lane.b32.xlu0 %v214, 111
        %v1205 = vpop.permute.xlu0 %1204
        %vm1206 = vcmask 908288
        %v1207 = vsel %vm1206, %v1201, %v1203
        %v1208 = vsel %vm1206, %v1203, %v1205
        %v1210 = vsel %vm236, %v1199, 0
        %v1212 = vsel %vm240, %v1207, 0
        %v1214 = vsel %vm240, %v1208, 0
        %v1216 = vsel %vm240, %v1205, 0
        %1218 = vmatprep.subr.mxu0 %v1214
        %1219 = vmatpush1.msra.mxu0 %v1212
        %1220 = vmatprep.subr.mxu0 0.0
        %1221 = vmatpush1.msra.mxu0 0.0
        %1222 = vmatprep.subr.mxu0 0.0
        %1223 = vmatpush1.msra.mxu0 0.0
        %1224 = vmatprep.subr.mxu0 0.0
        %1225 = vmatpush1.msra.mxu0 0.0
        %1226 = vmatprep.subr.mxu0 0.0
        %1227 = vmatpush1.msra.mxu0 0.0
        %1228 = vmatprep.subr.mxu0 0.0
        %1229 = vmatpush1.msra.mxu0 0.0
        %1230 = vmatprep.subr.mxu0 0.0
        %1231 = vmatpush1.msra.mxu0 0.0
        %1232 = vmatprep.subr.mxu0 0.0
        %1233 = vmatpush1.msra.mxu0 0.0
        %1234 = vmatprep.subr.mxu0 0.0
        %1235 = vmatpush1.msra.mxu0 0.0
        %1236 = vmatprep.subr.mxu0 0.0
        %1237 = vmatpush1.msra.mxu0 0.0
        %1238 = vmatprep.subr.mxu0 0.0
        %1239 = vmatpush1.msra.mxu0 0.0
        %1240 = vmatprep.subr.mxu0 0.0
        %1241 = vmatpush1.msra.mxu0 0.0
        %1242 = vmatprep.subr.mxu0 0.0
        %1243 = vmatpush1.msra.mxu0 0.0
        %1244 = vmatprep.subr.mxu0 0.0
        %1245 = vmatpush1.msra.mxu0 0.0
        %1246 = vmatprep.subr.mxu0 0.0
        %1247 = vmatpush1.msra.mxu0 0.0
        %1248 = vmatprep.subr.mxu0 0.0
        %1249 = vmatpush1.msra.mxu0 0.0
        %1250 = vmatprep.subr.mxu0 0.0
        %1251 = vmatpush1.msra.mxu0 0.0
        %1252 = vmatprep.subr.mxu0 0.0
        %1253 = vmatpush1.msra.mxu0 0.0
        %1254 = vmatprep.subr.mxu0 0.0
        %1255 = vmatpush1.msra.mxu0 0.0
        %1256 = vmatprep.subr.mxu0 0.0
        %1257 = vmatpush1.msra.mxu0 0.0
        %1258 = vmatprep.subr.mxu0 0.0
        %1259 = vmatpush1.msra.mxu0 0.0
        %1260 = vmatprep.subr.mxu0 0.0
        %1261 = vmatpush1.msra.mxu0 0.0
        %1262 = vmatprep.subr.mxu0 0.0
        %1263 = vmatpush1.msra.mxu0 0.0
        %1264 = vmatprep.subr.mxu0 0.0
        %1265 = vmatpush1.msra.mxu0 0.0
        %1266 = vmatprep.subr.mxu0 0.0
        %1267 = vmatpush1.msra.mxu0 0.0
        %1268 = vmatprep.subr.mxu0 0.0
        %1269 = vmatpush1.msra.mxu0 0.0
        %1270 = vmatprep.subr.mxu0 0.0
        %1271 = vmatpush1.msra.mxu0 0.0
        %1272 = vmatprep.subr.mxu0 0.0
        %1273 = vmatpush1.msra.mxu0 0.0
        %1274 = vmatprep.subr.mxu0 0.0
        %1275 = vmatpush1.msra.mxu0 0.0
        %1276 = vmatprep.subr.mxu0 0.0
        %1277 = vmatpush1.msra.mxu0 0.0
        %1278 = vmatprep.subr.mxu0 0.0
        %1279 = vmatpush1.msra.mxu0 0.0
        %1280 = vmatprep.subr.mxu0 0.0
        %1281 = vmatpush1.msra.mxu0 0.0
        %1282 = vmatprep.mubr.f32.mxu0 0.0
        %1283 = vmatmul.mubr.f32.gmra.mrb[0].mxu0 %v1210
        %v1284 = vpop.f32.mrb[0].mxu0
        %v1285 = vadd.f32 0.0, %v1284
        %v1286 = vpop.f32.mrb[0].mxu0
        %v1287 = vadd.f32 0.0, %v1286
        %1288 = vdwg.mxu0
        %1289 = vmatprep.subr.mxu0 0.0
        %1290 = vmatpush1.msra.mxu0 %v1216
        %1291 = vmatprep.subr.mxu0 0.0
        %1292 = vmatpush1.msra.mxu0 0.0
        %1293 = vmatprep.subr.mxu0 0.0
        %1294 = vmatpush1.msra.mxu0 0.0
        %1295 = vmatprep.subr.mxu0 0.0
        %1296 = vmatpush1.msra.mxu0 0.0
        %1297 = vmatprep.subr.mxu0 0.0
        %1298 = vmatpush1.msra.mxu0 0.0
        %1299 = vmatprep.subr.mxu0 0.0
        %1300 = vmatpush1.msra.mxu0 0.0
        %1301 = vmatprep.subr.mxu0 0.0
        %1302 = vmatpush1.msra.mxu0 0.0
        %1303 = vmatprep.subr.mxu0 0.0
        %1304 = vmatpush1.msra.mxu0 0.0
        %1305 = vmatprep.subr.mxu0 0.0
        %1306 = vmatpush1.msra.mxu0 0.0
        %1307 = vmatprep.subr.mxu0 0.0
        %1308 = vmatpush1.msra.mxu0 0.0
        %1309 = vmatprep.subr.mxu0 0.0
        %1310 = vmatpush1.msra.mxu0 0.0
        %1311 = vmatprep.subr.mxu0 0.0
        %1312 = vmatpush1.msra.mxu0 0.0
        %1313 = vmatprep.subr.mxu0 0.0
        %1314 = vmatpush1.msra.mxu0 0.0
        %1315 = vmatprep.subr.mxu0 0.0
        %1316 = vmatpush1.msra.mxu0 0.0
        %1317 = vmatprep.subr.mxu0 0.0
        %1318 = vmatpush1.msra.mxu0 0.0
        %1319 = vmatprep.subr.mxu0 0.0
        %1320 = vmatpush1.msra.mxu0 0.0
        %1321 = vmatprep.subr.mxu0 0.0
        %1322 = vmatpush1.msra.mxu0 0.0
        %1323 = vmatprep.subr.mxu0 0.0
        %1324 = vmatpush1.msra.mxu0 0.0
        %1325 = vmatprep.subr.mxu0 0.0
        %1326 = vmatpush1.msra.mxu0 0.0
        %1327 = vmatprep.subr.mxu0 0.0
        %1328 = vmatpush1.msra.mxu0 0.0
        %1329 = vmatprep.subr.mxu0 0.0
        %1330 = vmatpush1.msra.mxu0 0.0
        %1331 = vmatprep.subr.mxu0 0.0
        %1332 = vmatpush1.msra.mxu0 0.0
        %1333 = vmatprep.subr.mxu0 0.0
        %1334 = vmatpush1.msra.mxu0 0.0
        %1335 = vmatprep.subr.mxu0 0.0
        %1336 = vmatpush1.msra.mxu0 0.0
        %1337 = vmatprep.subr.mxu0 0.0
        %1338 = vmatpush1.msra.mxu0 0.0
        %1339 = vmatprep.subr.mxu0 0.0
        %1340 = vmatpush1.msra.mxu0 0.0
        %1341 = vmatprep.subr.mxu0 0.0
        %1342 = vmatpush1.msra.mxu0 0.0
        %1343 = vmatprep.subr.mxu0 0.0
        %1344 = vmatpush1.msra.mxu0 0.0
        %1345 = vmatprep.subr.mxu0 0.0
        %1346 = vmatpush1.msra.mxu0 0.0
        %1347 = vmatprep.subr.mxu0 0.0
        %1348 = vmatpush1.msra.mxu0 0.0
        %1349 = vmatprep.subr.mxu0 0.0
        %1350 = vmatpush1.msra.mxu0 0.0
        %1351 = vmatprep.subr.mxu0 0.0
        %1352 = vmatpush1.msra.mxu0 0.0
        %1353 = vmatprep.mubr.f32.mxu0 0.0
        %1354 = vmatmul.mubr.f32.gmra.mrb[0].mxu0 %v1210
        %v1355 = vpop.f32.mrb[0].mxu0
        %v1356 = vadd.f32 0.0, %v1355
        %v1357 = vpop.f32.mrb[0].mxu0
        %1358 = vdwg.mxu0
        %v1359 = vadd.f32 %v1195, %v1285
        %v1360 = vadd.f32 %v1196, %v1287
        %v1361 = vadd.f32 %v1197, %v1356
        %s1362 = scalar_lea.vmem %s1, 28
        %v1363 = vld [vmem:[%s1362] sm:$0xf]
        %1364 = vrot.lane.b32.xlu0 %v196, 110
        %v1365 = vpop.permute.xlu0 %1364
        %1366 = vrot.lane.b32.xlu0 %v209, 110
        %v1367 = vpop.permute.xlu0 %1366
        %1368 = vrot.lane.b32.xlu0 %v214, 110
        %v1369 = vpop.permute.xlu0 %1368
        %vm1370 = vcmask 900096
        %v1371 = vsel %vm1370, %v1365, %v1367
        %v1372 = vsel %vm1370, %v1367, %v1369
        %v1374 = vsel %vm236, %v1363, 0
        %v1376 = vsel %vm240, %v1371, 0
        %v1378 = vsel %vm240, %v1372, 0
        %v1380 = vsel %vm240, %v1369, 0
        %1382 = vmatprep.subr.mxu0 %v1378
        %1383 = vmatpush1.msra.mxu0 %v1376
        %1384 = vmatprep.subr.mxu0 0.0
        %1385 = vmatpush1.msra.mxu0 0.0
        %1386 = vmatprep.subr.mxu0 0.0
        %1387 = vmatpush1.msra.mxu0 0.0
        %1388 = vmatprep.subr.mxu0 0.0
        %1389 = vmatpush1.msra.mxu0 0.0
        %1390 = vmatprep.subr.mxu0 0.0
        %1391 = vmatpush1.msra.mxu0 0.0
        %1392 = vmatprep.subr.mxu0 0.0
        %1393 = vmatpush1.msra.mxu0 0.0
        %1394 = vmatprep.subr.mxu0 0.0
        %1395 = vmatpush1.msra.mxu0 0.0
        %1396 = vmatprep.subr.mxu0 0.0
        %1397 = vmatpush1.msra.mxu0 0.0
        %1398 = vmatprep.subr.mxu0 0.0
        %1399 = vmatpush1.msra.mxu0 0.0
        %1400 = vmatprep.subr.mxu0 0.0
        %1401 = vmatpush1.msra.mxu0 0.0
        %1402 = vmatprep.subr.mxu0 0.0
        %1403 = vmatpush1.msra.mxu0 0.0
        %1404 = vmatprep.subr.mxu0 0.0
        %1405 = vmatpush1.msra.mxu0 0.0
        %1406 = vmatprep.subr.mxu0 0.0
        %1407 = vmatpush1.msra.mxu0 0.0
        %1408 = vmatprep.subr.mxu0 0.0
        %1409 = vmatpush1.msra.mxu0 0.0
        %1410 = vmatprep.subr.mxu0 0.0
        %1411 = vmatpush1.msra.mxu0 0.0
        %1412 = vmatprep.subr.mxu0 0.0
        %1413 = vmatpush1.msra.mxu0 0.0
        %1414 = vmatprep.subr.mxu0 0.0
        %1415 = vmatpush1.msra.mxu0 0.0
        %1416 = vmatprep.subr.mxu0 0.0
        %1417 = vmatpush1.msra.mxu0 0.0
        %1418 = vmatprep.subr.mxu0 0.0
        %1419 = vmatpush1.msra.mxu0 0.0
        %1420 = vmatprep.subr.mxu0 0.0
        %1421 = vmatpush1.msra.mxu0 0.0
        %1422 = vmatprep.subr.mxu0 0.0
        %1423 = vmatpush1.msra.mxu0 0.0
        %1424 = vmatprep.subr.mxu0 0.0
        %1425 = vmatpush1.msra.mxu0 0.0
        %1426 = vmatprep.subr.mxu0 0.0
        %1427 = vmatpush1.msra.mxu0 0.0
        %1428 = vmatprep.subr.mxu0 0.0
        %1429 = vmatpush1.msra.mxu0 0.0
        %1430 = vmatprep.subr.mxu0 0.0
        %1431 = vmatpush1.msra.mxu0 0.0
        %1432 = vmatprep.subr.mxu0 0.0
        %1433 = vmatpush1.msra.mxu0 0.0
        %1434 = vmatprep.subr.mxu0 0.0
        %1435 = vmatpush1.msra.mxu0 0.0
        %1436 = vmatprep.subr.mxu0 0.0
        %1437 = vmatpush1.msra.mxu0 0.0
        %1438 = vmatprep.subr.mxu0 0.0
        %1439 = vmatpush1.msra.mxu0 0.0
        %1440 = vmatprep.subr.mxu0 0.0
        %1441 = vmatpush1.msra.mxu0 0.0
        %1442 = vmatprep.subr.mxu0 0.0
        %1443 = vmatpush1.msra.mxu0 0.0
        %1444 = vmatprep.subr.mxu0 0.0
        %1445 = vmatpush1.msra.mxu0 0.0
        %1446 = vmatprep.mubr.f32.mxu0 0.0
        %1447 = vmatmul.mubr.f32.gmra.mrb[0].mxu0 %v1374
        %v1448 = vpop.f32.mrb[0].mxu0
        %v1449 = vadd.f32 0.0, %v1448
        %v1450 = vpop.f32.mrb[0].mxu0
        %v1451 = vadd.f32 0.0, %v1450
        %1452 = vdwg.mxu0
        %1453 = vmatprep.subr.mxu0 0.0
        %1454 = vmatpush1.msra.mxu0 %v1380
        %1455 = vmatprep.subr.mxu0 0.0
        %1456 = vmatpush1.msra.mxu0 0.0
        %1457 = vmatprep.subr.mxu0 0.0
        %1458 = vmatpush1.msra.mxu0 0.0
        %1459 = vmatprep.subr.mxu0 0.0
        %1460 = vmatpush1.msra.mxu0 0.0
        %1461 = vmatprep.subr.mxu0 0.0
        %1462 = vmatpush1.msra.mxu0 0.0
        %1463 = vmatprep.subr.mxu0 0.0
        %1464 = vmatpush1.msra.mxu0 0.0
        %1465 = vmatprep.subr.mxu0 0.0
        %1466 = vmatpush1.msra.mxu0 0.0
        %1467 = vmatprep.subr.mxu0 0.0
        %1468 = vmatpush1.msra.mxu0 0.0
        %1469 = vmatprep.subr.mxu0 0.0
        %1470 = vmatpush1.msra.mxu0 0.0
        %1471 = vmatprep.subr.mxu0 0.0
        %1472 = vmatpush1.msra.mxu0 0.0
        %1473 = vmatprep.subr.mxu0 0.0
        %1474 = vmatpush1.msra.mxu0 0.0
        %1475 = vmatprep.subr.mxu0 0.0
        %1476 = vmatpush1.msra.mxu0 0.0
        %1477 = vmatprep.subr.mxu0 0.0
        %1478 = vmatpush1.msra.mxu0 0.0
        %1479 = vmatprep.subr.mxu0 0.0
        %1480 = vmatpush1.msra.mxu0 0.0
        %1481 = vmatprep.subr.mxu0 0.0
        %1482 = vmatpush1.msra.mxu0 0.0
        %1483 = vmatprep.subr.mxu0 0.0
        %1484 = vmatpush1.msra.mxu0 0.0
        %1485 = vmatprep.subr.mxu0 0.0
        %1486 = vmatpush1.msra.mxu0 0.0
        %1487 = vmatprep.subr.mxu0 0.0
        %1488 = vmatpush1.msra.mxu0 0.0
        %1489 = vmatprep.subr.mxu0 0.0
        %1490 = vmatpush1.msra.mxu0 0.0
        %1491 = vmatprep.subr.mxu0 0.0
        %1492 = vmatpush1.msra.mxu0 0.0
        %1493 = vmatprep.subr.mxu0 0.0
        %1494 = vmatpush1.msra.mxu0 0.0
        %1495 = vmatprep.subr.mxu0 0.0
        %1496 = vmatpush1.msra.mxu0 0.0
        %1497 = vmatprep.subr.mxu0 0.0
        %1498 = vmatpush1.msra.mxu0 0.0
        %1499 = vmatprep.subr.mxu0 0.0
        %1500 = vmatpush1.msra.mxu0 0.0
        %1501 = vmatprep.subr.mxu0 0.0
        %1502 = vmatpush1.msra.mxu0 0.0
        %1503 = vmatprep.subr.mxu0 0.0
        %1504 = vmatpush1.msra.mxu0 0.0
        %1505 = vmatprep.subr.mxu0 0.0
        %1506 = vmatpush1.msra.mxu0 0.0
        %1507 = vmatprep.subr.mxu0 0.0
        %1508 = vmatpush1.msra.mxu0 0.0
        %1509 = vmatprep.subr.mxu0 0.0
        %1510 = vmatpush1.msra.mxu0 0.0
        %1511 = vmatprep.subr.mxu0 0.0
        %1512 = vmatpush1.msra.mxu0 0.0
        %1513 = vmatprep.subr.mxu0 0.0
        %1514 = vmatpush1.msra.mxu0 0.0
        %1515 = vmatprep.subr.mxu0 0.0
        %1516 = vmatpush1.msra.mxu0 0.0
        %1517 = vmatprep.mubr.f32.mxu0 0.0
        %1518 = vmatmul.mubr.f32.gmra.mrb[0].mxu0 %v1374
        %v1519 = vpop.f32.mrb[0].mxu0
        %v1520 = vadd.f32 0.0, %v1519
        %v1521 = vpop.f32.mrb[0].mxu0
        %1522 = vdwg.mxu0
        %v1523 = vadd.f32 %v1359, %v1449
        %v1524 = vadd.f32 %v1360, %v1451
        %v1525 = vadd.f32 %v1361, %v1520
        %s1526 = scalar_lea.vmem %s1, 32
        %v1527 = vld [vmem:[%s1526] sm:$0xf]
        %1528 = vrot.lane.b32.xlu0 %v196, 109
        %v1529 = vpop.permute.xlu0 %1528
        %1530 = vrot.lane.b32.xlu0 %v209, 109
        %v1531 = vpop.permute.xlu0 %1530
        %1532 = vrot.lane.b32.xlu0 %v214, 109
        %v1533 = vpop.permute.xlu0 %1532
        %vm1534 = vcmask 891904
        %v1535 = vsel %vm1534, %v1529, %v1531
        %v1536 = vsel %vm1534, %v1531, %v1533
        %v1538 = vsel %vm236, %v1527, 0
        %v1540 = vsel %vm240, %v1535, 0
        %v1542 = vsel %vm240, %v1536, 0
        %v1544 = vsel %vm240, %v1533, 0
        %1546 = vmatprep.subr.mxu0 %v1542
        %1547 = vmatpush1.msra.mxu0 %v1540
        %1548 = vmatprep.subr.mxu0 0.0
        %1549 = vmatpush1.msra.mxu0 0.0
        %1550 = vmatprep.subr.mxu0 0.0
        %1551 = vmatpush1.msra.mxu0 0.0
        %1552 = vmatprep.subr.mxu0 0.0
        %1553 = vmatpush1.msra.mxu0 0.0
        %1554 = vmatprep.subr.mxu0 0.0
        %1555 = vmatpush1.msra.mxu0 0.0
        %1556 = vmatprep.subr.mxu0 0.0
        %1557 = vmatpush1.msra.mxu0 0.0
        %1558 = vmatprep.subr.mxu0 0.0
        %1559 = vmatpush1.msra.mxu0 0.0
        %1560 = vmatprep.subr.mxu0 0.0
        %1561 = vmatpush1.msra.mxu0 0.0
        %1562 = vmatprep.subr.mxu0 0.0
        %1563 = vmatpush1.msra.mxu0 0.0
        %1564 = vmatprep.subr.mxu0 0.0
        %1565 = vmatpush1.msra.mxu0 0.0
        %1566 = vmatprep.subr.mxu0 0.0
        %1567 = vmatpush1.msra.mxu0 0.0
        %1568 = vmatprep.subr.mxu0 0.0
        %1569 = vmatpush1.msra.mxu0 0.0
        %1570 = vmatprep.subr.mxu0 0.0
        %1571 = vmatpush1.msra.mxu0 0.0
        %1572 = vmatprep.subr.mxu0 0.0
        %1573 = vmatpush1.msra.mxu0 0.0
        %1574 = vmatprep.subr.mxu0 0.0
        %1575 = vmatpush1.msra.mxu0 0.0
        %1576 = vmatprep.subr.mxu0 0.0
        %1577 = vmatpush1.msra.mxu0 0.0
        %1578 = vmatprep.subr.mxu0 0.0
        %1579 = vmatpush1.msra.mxu0 0.0
        %1580 = vmatprep.subr.mxu0 0.0
        %1581 = vmatpush1.msra.mxu0 0.0
        %1582 = vmatprep.subr.mxu0 0.0
        %1583 = vmatpush1.msra.mxu0 0.0
        %1584 = vmatprep.subr.mxu0 0.0
        %1585 = vmatpush1.msra.mxu0 0.0
        %1586 = vmatprep.subr.mxu0 0.0
        %1587 = vmatpush1.msra.mxu0 0.0
        %1588 = vmatprep.subr.mxu0 0.0
        %1589 = vmatpush1.msra.mxu0 0.0
        %1590 = vmatprep.subr.mxu0 0.0
        %1591 = vmatpush1.msra.mxu0 0.0
        %1592 = vmatprep.subr.mxu0 0.0
        %1593 = vmatpush1.msra.mxu0 0.0
        %1594 = vmatprep.subr.mxu0 0.0
        %1595 = vmatpush1.msra.mxu0 0.0
        %1596 = vmatprep.subr.mxu0 0.0
        %1597 = vmatpush1.msra.mxu0 0.0
        %1598 = vmatprep.subr.mxu0 0.0
        %1599 = vmatpush1.msra.mxu0 0.0
        %1600 = vmatprep.subr.mxu0 0.0
        %1601 = vmatpush1.msra.mxu0 0.0
        %1602 = vmatprep.subr.mxu0 0.0
        %1603 = vmatpush1.msra.mxu0 0.0
        %1604 = vmatprep.subr.mxu0 0.0
        %1605 = vmatpush1.msra.mxu0 0.0
        %1606 = vmatprep.subr.mxu0 0.0
        %1607 = vmatpush1.msra.mxu0 0.0
        %1608 = vmatprep.subr.mxu0 0.0
        %1609 = vmatpush1.msra.mxu0 0.0
        %1610 = vmatprep.mubr.f32.mxu0 0.0
        %1611 = vmatmul.mubr.f32.gmra.mrb[0].mxu0 %v1538
        %v1612 = vpop.f32.mrb[0].mxu0
        %v1613 = vadd.f32 0.0, %v1612
        %v1614 = vpop.f32.mrb[0].mxu0
        %v1615 = vadd.f32 0.0, %v1614
        %1616 = vdwg.mxu0
        %1617 = vmatprep.subr.mxu0 0.0
        %1618 = vmatpush1.msra.mxu0 %v1544
        %1619 = vmatprep.subr.mxu0 0.0
        %1620 = vmatpush1.msra.mxu0 0.0
        %1621 = vmatprep.subr.mxu0 0.0
        %1622 = vmatpush1.msra.mxu0 0.0
        %1623 = vmatprep.subr.mxu0 0.0
        %1624 = vmatpush1.msra.mxu0 0.0
        %1625 = vmatprep.subr.mxu0 0.0
        %1626 = vmatpush1.msra.mxu0 0.0
        %1627 = vmatprep.subr.mxu0 0.0
        %1628 = vmatpush1.msra.mxu0 0.0
        %1629 = vmatprep.subr.mxu0 0.0
        %1630 = vmatpush1.msra.mxu0 0.0
        %1631 = vmatprep.subr.mxu0 0.0
        %1632 = vmatpush1.msra.mxu0 0.0
        %1633 = vmatprep.subr.mxu0 0.0
        %1634 = vmatpush1.msra.mxu0 0.0
        %1635 = vmatprep.subr.mxu0 0.0
        %1636 = vmatpush1.msra.mxu0 0.0
        %1637 = vmatprep.subr.mxu0 0.0
        %1638 = vmatpush1.msra.mxu0 0.0
        %1639 = vmatprep.subr.mxu0 0.0
        %1640 = vmatpush1.msra.mxu0 0.0
        %1641 = vmatprep.subr.mxu0 0.0
        %1642 = vmatpush1.msra.mxu0 0.0
        %1643 = vmatprep.subr.mxu0 0.0
        %1644 = vmatpush1.msra.mxu0 0.0
        %1645 = vmatprep.subr.mxu0 0.0
        %1646 = vmatpush1.msra.mxu0 0.0
        %1647 = vmatprep.subr.mxu0 0.0
        %1648 = vmatpush1.msra.mxu0 0.0
        %1649 = vmatprep.subr.mxu0 0.0
        %1650 = vmatpush1.msra.mxu0 0.0
        %1651 = vmatprep.subr.mxu0 0.0
        %1652 = vmatpush1.msra.mxu0 0.0
        %1653 = vmatprep.subr.mxu0 0.0
        %1654 = vmatpush1.msra.mxu0 0.0
        %1655 = vmatprep.subr.mxu0 0.0
        %1656 = vmatpush1.msra.mxu0 0.0
        %1657 = vmatprep.subr.mxu0 0.0
        %1658 = vmatpush1.msra.mxu0 0.0
        %1659 = vmatprep.subr.mxu0 0.0
        %1660 = vmatpush1.msra.mxu0 0.0
        %1661 = vmatprep.subr.mxu0 0.0
        %1662 = vmatpush1.msra.mxu0 0.0
        %1663 = vmatprep.subr.mxu0 0.0
        %1664 = vmatpush1.msra.mxu0 0.0
        %1665 = vmatprep.subr.mxu0 0.0
        %1666 = vmatpush1.msra.mxu0 0.0
        %1667 = vmatprep.subr.mxu0 0.0
        %1668 = vmatpush1.msra.mxu0 0.0
        %1669 = vmatprep.subr.mxu0 0.0
        %1670 = vmatpush1.msra.mxu0 0.0
        %1671 = vmatprep.subr.mxu0 0.0
        %1672 = vmatpush1.msra.mxu0 0.0
        %1673 = vmatprep.subr.mxu0 0.0
        %1674 = vmatpush1.msra.mxu0 0.0
        %1675 = vmatprep.subr.mxu0 0.0
        %1676 = vmatpush1.msra.mxu0 0.0
        %1677 = vmatprep.subr.mxu0 0.0
        %1678 = vmatpush1.msra.mxu0 0.0
        %1679 = vmatprep.subr.mxu0 0.0
        %1680 = vmatpush1.msra.mxu0 0.0
        %1681 = vmatprep.mubr.f32.mxu0 0.0
        %1682 = vmatmul.mubr.f32.gmra.mrb[0].mxu0 %v1538
        %v1683 = vpop.f32.mrb[0].mxu0
        %v1684 = vadd.f32 0.0, %v1683
        %v1685 = vpop.f32.mrb[0].mxu0
        %1686 = vdwg.mxu0
        %v1687 = vadd.f32 %v1523, %v1613
        %v1688 = vadd.f32 %v1524, %v1615
        %v1689 = vadd.f32 %v1525, %v1684
        %v1691 = vlaneseq
        %v1692 = vshrl.u32 %v1691, 7
        %v1693 = vsub.s32 0, %v1692
        %v1694 = vrot.slane %v198, %v1693
        %v1695 = vlaneseq
        %v1696 = vshrl.u32 %v1695, 7
        %v1697 = vsub.s32 1, %v1696
        %v1698 = vrot.slane %v198, %v1697
        %v1699 = vlaneseq
        %v1700 = vshrl.u32 %v1699, 7
        %v1701 = vsub.s32 2, %v1700
        %v1702 = vrot.slane %v198, %v1701
        %v1706 = vmul.f32 %v1687, %v1694
        %v1707 = vmul.f32 %v1688, %v1698
        %v1708 = vmul.f32 %v1689, %v1702
        %v1709 = vsel %vm240, %v1706, 0.0
        %v1710 = vsel %vm240, %v1707, 0.0
        %v1711 = vadd.f32 %v1709, %v1710
        %vm1712 = vcmask 551936
        %v1713 = vsel %vm1712, %v1708, 0.0
        %v1714 = vadd.f32 %v1711, %v1713
        %1715 = vadd.xlane.f32.xlu0 %v1714
        %v1716 = vpop.xlane.xlu0 %1715
        %v1717 = vmul.f32 %v1706, %v1687
        %v1718 = vmul.f32 %v1707, %v1688
        %v1719 = vmul.f32 %v1708, %v1689
        %v1720 = vsel %vm240, %v1717, 0.0
        %v1721 = vsel %vm240, %v1718, 0.0
        %v1722 = vadd.f32 %v1720, %v1721
        %v1723 = vsel %vm1712, %v1719, 0.0
        %v1724 = vadd.f32 %v1722, %v1723
        %1725 = vadd.xlane.f32.xlu0 %v1724
        %v1726 = vpop.xlane.xlu0 %1725
        %v1727 = vmul.f32 %v1716, 0.00390625
        %v1728 = vmul.f32 %v1726, 0.00390625
        %v1729 = vmul.f32 %v1727, %v1727
        %v1730 = vsub.f32 %v1728, %v1729
        %v1731 = vsub.f32 %v1687, %v1727
        %v1732 = vsub.f32 %v1688, %v1727
        %v1733 = vsub.f32 %v1689, %v1727
        %v1734 = vadd.f32 %v1730, 1e-05
        %v1735 = vrsqrt.pop %v1734
        %v1736 = vmul.f32 %v1731, %v1735
        %v1737 = vmul.f32 %v1732, %v1735
        %v1738 = vmul.f32 %v1733, %v1735
        %vm1739 = vcmp.gt.f32.partialorder %v1736, 0.0
        %vm1740 = vcmp.gt.f32.partialorder %v1737, 0.0
        %vm1741 = vcmp.gt.f32.partialorder %v1738, 0.0
        %v1742 = vmul.f32 %v1736, 0.2
        %v1743 = vmul.f32 %v1737, 0.2
        %v1744 = vmul.f32 %v1738, 0.2
        %v1745 = vsel %vm1739, %v1736, %v1742
        %v1746 = vsel %vm1740, %v1737, %v1743
        %v1747 = vsel %vm1741, %v1738, %v1744
        %1748 = vrot.lane.b32.xlu0 %v1745, 68
        %v1749 = vpop.permute.xlu0 %1748
        %v1750 = vsel %vm211, %v1749, %v1747
        %1754 = vrot.lane.b32.xlu0 %v1745, 36
        %v1755 = vpop.permute.xlu0 %1754
        %1756 = vrot.lane.b32.xlu0 %v1746, 36
        %v1757 = vpop.permute.xlu0 %1756
        %1758 = vrot.lane.b32.xlu0 %v1747, 36
        %v1759 = vpop.permute.xlu0 %1758
        %vm1760 = vcmask 293888
        %v1761 = vsel %vm1760, %v1755, %v1757
        %v1762 = vsel %vm1760, %v1757, %v1759
        %v1766 = vsub.f32 %v1745, %v1755
        %v1767 = vsub.f32 %v1746, %v1761
        %v1768 = vsub.f32 %v1750, %v1762
        %v1770 = vlaneseq
        %v1771 = vshrl.u32 %v1770, 7
        %v1772 = vsub.s32 0, %v1771
        %v1773 = vrot.slane %v200, %v1772
        %v1774 = vlaneseq
        %v1775 = vshrl.u32 %v1774, 7
        %v1776 = vsub.s32 1, %v1775
        %v1777 = vrot.slane %v200, %v1776
        %v1778 = vlaneseq
        %v1779 = vshrl.u32 %v1778, 7
        %v1780 = vsub.s32 2, %v1779
        %v1781 = vrot.slane %v200, %v1780
        %1788 = vrot.lane.b32.xlu0 %v1766, 92
        %v1789 = vpop.permute.xlu0 %1788
        %1790 = vrot.lane.b32.xlu0 %v1767, 92
        %v1791 = vpop.permute.xlu0 %1790
        %1792 = vrot.lane.b32.xlu0 %v1768, 92
        %v1793 = vpop.permute.xlu0 %1792
        %vm1794 = vcmask 752640
        %v1795 = vsel %vm1794, %v1789, %v1791
        %v1796 = vsel %vm1794, %v1791, %v1793
        %v1800 = vmul.f32 %v1773, %v1795
        %v1801 = vmul.f32 %v1777, %v1796
        %v1802 = vmul.f32 %v1781, %v1793
        %v1803 = vadd.f32 %v1745, %v1800
        %v1804 = vadd.f32 %v1746, %v1801
        %v1805 = vadd.f32 %v1747, %v1802
        %1806 = vrot.lane.b32.xlu0 %v1803, 68
        %v1807 = vpop.permute.xlu0 %1806
        %v1808 = vsel %vm211, %v1807, %v1805
        %1809 = vrot.lane.b32.xlu0 %v1804, 68
        %v1810 = vpop.permute.xlu0 %1809
        %1811 = vrot.lane.b32.xlu0 %v1808, 68
        %v1812 = vpop.permute.xlu0 %1811
        %v1813 = vsel %vm211, %v1810, %v1807
        %v1814 = vsel %vm211, %v1812, %v1810
        %1818 = vrot.lane.b32.xlu0 %v1803, 32
        %v1819 = vpop.permute.xlu0 %1818
        %1820 = vrot.lane.b32.xlu0 %v1804, 32
        %v1821 = vpop.permute.xlu0 %1820
        %1822 = vrot.lane.b32.xlu0 %v1805, 32
        %v1823 = vpop.permute.xlu0 %1822
        %vm1824 = vcmask 261120
        %v1825 = vsel %vm1824, %v1819, %v1821
        %v1826 = vsel %vm1824, %v1821, %v1823
        %v1830 = vsub.f32 %v1808, %v1819
        %v1831 = vsub.f32 %v1813, %v1825
        %v1832 = vsub.f32 %v1814, %v1826
        %v1834 = vlaneseq
        %v1835 = vshrl.u32 %v1834, 7
        %v1836 = vsub.s32 0, %v1835
        %v1837 = vrot.slane %v202, %v1836
        %v1838 = vlaneseq
        %v1839 = vshrl.u32 %v1838, 7
        %v1840 = vsub.s32 1, %v1839
        %v1841 = vrot.slane %v202, %v1840
        %v1842 = vlaneseq
        %v1843 = vshrl.u32 %v1842, 7
        %v1844 = vsub.s32 2, %v1843
        %v1845 = vrot.slane %v202, %v1844
        %1852 = vrot.lane.b32.xlu0 %v1830, 96
        %v1853 = vpop.permute.xlu0 %1852
        %1854 = vrot.lane.b32.xlu0 %v1831, 96
        %v1855 = vpop.permute.xlu0 %1854
        %1856 = vrot.lane.b32.xlu0 %v1832, 96
        %v1857 = vpop.permute.xlu0 %1856
        %vm1858 = vcmask 785408
        %v1859 = vsel %vm1858, %v1853, %v1855
        %v1860 = vsel %vm1858, %v1855, %v1857
        %v1864 = vmul.f32 %v1837, %v1859
        %v1865 = vmul.f32 %v1841, %v1860
        %v1866 = vmul.f32 %v1845, %v1857
        %v1867 = vadd.f32 %v1803, %v1864
        %v1868 = vadd.f32 %v1804, %v1865
        %v1869 = vadd.f32 %v1805, %v1866
        %1870 = vrot.lane.b32.xlu0 %v1867, 68
        %v1871 = vpop.permute.xlu0 %1870
        %v1872 = vsel %vm211, %v1871, %v1869
        %1876 = vrot.lane.b32.xlu0 %v1867, 2
        %v1877 = vpop.permute.xlu0 %1876
        %1878 = vrot.lane.b32.xlu0 %v1868, 2
        %v1879 = vpop.permute.xlu0 %1878
        %1880 = vrot.lane.b32.xlu0 %v1869, 2
        %v1881 = vpop.permute.xlu0 %1880
        %vm1882 = vcmask 15360
        %v1883 = vsel %vm1882, %v1877, %v1879
        %v1884 = vsel %vm1882, %v1879, %v1881
        %v1888 = vsub.f32 %v1867, %v1877
        %v1889 = vsub.f32 %v1868, %v1883
        %v1890 = vsub.f32 %v1872, %v1884
        %v1892 = vlaneseq
        %v1893 = vshrl.u32 %v1892, 7
        %v1894 = vsub.s32 0, %v1893
        %v1895 = vrot.slane %v204, %v1894
        %v1896 = vlaneseq
        %v1897 = vshrl.u32 %v1896, 7
        %v1898 = vsub.s32 1, %v1897
        %v1899 = vrot.slane %v204, %v1898
        %v1900 = vlaneseq
        %v1901 = vshrl.u32 %v1900, 7
        %v1902 = vsub.s32 2, %v1901
        %v1903 = vrot.slane %v204, %v1902
        %1910 = vrot.lane.b32.xlu0 %v1888, 126
        %v1911 = vpop.permute.xlu0 %1910
        %1912 = vrot.lane.b32.xlu0 %v1889, 126
        %v1913 = vpop.permute.xlu0 %1912
        %1914 = vrot.lane.b32.xlu0 %v1890, 126
        %v1915 = vpop.permute.xlu0 %1914
        %vm1916 = vcmask 1031168
        %v1917 = vsel %vm1916, %v1911, %v1913
        %v1918 = vsel %vm1916, %v1913, %v1915
        %v1922 = vmul.f32 %v1895, %v1917
        %v1923 = vmul.f32 %v1899, %v1918
        %v1924 = vmul.f32 %v1903, %v1915
        %v1925 = vadd.f32 %v1867, %v1922
        %v1926 = vadd.f32 %v1868, %v1923
        %v1927 = vadd.f32 %v1869, %v1924
        %1928 = vrot.lane.b32.xlu0 %v1925, 68
        %v1929 = vpop.permute.xlu0 %1928
        %v1930 = vsel %vm211, %v1929, %v1927
        %1931 = vrot.lane.b32.xlu0 %v1926, 68
        %v1932 = vpop.permute.xlu0 %1931
        %1933 = vrot.lane.b32.xlu0 %v1930, 68
        %v1934 = vpop.permute.xlu0 %1933
        %v1935 = vsel %vm211, %v1932, %v1929
        %v1936 = vsel %vm211, %v1934, %v1932
        %1940 = vrot.lane.b32.xlu0 %v1925, 66
        %v1941 = vpop.permute.xlu0 %1940
        %1942 = vrot.lane.b32.xlu0 %v1926, 66
        %v1943 = vpop.permute.xlu0 %1942
        %1944 = vrot.lane.b32.xlu0 %v1927, 66
        %v1945 = vpop.permute.xlu0 %1944
        %vm1946 = vcmask 539648
        %v1947 = vsel %vm1946, %v1941, %v1943
        %v1948 = vsel %vm1946, %v1943, %v1945
        %v1953 = vsub.f32 %v1930, %v1941
        %v1954 = vsub.f32 %v1935, %v1947
        %v1955 = vsub.f32 %v1936, %v1948
        %v1956 = vsub.f32 %v1934, %v1945
        %v1958 = vlaneseq
        %v1959 = vshrl.u32 %v1958, 7
        %v1960 = vsub.s32 0, %v1959
        %v1961 = vrot.slane %v206, %v1960
        %v1962 = vlaneseq
        %v1963 = vshrl.u32 %v1962, 7
        %v1964 = vsub.s32 1, %v1963
        %v1965 = vrot.slane %v206, %v1964
        %v1966 = vlaneseq
        %v1967 = vshrl.u32 %v1966, 7
        %v1968 = vsub.s32 2, %v1967
        %v1969 = vrot.slane %v206, %v1968
        %1977 = vrot.lane.b32.xlu0 %v1953, 62
        %v1978 = vpop.permute.xlu0 %1977
        %1979 = vrot.lane.b32.xlu0 %v1954, 62
        %v1980 = vpop.permute.xlu0 %1979
        %1981 = vrot.lane.b32.xlu0 %v1955, 62
        %v1982 = vpop.permute.xlu0 %1981
        %1983 = vrot.lane.b32.xlu0 %v1956, 62
        %v1984 = vpop.permute.xlu0 %1983
        %vm1985 = vcmask 506880
        %v1986 = vsel %vm1985, %v1978, %v1980
        %v1987 = vsel %vm1985, %v1980, %v1982
        %v1988 = vsel %vm1985, %v1982, %v1984
        %v1992 = vmul.f32 %v1961, %v1986
        %v1993 = vmul.f32 %v1965, %v1987
        %v1994 = vmul.f32 %v1969, %v1988
        %v1995 = vadd.f32 %v1925, %v1992
        %v1996 = vadd.f32 %v1926, %v1993
        %v1997 = vadd.f32 %v1927, %v1994
        %1998 = vrot.lane.b32.xlu0 %v1995, 68
        %v1999 = vpop.permute.xlu0 %1998
        %v2000 = vsel %vm211, %v1999, %v1997
        %2001 = vrot.lane.b32.xlu0 %v1996, 68
        %v2002 = vpop.permute.xlu0 %2001
        %2003 = vrot.lane.b32.xlu0 %v2000, 68
        %v2004 = vpop.permute.xlu0 %2003
        %v2005 = vsel %vm211, %v2002, %v1999
        %v2006 = vsel %vm211, %v2004, %v2002
        %v2007 = vld [vmem:[%s2] sm:$0xf]
        %s2008 = scalar_lea.vmem %s2, 4
        %v2009 = vld [vmem:[%s2008] sm:$0xf]
        %2013 = vrot.lane.b32.xlu0 %v2000, 78
        %v2014 = vpop.permute.xlu0 %2013
        %2015 = vrot.lane.b32.xlu0 %v2005, 78
        %v2016 = vpop.permute.xlu0 %2015
        %2017 = vrot.lane.b32.xlu0 %v2006, 78
        %v2018 = vpop.permute.xlu0 %2017
        %v2019 = vsel %vm233, %v2014, %v2016
        %v2020 = vsel %vm233, %v2016, %v2018
        %v2022 = vsel %vm236, %v2009, 0
        %v2024 = vsel %vm240, %v2019, 0
        %v2026 = vsel %vm240, %v2020, 0
        %v2028 = vsel %vm240, %v2018, 0
        %2030 = vmatprep.subr.mxu0 %v2026
        %2031 = vmatpush1.msra.mxu0 %v2024
        %2032 = vmatprep.subr.mxu0 0.0
        %2033 = vmatpush1.msra.mxu0 0.0
        %2034 = vmatprep.subr.mxu0 0.0
        %2035 = vmatpush1.msra.mxu0 0.0
        %2036 = vmatprep.subr.mxu0 0.0
        %2037 = vmatpush1.msra.mxu0 0.0
        %2038 = vmatprep.subr.mxu0 0.0
        %2039 = vmatpush1.msra.mxu0 0.0
        %2040 = vmatprep.subr.mxu0 0.0
        %2041 = vmatpush1.msra.mxu0 0.0
        %2042 = vmatprep.subr.mxu0 0.0
        %2043 = vmatpush1.msra.mxu0 0.0
        %2044 = vmatprep.subr.mxu0 0.0
        %2045 = vmatpush1.msra.mxu0 0.0
        %2046 = vmatprep.subr.mxu0 0.0
        %2047 = vmatpush1.msra.mxu0 0.0
        %2048 = vmatprep.subr.mxu0 0.0
        %2049 = vmatpush1.msra.mxu0 0.0
        %2050 = vmatprep.subr.mxu0 0.0
        %2051 = vmatpush1.msra.mxu0 0.0
        %2052 = vmatprep.subr.mxu0 0.0
        %2053 = vmatpush1.msra.mxu0 0.0
        %2054 = vmatprep.subr.mxu0 0.0
        %2055 = vmatpush1.msra.mxu0 0.0
        %2056 = vmatprep.subr.mxu0 0.0
        %2057 = vmatpush1.msra.mxu0 0.0
        %2058 = vmatprep.subr.mxu0 0.0
        %2059 = vmatpush1.msra.mxu0 0.0
        %2060 = vmatprep.subr.mxu0 0.0
        %2061 = vmatpush1.msra.mxu0 0.0
        %2062 = vmatprep.subr.mxu0 0.0
        %2063 = vmatpush1.msra.mxu0 0.0
        %2064 = vmatprep.subr.mxu0 0.0
        %2065 = vmatpush1.msra.mxu0 0.0
        %2066 = vmatprep.subr.mxu0 0.0
        %2067 = vmatpush1.msra.mxu0 0.0
        %2068 = vmatprep.subr.mxu0 0.0
        %2069 = vmatpush1.msra.mxu0 0.0
        %2070 = vmatprep.subr.mxu0 0.0
        %2071 = vmatpush1.msra.mxu0 0.0
        %2072 = vmatprep.subr.mxu0 0.0
        %2073 = vmatpush1.msra.mxu0 0.0
        %2074 = vmatprep.subr.mxu0 0.0
        %2075 = vmatpush1.msra.mxu0 0.0
        %2076 = vmatprep.subr.mxu0 0.0
        %2077 = vmatpush1.msra.mxu0 0.0
        %2078 = vmatprep.subr.mxu0 0.0
        %2079 = vmatpush1.msra.mxu0 0.0
        %2080 = vmatprep.subr.mxu0 0.0
        %2081 = vmatpush1.msra.mxu0 0.0
        %2082 = vmatprep.subr.mxu0 0.0
        %2083 = vmatpush1.msra.mxu0 0.0
        %2084 = vmatprep.subr.mxu0 0.0
        %2085 = vmatpush1.msra.mxu0 0.0
        %2086 = vmatprep.subr.mxu0 0.0
        %2087 = vmatpush1.msra.mxu0 0.0
        %2088 = vmatprep.subr.mxu0 0.0
        %2089 = vmatpush1.msra.mxu0 0.0
        %2090 = vmatprep.subr.mxu0 0.0
        %2091 = vmatpush1.msra.mxu0 0.0
        %2092 = vmatprep.subr.mxu0 0.0
        %2093 = vmatpush1.msra.mxu0 0.0
        %2094 = vmatprep.mubr.f32.mxu0 0.0
        %2095 = vmatmul.mubr.f32.gmra.mrb[0].mxu0 %v2022
        %v2096 = vpop.f32.mrb[0].mxu0
        %v2097 = vadd.f32 0.0, %v2096
        %v2098 = vpop.f32.mrb[0].mxu0
        %v2099 = vadd.f32 0.0, %v2098
        %2100 = vdwg.mxu0
        %2101 = vmatprep.subr.mxu0 0.0
        %2102 = vmatpush1.msra.mxu0 %v2028
        %2103 = vmatprep.subr.mxu0 0.0
        %2104 = vmatpush1.msra.mxu0 0.0
        %2105 = vmatprep.subr.mxu0 0.0
        %2106 = vmatpush1.msra.mxu0 0.0
        %2107 = vmatprep.subr.mxu0 0.0
        %2108 = vmatpush1.msra.mxu0 0.0
        %2109 = vmatprep.subr.mxu0 0.0
        %2110 = vmatpush1.msra.mxu0 0.0
        %2111 = vmatprep.subr.mxu0 0.0
        %2112 = vmatpush1.msra.mxu0 0.0
        %2113 = vmatprep.subr.mxu0 0.0
        %2114 = vmatpush1.msra.mxu0 0.0
        %2115 = vmatprep.subr.mxu0 0.0
        %2116 = vmatpush1.msra.mxu0 0.0
        %2117 = vmatprep.subr.mxu0 0.0
        %2118 = vmatpush1.msra.mxu0 0.0
        %2119 = vmatprep.subr.mxu0 0.0
        %2120 = vmatpush1.msra.mxu0 0.0
        %2121 = vmatprep.subr.mxu0 0.0
        %2122 = vmatpush1.msra.mxu0 0.0
        %2123 = vmatprep.subr.mxu0 0.0
        %2124 = vmatpush1.msra.mxu0 0.0
        %2125 = vmatprep.subr.mxu0 0.0
        %2126 = vmatpush1.msra.mxu0 0.0
        %2127 = vmatprep.subr.mxu0 0.0
        %2128 = vmatpush1.msra.mxu0 0.0
        %2129 = vmatprep.subr.mxu0 0.0
        %2130 = vmatpush1.msra.mxu0 0.0
        %2131 = vmatprep.subr.mxu0 0.0
        %2132 = vmatpush1.msra.mxu0 0.0
        %2133 = vmatprep.subr.mxu0 0.0
        %2134 = vmatpush1.msra.mxu0 0.0
        %2135 = vmatprep.subr.mxu0 0.0
        %2136 = vmatpush1.msra.mxu0 0.0
        %2137 = vmatprep.subr.mxu0 0.0
        %2138 = vmatpush1.msra.mxu0 0.0
        %2139 = vmatprep.subr.mxu0 0.0
        %2140 = vmatpush1.msra.mxu0 0.0
        %2141 = vmatprep.subr.mxu0 0.0
        %2142 = vmatpush1.msra.mxu0 0.0
        %2143 = vmatprep.subr.mxu0 0.0
        %2144 = vmatpush1.msra.mxu0 0.0
        %2145 = vmatprep.subr.mxu0 0.0
        %2146 = vmatpush1.msra.mxu0 0.0
        %2147 = vmatprep.subr.mxu0 0.0
        %2148 = vmatpush1.msra.mxu0 0.0
        %2149 = vmatprep.subr.mxu0 0.0
        %2150 = vmatpush1.msra.mxu0 0.0
        %2151 = vmatprep.subr.mxu0 0.0
        %2152 = vmatpush1.msra.mxu0 0.0
        %2153 = vmatprep.subr.mxu0 0.0
        %2154 = vmatpush1.msra.mxu0 0.0
        %2155 = vmatprep.subr.mxu0 0.0
        %2156 = vmatpush1.msra.mxu0 0.0
        %2157 = vmatprep.subr.mxu0 0.0
        %2158 = vmatpush1.msra.mxu0 0.0
        %2159 = vmatprep.subr.mxu0 0.0
        %2160 = vmatpush1.msra.mxu0 0.0
        %2161 = vmatprep.subr.mxu0 0.0
        %2162 = vmatpush1.msra.mxu0 0.0
        %2163 = vmatprep.subr.mxu0 0.0
        %2164 = vmatpush1.msra.mxu0 0.0
        %2165 = vmatprep.mubr.f32.mxu0 0.0
        %2166 = vmatmul.mubr.f32.gmra.mrb[0].mxu0 %v2022
        %v2167 = vpop.f32.mrb[0].mxu0
        %v2168 = vadd.f32 0.0, %v2167
        %v2169 = vpop.f32.mrb[0].mxu0
        %2170 = vdwg.mxu0
        %2171 = vrot.lane.b32.xlu0 %v2000, 79
        %v2172 = vpop.permute.xlu0 %2171
        %2173 = vrot.lane.b32.xlu0 %v2005, 79
        %v2174 = vpop.permute.xlu0 %2173
        %2175 = vrot.lane.b32.xlu0 %v2006, 79
        %v2176 = vpop.permute.xlu0 %2175
        %v2177 = vsel %vm394, %v2172, %v2174
        %v2178 = vsel %vm394, %v2174, %v2176
        %v2180 = vsel %vm236, %v2007, 0
        %v2182 = vsel %vm240, %v2177, 0
        %v2184 = vsel %vm240, %v2178, 0
        %v2186 = vsel %vm240, %v2176, 0
        %2188 = vmatprep.subr.mxu0 %v2184
        %2189 = vmatpush1.msra.mxu0 %v2182
        %2190 = vmatprep.subr.mxu0 0.0
        %2191 = vmatpush1.msra.mxu0 0.0
        %2192 = vmatprep.subr.mxu0 0.0
        %2193 = vmatpush1.msra.mxu0 0.0
        %2194 = vmatprep.subr.mxu0 0.0
        %2195 = vmatpush1.msra.mxu0 0.0
        %2196 = vmatprep.subr.mxu0 0.0
        %2197 = vmatpush1.msra.mxu0 0.0
        %2198 = vmatprep.subr.mxu0 0.0
        %2199 = vmatpush1.msra.mxu0 0.0
        %2200 = vmatprep.subr.mxu0 0.0
        %2201 = vmatpush1.msra.mxu0 0.0
        %2202 = vmatprep.subr.mxu0 0.0
        %2203 = vmatpush1.msra.mxu0 0.0
        %2204 = vmatprep.subr.mxu0 0.0
        %2205 = vmatpush1.msra.mxu0 0.0
        %2206 = vmatprep.subr.mxu0 0.0
        %2207 = vmatpush1.msra.mxu0 0.0
        %2208 = vmatprep.subr.mxu0 0.0
        %2209 = vmatpush1.msra.mxu0 0.0
        %2210 = vmatprep.subr.mxu0 0.0
        %2211 = vmatpush1.msra.mxu0 0.0
        %2212 = vmatprep.subr.mxu0 0.0
        %2213 = vmatpush1.msra.mxu0 0.0
        %2214 = vmatprep.subr.mxu0 0.0
        %2215 = vmatpush1.msra.mxu0 0.0
        %2216 = vmatprep.subr.mxu0 0.0
        %2217 = vmatpush1.msra.mxu0 0.0
        %2218 = vmatprep.subr.mxu0 0.0
        %2219 = vmatpush1.msra.mxu0 0.0
        %2220 = vmatprep.subr.mxu0 0.0
        %2221 = vmatpush1.msra.mxu0 0.0
        %2222 = vmatprep.subr.mxu0 0.0
        %2223 = vmatpush1.msra.mxu0 0.0
        %2224 = vmatprep.subr.mxu0 0.0
        %2225 = vmatpush1.msra.mxu0 0.0
        %2226 = vmatprep.subr.mxu0 0.0
        %2227 = vmatpush1.msra.mxu0 0.0
        %2228 = vmatprep.subr.mxu0 0.0
        %2229 = vmatpush1.msra.mxu0 0.0
        %2230 = vmatprep.subr.mxu0 0.0
        %2231 = vmatpush1.msra.mxu0 0.0
        %2232 = vmatprep.subr.mxu0 0.0
        %2233 = vmatpush1.msra.mxu0 0.0
        %2234 = vmatprep.subr.mxu0 0.0
        %2235 = vmatpush1.msra.mxu0 0.0
        %2236 = vmatprep.subr.mxu0 0.0
        %2237 = vmatpush1.msra.mxu0 0.0
        %2238 = vmatprep.subr.mxu0 0.0
        %2239 = vmatpush1.msra.mxu0 0.0
        %2240 = vmatprep.subr.mxu0 0.0
        %2241 = vmatpush1.msra.mxu0 0.0
        %2242 = vmatprep.subr.mxu0 0.0
        %2243 = vmatpush1.msra.mxu0 0.0
        %2244 = vmatprep.subr.mxu0 0.0
        %2245 = vmatpush1.msra.mxu0 0.0
        %2246 = vmatprep.subr.mxu0 0.0
        %2247 = vmatpush1.msra.mxu0 0.0
        %2248 = vmatprep.subr.mxu0 0.0
        %2249 = vmatpush1.msra.mxu0 0.0
        %2250 = vmatprep.subr.mxu0 0.0
        %2251 = vmatpush1.msra.mxu0 0.0
        %2252 = vmatprep.mubr.f32.mxu0 0.0
        %2253 = vmatmul.mubr.f32.gmra.mrb[0].mxu0 %v2180
        %v2254 = vpop.f32.mrb[0].mxu0
        %v2255 = vadd.f32 %v2097, %v2254
        %v2256 = vpop.f32.mrb[0].mxu0
        %v2257 = vadd.f32 %v2099, %v2256
        %2258 = vdwg.mxu0
        %2259 = vmatprep.subr.mxu0 0.0
        %2260 = vmatpush1.msra.mxu0 %v2186
        %2261 = vmatprep.subr.mxu0 0.0
        %2262 = vmatpush1.msra.mxu0 0.0
        %2263 = vmatprep.subr.mxu0 0.0
        %2264 = vmatpush1.msra.mxu0 0.0
        %2265 = vmatprep.subr.mxu0 0.0
        %2266 = vmatpush1.msra.mxu0 0.0
        %2267 = vmatprep.subr.mxu0 0.0
        %2268 = vmatpush1.msra.mxu0 0.0
        %2269 = vmatprep.subr.mxu0 0.0
        %2270 = vmatpush1.msra.mxu0 0.0
        %2271 = vmatprep.subr.mxu0 0.0
        %2272 = vmatpush1.msra.mxu0 0.0
        %2273 = vmatprep.subr.mxu0 0.0
        %2274 = vmatpush1.msra.mxu0 0.0
        %2275 = vmatprep.subr.mxu0 0.0
        %2276 = vmatpush1.msra.mxu0 0.0
        %2277 = vmatprep.subr.mxu0 0.0
        %2278 = vmatpush1.msra.mxu0 0.0
        %2279 = vmatprep.subr.mxu0 0.0
        %2280 = vmatpush1.msra.mxu0 0.0
        %2281 = vmatprep.subr.mxu0 0.0
        %2282 = vmatpush1.msra.mxu0 0.0
        %2283 = vmatprep.subr.mxu0 0.0
        %2284 = vmatpush1.msra.mxu0 0.0
        %2285 = vmatprep.subr.mxu0 0.0
        %2286 = vmatpush1.msra.mxu0 0.0
        %2287 = vmatprep.subr.mxu0 0.0
        %2288 = vmatpush1.msra.mxu0 0.0
        %2289 = vmatprep.subr.mxu0 0.0
        %2290 = vmatpush1.msra.mxu0 0.0
        %2291 = vmatprep.subr.mxu0 0.0
        %2292 = vmatpush1.msra.mxu0 0.0
        %2293 = vmatprep.subr.mxu0 0.0
        %2294 = vmatpush1.msra.mxu0 0.0
        %2295 = vmatprep.subr.mxu0 0.0
        %2296 = vmatpush1.msra.mxu0 0.0
        %2297 = vmatprep.subr.mxu0 0.0
        %2298 = vmatpush1.msra.mxu0 0.0
        %2299 = vmatprep.subr.mxu0 0.0
        %2300 = vmatpush1.msra.mxu0 0.0
        %2301 = vmatprep.subr.mxu0 0.0
        %2302 = vmatpush1.msra.mxu0 0.0
        %2303 = vmatprep.subr.mxu0 0.0
        %2304 = vmatpush1.msra.mxu0 0.0
        %2305 = vmatprep.subr.mxu0 0.0
        %2306 = vmatpush1.msra.mxu0 0.0
        %2307 = vmatprep.subr.mxu0 0.0
        %2308 = vmatpush1.msra.mxu0 0.0
        %2309 = vmatprep.subr.mxu0 0.0
        %2310 = vmatpush1.msra.mxu0 0.0
        %2311 = vmatprep.subr.mxu0 0.0
        %2312 = vmatpush1.msra.mxu0 0.0
        %2313 = vmatprep.subr.mxu0 0.0
        %2314 = vmatpush1.msra.mxu0 0.0
        %2315 = vmatprep.subr.mxu0 0.0
        %2316 = vmatpush1.msra.mxu0 0.0
        %2317 = vmatprep.subr.mxu0 0.0
        %2318 = vmatpush1.msra.mxu0 0.0
        %2319 = vmatprep.subr.mxu0 0.0
        %2320 = vmatpush1.msra.mxu0 0.0
        %2321 = vmatprep.subr.mxu0 0.0
        %2322 = vmatpush1.msra.mxu0 0.0
        %2323 = vmatprep.mubr.f32.mxu0 0.0
        %2324 = vmatmul.mubr.f32.gmra.mrb[0].mxu0 %v2180
        %v2325 = vpop.f32.mrb[0].mxu0
        %v2326 = vadd.f32 %v2168, %v2325
        %v2327 = vpop.f32.mrb[0].mxu0
        %2328 = vdwg.mxu0
        %s2329 = scalar_lea.vmem %s2, 8
        %v2330 = vld [vmem:[%s2329] sm:$0xf]
        %2331 = vrot.lane.b32.xlu0 %v2000, 77
        %v2332 = vpop.permute.xlu0 %2331
        %2333 = vrot.lane.b32.xlu0 %v2005, 77
        %v2334 = vpop.permute.xlu0 %2333
        %2335 = vrot.lane.b32.xlu0 %v2006, 77
        %v2336 = vpop.permute.xlu0 %2335
        %v2337 = vsel %vm555, %v2332, %v2334
        %v2338 = vsel %vm555, %v2334, %v2336
        %v2340 = vsel %vm236, %v2330, 0
        %v2342 = vsel %vm240, %v2337, 0
        %v2344 = vsel %vm240, %v2338, 0
        %v2346 = vsel %vm240, %v2336, 0
        %2348 = vmatprep.subr.mxu0 %v2344
        %2349 = vmatpush1.msra.mxu0 %v2342
        %2350 = vmatprep.subr.mxu0 0.0
        %2351 = vmatpush1.msra.mxu0 0.0
        %2352 = vmatprep.subr.mxu0 0.0
        %2353 = vmatpush1.msra.mxu0 0.0
        %2354 = vmatprep.subr.mxu0 0.0
        %2355 = vmatpush1.msra.mxu0 0.0
        %2356 = vmatprep.subr.mxu0 0.0
        %2357 = vmatpush1.msra.mxu0 0.0
        %2358 = vmatprep.subr.mxu0 0.0
        %2359 = vmatpush1.msra.mxu0 0.0
        %2360 = vmatprep.subr.mxu0 0.0
        %2361 = vmatpush1.msra.mxu0 0.0
        %2362 = vmatprep.subr.mxu0 0.0
        %2363 = vmatpush1.msra.mxu0 0.0
        %2364 = vmatprep.subr.mxu0 0.0
        %2365 = vmatpush1.msra.mxu0 0.0
        %2366 = vmatprep.subr.mxu0 0.0
        %2367 = vmatpush1.msra.mxu0 0.0
        %2368 = vmatprep.subr.mxu0 0.0
        %2369 = vmatpush1.msra.mxu0 0.0
        %2370 = vmatprep.subr.mxu0 0.0
        %2371 = vmatpush1.msra.mxu0 0.0
        %2372 = vmatprep.subr.mxu0 0.0
        %2373 = vmatpush1.msra.mxu0 0.0
        %2374 = vmatprep.subr.mxu0 0.0
        %2375 = vmatpush1.msra.mxu0 0.0
        %2376 = vmatprep.subr.mxu0 0.0
        %2377 = vmatpush1.msra.mxu0 0.0
        %2378 = vmatprep.subr.mxu0 0.0
        %2379 = vmatpush1.msra.mxu0 0.0
        %2380 = vmatprep.subr.mxu0 0.0
        %2381 = vmatpush1.msra.mxu0 0.0
        %2382 = vmatprep.subr.mxu0 0.0
        %2383 = vmatpush1.msra.mxu0 0.0
        %2384 = vmatprep.subr.mxu0 0.0
        %2385 = vmatpush1.msra.mxu0 0.0
        %2386 = vmatprep.subr.mxu0 0.0
        %2387 = vmatpush1.msra.mxu0 0.0
        %2388 = vmatprep.subr.mxu0 0.0
        %2389 = vmatpush1.msra.mxu0 0.0
        %2390 = vmatprep.subr.mxu0 0.0
        %2391 = vmatpush1.msra.mxu0 0.0
        %2392 = vmatprep.subr.mxu0 0.0
        %2393 = vmatpush1.msra.mxu0 0.0
        %2394 = vmatprep.subr.mxu0 0.0
        %2395 = vmatpush1.msra.mxu0 0.0
        %2396 = vmatprep.subr.mxu0 0.0
        %2397 = vmatpush1.msra.mxu0 0.0
        %2398 = vmatprep.subr.mxu0 0.0
        %2399 = vmatpush1.msra.mxu0 0.0
        %2400 = vmatprep.subr.mxu0 0.0
        %2401 = vmatpush1.msra.mxu0 0.0
        %2402 = vmatprep.subr.mxu0 0.0
        %2403 = vmatpush1.msra.mxu0 0.0
        %2404 = vmatprep.subr.mxu0 0.0
        %2405 = vmatpush1.msra.mxu0 0.0
        %2406 = vmatprep.subr.mxu0 0.0
        %2407 = vmatpush1.msra.mxu0 0.0
        %2408 = vmatprep.subr.mxu0 0.0
        %2409 = vmatpush1.msra.mxu0 0.0
        %2410 = vmatprep.subr.mxu0 0.0
        %2411 = vmatpush1.msra.mxu0 0.0
        %2412 = vmatprep.mubr.f32.mxu0 0.0
        %2413 = vmatmul.mubr.f32.gmra.mrb[0].mxu0 %v2340
        %v2414 = vpop.f32.mrb[0].mxu0
        %v2415 = vadd.f32 0.0, %v2414
        %v2416 = vpop.f32.mrb[0].mxu0
        %v2417 = vadd.f32 0.0, %v2416
        %2418 = vdwg.mxu0
        %2419 = vmatprep.subr.mxu0 0.0
        %2420 = vmatpush1.msra.mxu0 %v2346
        %2421 = vmatprep.subr.mxu0 0.0
        %2422 = vmatpush1.msra.mxu0 0.0
        %2423 = vmatprep.subr.mxu0 0.0
        %2424 = vmatpush1.msra.mxu0 0.0
        %2425 = vmatprep.subr.mxu0 0.0
        %2426 = vmatpush1.msra.mxu0 0.0
        %2427 = vmatprep.subr.mxu0 0.0
        %2428 = vmatpush1.msra.mxu0 0.0
        %2429 = vmatprep.subr.mxu0 0.0
        %2430 = vmatpush1.msra.mxu0 0.0
        %2431 = vmatprep.subr.mxu0 0.0
        %2432 = vmatpush1.msra.mxu0 0.0
        %2433 = vmatprep.subr.mxu0 0.0
        %2434 = vmatpush1.msra.mxu0 0.0
        %2435 = vmatprep.subr.mxu0 0.0
        %2436 = vmatpush1.msra.mxu0 0.0
        %2437 = vmatprep.subr.mxu0 0.0
        %2438 = vmatpush1.msra.mxu0 0.0
        %2439 = vmatprep.subr.mxu0 0.0
        %2440 = vmatpush1.msra.mxu0 0.0
        %2441 = vmatprep.subr.mxu0 0.0
        %2442 = vmatpush1.msra.mxu0 0.0
        %2443 = vmatprep.subr.mxu0 0.0
        %2444 = vmatpush1.msra.mxu0 0.0
        %2445 = vmatprep.subr.mxu0 0.0
        %2446 = vmatpush1.msra.mxu0 0.0
        %2447 = vmatprep.subr.mxu0 0.0
        %2448 = vmatpush1.msra.mxu0 0.0
        %2449 = vmatprep.subr.mxu0 0.0
        %2450 = vmatpush1.msra.mxu0 0.0
        %2451 = vmatprep.subr.mxu0 0.0
        %2452 = vmatpush1.msra.mxu0 0.0
        %2453 = vmatprep.subr.mxu0 0.0
        %2454 = vmatpush1.msra.mxu0 0.0
        %2455 = vmatprep.subr.mxu0 0.0
        %2456 = vmatpush1.msra.mxu0 0.0
        %2457 = vmatprep.subr.mxu0 0.0
        %2458 = vmatpush1.msra.mxu0 0.0
        %2459 = vmatprep.subr.mxu0 0.0
        %2460 = vmatpush1.msra.mxu0 0.0
        %2461 = vmatprep.subr.mxu0 0.0
        %2462 = vmatpush1.msra.mxu0 0.0
        %2463 = vmatprep.subr.mxu0 0.0
        %2464 = vmatpush1.msra.mxu0 0.0
        %2465 = vmatprep.subr.mxu0 0.0
        %2466 = vmatpush1.msra.mxu0 0.0
        %2467 = vmatprep.subr.mxu0 0.0
        %2468 = vmatpush1.msra.mxu0 0.0
        %2469 = vmatprep.subr.mxu0 0.0
        %2470 = vmatpush1.msra.mxu0 0.0
        %2471 = vmatprep.subr.mxu0 0.0
        %2472 = vmatpush1.msra.mxu0 0.0
        %2473 = vmatprep.subr.mxu0 0.0
        %2474 = vmatpush1.msra.mxu0 0.0
        %2475 = vmatprep.subr.mxu0 0.0
        %2476 = vmatpush1.msra.mxu0 0.0
        %2477 = vmatprep.subr.mxu0 0.0
        %2478 = vmatpush1.msra.mxu0 0.0
        %2479 = vmatprep.subr.mxu0 0.0
        %2480 = vmatpush1.msra.mxu0 0.0
        %2481 = vmatprep.subr.mxu0 0.0
        %2482 = vmatpush1.msra.mxu0 0.0
        %2483 = vmatprep.mubr.f32.mxu0 0.0
        %2484 = vmatmul.mubr.f32.gmra.mrb[0].mxu0 %v2340
        %v2485 = vpop.f32.mrb[0].mxu0
        %v2486 = vadd.f32 0.0, %v2485
        %v2487 = vpop.f32.mrb[0].mxu0
        %2488 = vdwg.mxu0
        %v2489 = vadd.f32 %v2255, %v2415
        %v2490 = vadd.f32 %v2257, %v2417
        %v2491 = vadd.f32 %v2326, %v2486
        %s2492 = scalar_lea.vmem %s2, 12
        %v2493 = vld [vmem:[%s2492] sm:$0xf]
        %2495 = vrot.lane.b32.xlu0 %v2000, 61
        %v2496 = vpop.permute.xlu0 %2495
        %2497 = vrot.lane.b32.xlu0 %v2005, 61
        %v2498 = vpop.permute.xlu0 %2497
        %2499 = vrot.lane.b32.xlu0 %v2006, 61
        %v2500 = vpop.permute.xlu0 %2499
        %2501 = vrot.lane.b32.xlu0 %v2004, 61
        %v2502 = vpop.permute.xlu0 %2501
        %v2503 = vsel %vm722, %v2496, %v2498
        %v2504 = vsel %vm722, %v2498, %v2500
        %v2505 = vsel %vm722, %v2500, %v2502
        %v2507 = vsel %vm236, %v2493, 0
        %v2509 = vsel %vm240, %v2503, 0
        %v2511 = vsel %vm240, %v2504, 0
        %v2513 = vsel %vm240, %v2505, 0
        %2515 = vmatprep.subr.mxu0 %v2511
        %2516 = vmatpush1.msra.mxu0 %v2509
        %2517 = vmatprep.subr.mxu0 0.0
        %2518 = vmatpush1.msra.mxu0 0.0
        %2519 = vmatprep.subr.mxu0 0.0
        %2520 = vmatpush1.msra.mxu0 0.0
        %2521 = vmatprep.subr.mxu0 0.0
        %2522 = vmatpush1.msra.mxu0 0.0
        %2523 = vmatprep.subr.mxu0 0.0
        %2524 = vmatpush1.msra.mxu0 0.0
        %2525 = vmatprep.subr.mxu0 0.0
        %2526 = vmatpush1.msra.mxu0 0.0
        %2527 = vmatprep.subr.mxu0 0.0
        %2528 = vmatpush1.msra.mxu0 0.0
        %2529 = vmatprep.subr.mxu0 0.0
        %2530 = vmatpush1.msra.mxu0 0.0
        %2531 = vmatprep.subr.mxu0 0.0
        %2532 = vmatpush1.msra.mxu0 0.0
        %2533 = vmatprep.subr.mxu0 0.0
        %2534 = vmatpush1.msra.mxu0 0.0
        %2535 = vmatprep.subr.mxu0 0.0
        %2536 = vmatpush1.msra.mxu0 0.0
        %2537 = vmatprep.subr.mxu0 0.0
        %2538 = vmatpush1.msra.mxu0 0.0
        %2539 = vmatprep.subr.mxu0 0.0
        %2540 = vmatpush1.msra.mxu0 0.0
        %2541 = vmatprep.subr.mxu0 0.0
        %2542 = vmatpush1.msra.mxu0 0.0
        %2543 = vmatprep.subr.mxu0 0.0
        %2544 = vmatpush1.msra.mxu0 0.0
        %2545 = vmatprep.subr.mxu0 0.0
        %2546 = vmatpush1.msra.mxu0 0.0
        %2547 = vmatprep.subr.mxu0 0.0
        %2548 = vmatpush1.msra.mxu0 0.0
        %2549 = vmatprep.subr.mxu0 0.0
        %2550 = vmatpush1.msra.mxu0 0.0
        %2551 = vmatprep.subr.mxu0 0.0
        %2552 = vmatpush1.msra.mxu0 0.0
        %2553 = vmatprep.subr.mxu0 0.0
        %2554 = vmatpush1.msra.mxu0 0.0
        %2555 = vmatprep.subr.mxu0 0.0
        %2556 = vmatpush1.msra.mxu0 0.0
        %2557 = vmatprep.subr.mxu0 0.0
        %2558 = vmatpush1.msra.mxu0 0.0
        %2559 = vmatprep.subr.mxu0 0.0
        %2560 = vmatpush1.msra.mxu0 0.0
        %2561 = vmatprep.subr.mxu0 0.0
        %2562 = vmatpush1.msra.mxu0 0.0
        %2563 = vmatprep.subr.mxu0 0.0
        %2564 = vmatpush1.msra.mxu0 0.0
        %2565 = vmatprep.subr.mxu0 0.0
        %2566 = vmatpush1.msra.mxu0 0.0
        %2567 = vmatprep.subr.mxu0 0.0
        %2568 = vmatpush1.msra.mxu0 0.0
        %2569 = vmatprep.subr.mxu0 0.0
        %2570 = vmatpush1.msra.mxu0 0.0
        %2571 = vmatprep.subr.mxu0 0.0
        %2572 = vmatpush1.msra.mxu0 0.0
        %2573 = vmatprep.subr.mxu0 0.0
        %2574 = vmatpush1.msra.mxu0 0.0
        %2575 = vmatprep.subr.mxu0 0.0
        %2576 = vmatpush1.msra.mxu0 0.0
        %2577 = vmatprep.subr.mxu0 0.0
        %2578 = vmatpush1.msra.mxu0 0.0
        %2579 = vmatprep.mubr.f32.mxu0 0.0
        %2580 = vmatmul.mubr.f32.gmra.mrb[0].mxu0 %v2507
        %v2581 = vpop.f32.mrb[0].mxu0
        %v2582 = vadd.f32 0.0, %v2581
        %v2583 = vpop.f32.mrb[0].mxu0
        %v2584 = vadd.f32 0.0, %v2583
        %2585 = vdwg.mxu0
        %2586 = vmatprep.subr.mxu0 0.0
        %2587 = vmatpush1.msra.mxu0 %v2513
        %2588 = vmatprep.subr.mxu0 0.0
        %2589 = vmatpush1.msra.mxu0 0.0
        %2590 = vmatprep.subr.mxu0 0.0
        %2591 = vmatpush1.msra.mxu0 0.0
        %2592 = vmatprep.subr.mxu0 0.0
        %2593 = vmatpush1.msra.mxu0 0.0
        %2594 = vmatprep.subr.mxu0 0.0
        %2595 = vmatpush1.msra.mxu0 0.0
        %2596 = vmatprep.subr.mxu0 0.0
        %2597 = vmatpush1.msra.mxu0 0.0
        %2598 = vmatprep.subr.mxu0 0.0
        %2599 = vmatpush1.msra.mxu0 0.0
        %2600 = vmatprep.subr.mxu0 0.0
        %2601 = vmatpush1.msra.mxu0 0.0
        %2602 = vmatprep.subr.mxu0 0.0
        %2603 = vmatpush1.msra.mxu0 0.0
        %2604 = vmatprep.subr.mxu0 0.0
        %2605 = vmatpush1.msra.mxu0 0.0
        %2606 = vmatprep.subr.mxu0 0.0
        %2607 = vmatpush1.msra.mxu0 0.0
        %2608 = vmatprep.subr.mxu0 0.0
        %2609 = vmatpush1.msra.mxu0 0.0
        %2610 = vmatprep.subr.mxu0 0.0
        %2611 = vmatpush1.msra.mxu0 0.0
        %2612 = vmatprep.subr.mxu0 0.0
        %2613 = vmatpush1.msra.mxu0 0.0
        %2614 = vmatprep.subr.mxu0 0.0
        %2615 = vmatpush1.msra.mxu0 0.0
        %2616 = vmatprep.subr.mxu0 0.0
        %2617 = vmatpush1.msra.mxu0 0.0
        %2618 = vmatprep.subr.mxu0 0.0
        %2619 = vmatpush1.msra.mxu0 0.0
        %2620 = vmatprep.subr.mxu0 0.0
        %2621 = vmatpush1.msra.mxu0 0.0
        %2622 = vmatprep.subr.mxu0 0.0
        %2623 = vmatpush1.msra.mxu0 0.0
        %2624 = vmatprep.subr.mxu0 0.0
        %2625 = vmatpush1.msra.mxu0 0.0
        %2626 = vmatprep.subr.mxu0 0.0
        %2627 = vmatpush1.msra.mxu0 0.0
        %2628 = vmatprep.subr.mxu0 0.0
        %2629 = vmatpush1.msra.mxu0 0.0
        %2630 = vmatprep.subr.mxu0 0.0
        %2631 = vmatpush1.msra.mxu0 0.0
        %2632 = vmatprep.subr.mxu0 0.0
        %2633 = vmatpush1.msra.mxu0 0.0
        %2634 = vmatprep.subr.mxu0 0.0
        %2635 = vmatpush1.msra.mxu0 0.0
        %2636 = vmatprep.subr.mxu0 0.0
        %2637 = vmatpush1.msra.mxu0 0.0
        %2638 = vmatprep.subr.mxu0 0.0
        %2639 = vmatpush1.msra.mxu0 0.0
        %2640 = vmatprep.subr.mxu0 0.0
        %2641 = vmatpush1.msra.mxu0 0.0
        %2642 = vmatprep.subr.mxu0 0.0
        %2643 = vmatpush1.msra.mxu0 0.0
        %2644 = vmatprep.subr.mxu0 0.0
        %2645 = vmatpush1.msra.mxu0 0.0
        %2646 = vmatprep.subr.mxu0 0.0
        %2647 = vmatpush1.msra.mxu0 0.0
        %2648 = vmatprep.subr.mxu0 0.0
        %2649 = vmatpush1.msra.mxu0 0.0
        %2650 = vmatprep.mubr.f32.mxu0 0.0
        %2651 = vmatmul.mubr.f32.gmra.mrb[0].mxu0 %v2507
        %v2652 = vpop.f32.mrb[0].mxu0
        %v2653 = vadd.f32 0.0, %v2652
        %v2654 = vpop.f32.mrb[0].mxu0
        %2655 = vdwg.mxu0
        %v2656 = vadd.f32 %v2489, %v2582
        %v2657 = vadd.f32 %v2490, %v2584
        %v2658 = vadd.f32 %v2491, %v2653
        %s2659 = scalar_lea.vmem %s2, 16
        %v2660 = vld [vmem:[%s2659] sm:$0xf]
        %v2662 = vsel %vm236, %v2660, 0
        %v2665 = vsel %vm240, %v1995, 0
        %v2668 = vsel %vm240, %v1996, 0
        %v2671 = vsel %vm240, %v1997, 0
        %2673 = vmatprep.subr.mxu0 %v2668
        %2674 = vmatpush1.msra.mxu0 %v2665
        %2675 = vmatprep.subr.mxu0 0.0
        %2676 = vmatpush1.msra.mxu0 0.0
        %2677 = vmatprep.subr.mxu0 0.0
        %2678 = vmatpush1.msra.mxu0 0.0
        %2679 = vmatprep.subr.mxu0 0.0
        %2680 = vmatpush1.msra.mxu0 0.0
        %2681 = vmatprep.subr.mxu0 0.0
        %2682 = vmatpush1.msra.mxu0 0.0
        %2683 = vmatprep.subr.mxu0 0.0
        %2684 = vmatpush1.msra.mxu0 0.0
        %2685 = vmatprep.subr.mxu0 0.0
        %2686 = vmatpush1.msra.mxu0 0.0
        %2687 = vmatprep.subr.mxu0 0.0
        %2688 = vmatpush1.msra.mxu0 0.0
        %2689 = vmatprep.subr.mxu0 0.0
        %2690 = vmatpush1.msra.mxu0 0.0
        %2691 = vmatprep.subr.mxu0 0.0
        %2692 = vmatpush1.msra.mxu0 0.0
        %2693 = vmatprep.subr.mxu0 0.0
        %2694 = vmatpush1.msra.mxu0 0.0
        %2695 = vmatprep.subr.mxu0 0.0
        %2696 = vmatpush1.msra.mxu0 0.0
        %2697 = vmatprep.subr.mxu0 0.0
        %2698 = vmatpush1.msra.mxu0 0.0
        %2699 = vmatprep.subr.mxu0 0.0
        %2700 = vmatpush1.msra.mxu0 0.0
        %2701 = vmatprep.subr.mxu0 0.0
        %2702 = vmatpush1.msra.mxu0 0.0
        %2703 = vmatprep.subr.mxu0 0.0
        %2704 = vmatpush1.msra.mxu0 0.0
        %2705 = vmatprep.subr.mxu0 0.0
        %2706 = vmatpush1.msra.mxu0 0.0
        %2707 = vmatprep.subr.mxu0 0.0
        %2708 = vmatpush1.msra.mxu0 0.0
        %2709 = vmatprep.subr.mxu0 0.0
        %2710 = vmatpush1.msra.mxu0 0.0
        %2711 = vmatprep.subr.mxu0 0.0
        %2712 = vmatpush1.msra.mxu0 0.0
        %2713 = vmatprep.subr.mxu0 0.0
        %2714 = vmatpush1.msra.mxu0 0.0
        %2715 = vmatprep.subr.mxu0 0.0
        %2716 = vmatpush1.msra.mxu0 0.0
        %2717 = vmatprep.subr.mxu0 0.0
        %2718 = vmatpush1.msra.mxu0 0.0
        %2719 = vmatprep.subr.mxu0 0.0
        %2720 = vmatpush1.msra.mxu0 0.0
        %2721 = vmatprep.subr.mxu0 0.0
        %2722 = vmatpush1.msra.mxu0 0.0
        %2723 = vmatprep.subr.mxu0 0.0
        %2724 = vmatpush1.msra.mxu0 0.0
        %2725 = vmatprep.subr.mxu0 0.0
        %2726 = vmatpush1.msra.mxu0 0.0
        %2727 = vmatprep.subr.mxu0 0.0
        %2728 = vmatpush1.msra.mxu0 0.0
        %2729 = vmatprep.subr.mxu0 0.0
        %2730 = vmatpush1.msra.mxu0 0.0
        %2731 = vmatprep.subr.mxu0 0.0
        %2732 = vmatpush1.msra.mxu0 0.0
        %2733 = vmatprep.subr.mxu0 0.0
        %2734 = vmatpush1.msra.mxu0 0.0
        %2735 = vmatprep.subr.mxu0 0.0
        %2736 = vmatpush1.msra.mxu0 0.0
        %2737 = vmatprep.mubr.f32.mxu0 0.0
        %2738 = vmatmul.mubr.f32.gmra.mrb[0].mxu0 %v2662
        %v2739 = vpop.f32.mrb[0].mxu0
        %v2740 = vadd.f32 0.0, %v2739
        %v2741 = vpop.f32.mrb[0].mxu0
        %v2742 = vadd.f32 0.0, %v2741
        %2743 = vdwg.mxu0
        %2744 = vmatprep.subr.mxu0 0.0
        %2745 = vmatpush1.msra.mxu0 %v2671
        %2746 = vmatprep.subr.mxu0 0.0
        %2747 = vmatpush1.msra.mxu0 0.0
        %2748 = vmatprep.subr.mxu0 0.0
        %2749 = vmatpush1.msra.mxu0 0.0
        %2750 = vmatprep.subr.mxu0 0.0
        %2751 = vmatpush1.msra.mxu0 0.0
        %2752 = vmatprep.subr.mxu0 0.0
        %2753 = vmatpush1.msra.mxu0 0.0
        %2754 = vmatprep.subr.mxu0 0.0
        %2755 = vmatpush1.msra.mxu0 0.0
        %2756 = vmatprep.subr.mxu0 0.0
        %2757 = vmatpush1.msra.mxu0 0.0
        %2758 = vmatprep.subr.mxu0 0.0
        %2759 = vmatpush1.msra.mxu0 0.0
        %2760 = vmatprep.subr.mxu0 0.0
        %2761 = vmatpush1.msra.mxu0 0.0
        %2762 = vmatprep.subr.mxu0 0.0
        %2763 = vmatpush1.msra.mxu0 0.0
        %2764 = vmatprep.subr.mxu0 0.0
        %2765 = vmatpush1.msra.mxu0 0.0
        %2766 = vmatprep.subr.mxu0 0.0
        %2767 = vmatpush1.msra.mxu0 0.0
        %2768 = vmatprep.subr.mxu0 0.0
        %2769 = vmatpush1.msra.mxu0 0.0
        %2770 = vmatprep.subr.mxu0 0.0
        %2771 = vmatpush1.msra.mxu0 0.0
        %2772 = vmatprep.subr.mxu0 0.0
        %2773 = vmatpush1.msra.mxu0 0.0
        %2774 = vmatprep.subr.mxu0 0.0
        %2775 = vmatpush1.msra.mxu0 0.0
        %2776 = vmatprep.subr.mxu0 0.0
        %2777 = vmatpush1.msra.mxu0 0.0
        %2778 = vmatprep.subr.mxu0 0.0
        %2779 = vmatpush1.msra.mxu0 0.0
        %2780 = vmatprep.subr.mxu0 0.0
        %2781 = vmatpush1.msra.mxu0 0.0
        %2782 = vmatprep.subr.mxu0 0.0
        %2783 = vmatpush1.msra.mxu0 0.0
        %2784 = vmatprep.subr.mxu0 0.0
        %2785 = vmatpush1.msra.mxu0 0.0
        %2786 = vmatprep.subr.mxu0 0.0
        %2787 = vmatpush1.msra.mxu0 0.0
        %2788 = vmatprep.subr.mxu0 0.0
        %2789 = vmatpush1.msra.mxu0 0.0
        %2790 = vmatprep.subr.mxu0 0.0
        %2791 = vmatpush1.msra.mxu0 0.0
        %2792 = vmatprep.subr.mxu0 0.0
        %2793 = vmatpush1.msra.mxu0 0.0
        %2794 = vmatprep.subr.mxu0 0.0
        %2795 = vmatpush1.msra.mxu0 0.0
        %2796 = vmatprep.subr.mxu0 0.0
        %2797 = vmatpush1.msra.mxu0 0.0
        %2798 = vmatprep.subr.mxu0 0.0
        %2799 = vmatpush1.msra.mxu0 0.0
        %2800 = vmatprep.subr.mxu0 0.0
        %2801 = vmatpush1.msra.mxu0 0.0
        %2802 = vmatprep.subr.mxu0 0.0
        %2803 = vmatpush1.msra.mxu0 0.0
        %2804 = vmatprep.subr.mxu0 0.0
        %2805 = vmatpush1.msra.mxu0 0.0
        %2806 = vmatprep.subr.mxu0 0.0
        %2807 = vmatpush1.msra.mxu0 0.0
        %2808 = vmatprep.mubr.f32.mxu0 0.0
        %2809 = vmatmul.mubr.f32.gmra.mrb[0].mxu0 %v2662
        %v2810 = vpop.f32.mrb[0].mxu0
        %v2811 = vadd.f32 0.0, %v2810
        %v2812 = vpop.f32.mrb[0].mxu0
        %2813 = vdwg.mxu0
        %v2814 = vadd.f32 %v2656, %v2740
        %v2815 = vadd.f32 %v2657, %v2742
        %v2816 = vadd.f32 %v2658, %v2811
        %s2817 = scalar_lea.vmem %s2, 20
        %v2818 = vld [vmem:[%s2817] sm:$0xf]
        %2819 = vrot.lane.b32.xlu0 %v1995, 127
        %v2820 = vpop.permute.xlu0 %2819
        %2821 = vrot.lane.b32.xlu0 %v1996, 127
        %v2822 = vpop.permute.xlu0 %2821
        %2823 = vrot.lane.b32.xlu0 %v2000, 127
        %v2824 = vpop.permute.xlu0 %2823
        %v2825 = vsel %vm1042, %v2820, %v2822
        %v2826 = vsel %vm1042, %v2822, %v2824
        %v2828 = vsel %vm236, %v2818, 0
        %v2830 = vsel %vm240, %v2825, 0
        %v2832 = vsel %vm240, %v2826, 0
        %v2834 = vsel %vm240, %v2824, 0
        %2836 = vmatprep.subr.mxu0 %v2832
        %2837 = vmatpush1.msra.mxu0 %v2830
        %2838 = vmatprep.subr.mxu0 0.0
        %2839 = vmatpush1.msra.mxu0 0.0
        %2840 = vmatprep.subr.mxu0 0.0
        %2841 = vmatpush1.msra.mxu0 0.0
        %2842 = vmatprep.subr.mxu0 0.0
        %2843 = vmatpush1.msra.mxu0 0.0
        %2844 = vmatprep.subr.mxu0 0.0
        %2845 = vmatpush1.msra.mxu0 0.0
        %2846 = vmatprep.subr.mxu0 0.0
        %2847 = vmatpush1.msra.mxu0 0.0
        %2848 = vmatprep.subr.mxu0 0.0
        %2849 = vmatpush1.msra.mxu0 0.0
        %2850 = vmatprep.subr.mxu0 0.0
        %2851 = vmatpush1.msra.mxu0 0.0
        %2852 = vmatprep.subr.mxu0 0.0
        %2853 = vmatpush1.msra.mxu0 0.0
        %2854 = vmatprep.subr.mxu0 0.0
        %2855 = vmatpush1.msra.mxu0 0.0
        %2856 = vmatprep.subr.mxu0 0.0
        %2857 = vmatpush1.msra.mxu0 0.0
        %2858 = vmatprep.subr.mxu0 0.0
        %2859 = vmatpush1.msra.mxu0 0.0
        %2860 = vmatprep.subr.mxu0 0.0
        %2861 = vmatpush1.msra.mxu0 0.0
        %2862 = vmatprep.subr.mxu0 0.0
        %2863 = vmatpush1.msra.mxu0 0.0
        %2864 = vmatprep.subr.mxu0 0.0
        %2865 = vmatpush1.msra.mxu0 0.0
        %2866 = vmatprep.subr.mxu0 0.0
        %2867 = vmatpush1.msra.mxu0 0.0
        %2868 = vmatprep.subr.mxu0 0.0
        %2869 = vmatpush1.msra.mxu0 0.0
        %2870 = vmatprep.subr.mxu0 0.0
        %2871 = vmatpush1.msra.mxu0 0.0
        %2872 = vmatprep.subr.mxu0 0.0
        %2873 = vmatpush1.msra.mxu0 0.0
        %2874 = vmatprep.subr.mxu0 0.0
        %2875 = vmatpush1.msra.mxu0 0.0
        %2876 = vmatprep.subr.mxu0 0.0
        %2877 = vmatpush1.msra.mxu0 0.0
        %2878 = vmatprep.subr.mxu0 0.0
        %2879 = vmatpush1.msra.mxu0 0.0
        %2880 = vmatprep.subr.mxu0 0.0
        %2881 = vmatpush1.msra.mxu0 0.0
        %2882 = vmatprep.subr.mxu0 0.0
        %2883 = vmatpush1.msra.mxu0 0.0
        %2884 = vmatprep.subr.mxu0 0.0
        %2885 = vmatpush1.msra.mxu0 0.0
        %2886 = vmatprep.subr.mxu0 0.0
        %2887 = vmatpush1.msra.mxu0 0.0
        %2888 = vmatprep.subr.mxu0 0.0
        %2889 = vmatpush1.msra.mxu0 0.0
        %2890 = vmatprep.subr.mxu0 0.0
        %2891 = vmatpush1.msra.mxu0 0.0
        %2892 = vmatprep.subr.mxu0 0.0
        %2893 = vmatpush1.msra.mxu0 0.0
        %2894 = vmatprep.subr.mxu0 0.0
        %2895 = vmatpush1.msra.mxu0 0.0
        %2896 = vmatprep.subr.mxu0 0.0
        %2897 = vmatpush1.msra.mxu0 0.0
        %2898 = vmatprep.subr.mxu0 0.0
        %2899 = vmatpush1.msra.mxu0 0.0
        %2900 = vmatprep.mubr.f32.mxu0 0.0
        %2901 = vmatmul.mubr.f32.gmra.mrb[0].mxu0 %v2828
        %v2902 = vpop.f32.mrb[0].mxu0
        %v2903 = vadd.f32 0.0, %v2902
        %v2904 = vpop.f32.mrb[0].mxu0
        %v2905 = vadd.f32 0.0, %v2904
        %2906 = vdwg.mxu0
        %2907 = vmatprep.subr.mxu0 0.0
        %2908 = vmatpush1.msra.mxu0 %v2834
        %2909 = vmatprep.subr.mxu0 0.0
        %2910 = vmatpush1.msra.mxu0 0.0
        %2911 = vmatprep.subr.mxu0 0.0
        %2912 = vmatpush1.msra.mxu0 0.0
        %2913 = vmatprep.subr.mxu0 0.0
        %2914 = vmatpush1.msra.mxu0 0.0
        %2915 = vmatprep.subr.mxu0 0.0
        %2916 = vmatpush1.msra.mxu0 0.0
        %2917 = vmatprep.subr.mxu0 0.0
        %2918 = vmatpush1.msra.mxu0 0.0
        %2919 = vmatprep.subr.mxu0 0.0
        %2920 = vmatpush1.msra.mxu0 0.0
        %2921 = vmatprep.subr.mxu0 0.0
        %2922 = vmatpush1.msra.mxu0 0.0
        %2923 = vmatprep.subr.mxu0 0.0
        %2924 = vmatpush1.msra.mxu0 0.0
        %2925 = vmatprep.subr.mxu0 0.0
        %2926 = vmatpush1.msra.mxu0 0.0
        %2927 = vmatprep.subr.mxu0 0.0
        %2928 = vmatpush1.msra.mxu0 0.0
        %2929 = vmatprep.subr.mxu0 0.0
        %2930 = vmatpush1.msra.mxu0 0.0
        %2931 = vmatprep.subr.mxu0 0.0
        %2932 = vmatpush1.msra.mxu0 0.0
        %2933 = vmatprep.subr.mxu0 0.0
        %2934 = vmatpush1.msra.mxu0 0.0
        %2935 = vmatprep.subr.mxu0 0.0
        %2936 = vmatpush1.msra.mxu0 0.0
        %2937 = vmatprep.subr.mxu0 0.0
        %2938 = vmatpush1.msra.mxu0 0.0
        %2939 = vmatprep.subr.mxu0 0.0
        %2940 = vmatpush1.msra.mxu0 0.0
        %2941 = vmatprep.subr.mxu0 0.0
        %2942 = vmatpush1.msra.mxu0 0.0
        %2943 = vmatprep.subr.mxu0 0.0
        %2944 = vmatpush1.msra.mxu0 0.0
        %2945 = vmatprep.subr.mxu0 0.0
        %2946 = vmatpush1.msra.mxu0 0.0
        %2947 = vmatprep.subr.mxu0 0.0
        %2948 = vmatpush1.msra.mxu0 0.0
        %2949 = vmatprep.subr.mxu0 0.0
        %2950 = vmatpush1.msra.mxu0 0.0
        %2951 = vmatprep.subr.mxu0 0.0
        %2952 = vmatpush1.msra.mxu0 0.0
        %2953 = vmatprep.subr.mxu0 0.0
        %2954 = vmatpush1.msra.mxu0 0.0
        %2955 = vmatprep.subr.mxu0 0.0
        %2956 = vmatpush1.msra.mxu0 0.0
        %2957 = vmatprep.subr.mxu0 0.0
        %2958 = vmatpush1.msra.mxu0 0.0
        %2959 = vmatprep.subr.mxu0 0.0
        %2960 = vmatpush1.msra.mxu0 0.0
        %2961 = vmatprep.subr.mxu0 0.0
        %2962 = vmatpush1.msra.mxu0 0.0
        %2963 = vmatprep.subr.mxu0 0.0
        %2964 = vmatpush1.msra.mxu0 0.0
        %2965 = vmatprep.subr.mxu0 0.0
        %2966 = vmatpush1.msra.mxu0 0.0
        %2967 = vmatprep.subr.mxu0 0.0
        %2968 = vmatpush1.msra.mxu0 0.0
        %2969 = vmatprep.subr.mxu0 0.0
        %2970 = vmatpush1.msra.mxu0 0.0
        %2971 = vmatprep.mubr.f32.mxu0 0.0
        %2972 = vmatmul.mubr.f32.gmra.mrb[0].mxu0 %v2828
        %v2973 = vpop.f32.mrb[0].mxu0
        %v2974 = vadd.f32 0.0, %v2973
        %v2975 = vpop.f32.mrb[0].mxu0
        %2976 = vdwg.mxu0
        %v2977 = vadd.f32 %v2814, %v2903
        %v2978 = vadd.f32 %v2815, %v2905
        %v2979 = vadd.f32 %v2816, %v2974
        %s2980 = scalar_lea.vmem %s2, 24
        %v2981 = vld [vmem:[%s2980] sm:$0xf]
        %2982 = vrot.lane.b32.xlu0 %v1995, 111
        %v2983 = vpop.permute.xlu0 %2982
        %2984 = vrot.lane.b32.xlu0 %v1996, 111
        %v2985 = vpop.permute.xlu0 %2984
        %2986 = vrot.lane.b32.xlu0 %v2000, 111
        %v2987 = vpop.permute.xlu0 %2986
        %v2988 = vsel %vm1206, %v2983, %v2985
        %v2989 = vsel %vm1206, %v2985, %v2987
        %v2991 = vsel %vm236, %v2981, 0
        %v2993 = vsel %vm240, %v2988, 0
        %v2995 = vsel %vm240, %v2989, 0
        %v2997 = vsel %vm240, %v2987, 0
        %2999 = vmatprep.subr.mxu0 %v2995
        %3000 = vmatpush1.msra.mxu0 %v2993
        %3001 = vmatprep.subr.mxu0 0.0
        %3002 = vmatpush1.msra.mxu0 0.0
        %3003 = vmatprep.subr.mxu0 0.0
        %3004 = vmatpush1.msra.mxu0 0.0
        %3005 = vmatprep.subr.mxu0 0.0
        %3006 = vmatpush1.msra.mxu0 0.0
        %3007 = vmatprep.subr.mxu0 0.0
        %3008 = vmatpush1.msra.mxu0 0.0
        %3009 = vmatprep.subr.mxu0 0.0
        %3010 = vmatpush1.msra.mxu0 0.0
        %3011 = vmatprep.subr.mxu0 0.0
        %3012 = vmatpush1.msra.mxu0 0.0
        %3013 = vmatprep.subr.mxu0 0.0
        %3014 = vmatpush1.msra.mxu0 0.0
        %3015 = vmatprep.subr.mxu0 0.0
        %3016 = vmatpush1.msra.mxu0 0.0
        %3017 = vmatprep.subr.mxu0 0.0
        %3018 = vmatpush1.msra.mxu0 0.0
        %3019 = vmatprep.subr.mxu0 0.0
        %3020 = vmatpush1.msra.mxu0 0.0
        %3021 = vmatprep.subr.mxu0 0.0
        %3022 = vmatpush1.msra.mxu0 0.0
        %3023 = vmatprep.subr.mxu0 0.0
        %3024 = vmatpush1.msra.mxu0 0.0
        %3025 = vmatprep.subr.mxu0 0.0
        %3026 = vmatpush1.msra.mxu0 0.0
        %3027 = vmatprep.subr.mxu0 0.0
        %3028 = vmatpush1.msra.mxu0 0.0
        %3029 = vmatprep.subr.mxu0 0.0
        %3030 = vmatpush1.msra.mxu0 0.0
        %3031 = vmatprep.subr.mxu0 0.0
        %3032 = vmatpush1.msra.mxu0 0.0
        %3033 = vmatprep.subr.mxu0 0.0
        %3034 = vmatpush1.msra.mxu0 0.0
        %3035 = vmatprep.subr.mxu0 0.0
        %3036 = vmatpush1.msra.mxu0 0.0
        %3037 = vmatprep.subr.mxu0 0.0
        %3038 = vmatpush1.msra.mxu0 0.0
        %3039 = vmatprep.subr.mxu0 0.0
        %3040 = vmatpush1.msra.mxu0 0.0
        %3041 = vmatprep.subr.mxu0 0.0
        %3042 = vmatpush1.msra.mxu0 0.0
        %3043 = vmatprep.subr.mxu0 0.0
        %3044 = vmatpush1.msra.mxu0 0.0
        %3045 = vmatprep.subr.mxu0 0.0
        %3046 = vmatpush1.msra.mxu0 0.0
        %3047 = vmatprep.subr.mxu0 0.0
        %3048 = vmatpush1.msra.mxu0 0.0
        %3049 = vmatprep.subr.mxu0 0.0
        %3050 = vmatpush1.msra.mxu0 0.0
        %3051 = vmatprep.subr.mxu0 0.0
        %3052 = vmatpush1.msra.mxu0 0.0
        %3053 = vmatprep.subr.mxu0 0.0
        %3054 = vmatpush1.msra.mxu0 0.0
        %3055 = vmatprep.subr.mxu0 0.0
        %3056 = vmatpush1.msra.mxu0 0.0
        %3057 = vmatprep.subr.mxu0 0.0
        %3058 = vmatpush1.msra.mxu0 0.0
        %3059 = vmatprep.subr.mxu0 0.0
        %3060 = vmatpush1.msra.mxu0 0.0
        %3061 = vmatprep.subr.mxu0 0.0
        %3062 = vmatpush1.msra.mxu0 0.0
        %3063 = vmatprep.mubr.f32.mxu0 0.0
        %3064 = vmatmul.mubr.f32.gmra.mrb[0].mxu0 %v2991
        %v3065 = vpop.f32.mrb[0].mxu0
        %v3066 = vadd.f32 0.0, %v3065
        %v3067 = vpop.f32.mrb[0].mxu0
        %v3068 = vadd.f32 0.0, %v3067
        %3069 = vdwg.mxu0
        %3070 = vmatprep.subr.mxu0 0.0
        %3071 = vmatpush1.msra.mxu0 %v2997
        %3072 = vmatprep.subr.mxu0 0.0
        %3073 = vmatpush1.msra.mxu0 0.0
        %3074 = vmatprep.subr.mxu0 0.0
        %3075 = vmatpush1.msra.mxu0 0.0
        %3076 = vmatprep.subr.mxu0 0.0
        %3077 = vmatpush1.msra.mxu0 0.0
        %3078 = vmatprep.subr.mxu0 0.0
        %3079 = vmatpush1.msra.mxu0 0.0
        %3080 = vmatprep.subr.mxu0 0.0
        %3081 = vmatpush1.msra.mxu0 0.0
        %3082 = vmatprep.subr.mxu0 0.0
        %3083 = vmatpush1.msra.mxu0 0.0
        %3084 = vmatprep.subr.mxu0 0.0
        %3085 = vmatpush1.msra.mxu0 0.0
        %3086 = vmatprep.subr.mxu0 0.0
        %3087 = vmatpush1.msra.mxu0 0.0
        %3088 = vmatprep.subr.mxu0 0.0
        %3089 = vmatpush1.msra.mxu0 0.0
        %3090 = vmatprep.subr.mxu0 0.0
        %3091 = vmatpush1.msra.mxu0 0.0
        %3092 = vmatprep.subr.mxu0 0.0
        %3093 = vmatpush1.msra.mxu0 0.0
        %3094 = vmatprep.subr.mxu0 0.0
        %3095 = vmatpush1.msra.mxu0 0.0
        %3096 = vmatprep.subr.mxu0 0.0
        %3097 = vmatpush1.msra.mxu0 0.0
        %3098 = vmatprep.subr.mxu0 0.0
        %3099 = vmatpush1.msra.mxu0 0.0
        %3100 = vmatprep.subr.mxu0 0.0
        %3101 = vmatpush1.msra.mxu0 0.0
        %3102 = vmatprep.subr.mxu0 0.0
        %3103 = vmatpush1.msra.mxu0 0.0
        %3104 = vmatprep.subr.mxu0 0.0
        %3105 = vmatpush1.msra.mxu0 0.0
        %3106 = vmatprep.subr.mxu0 0.0
        %3107 = vmatpush1.msra.mxu0 0.0
        %3108 = vmatprep.subr.mxu0 0.0
        %3109 = vmatpush1.msra.mxu0 0.0
        %3110 = vmatprep.subr.mxu0 0.0
        %3111 = vmatpush1.msra.mxu0 0.0
        %3112 = vmatprep.subr.mxu0 0.0
        %3113 = vmatpush1.msra.mxu0 0.0
        %3114 = vmatprep.subr.mxu0 0.0
        %3115 = vmatpush1.msra.mxu0 0.0
        %3116 = vmatprep.subr.mxu0 0.0
        %3117 = vmatpush1.msra.mxu0 0.0
        %3118 = vmatprep.subr.mxu0 0.0
        %3119 = vmatpush1.msra.mxu0 0.0
        %3120 = vmatprep.subr.mxu0 0.0
        %3121 = vmatpush1.msra.mxu0 0.0
        %3122 = vmatprep.subr.mxu0 0.0
        %3123 = vmatpush1.msra.mxu0 0.0
        %3124 = vmatprep.subr.mxu0 0.0
        %3125 = vmatpush1.msra.mxu0 0.0
        %3126 = vmatprep.subr.mxu0 0.0
        %3127 = vmatpush1.msra.mxu0 0.0
        %3128 = vmatprep.subr.mxu0 0.0
        %3129 = vmatpush1.msra.mxu0 0.0
        %3130 = vmatprep.subr.mxu0 0.0
        %3131 = vmatpush1.msra.mxu0 0.0
        %3132 = vmatprep.subr.mxu0 0.0
        %3133 = vmatpush1.msra.mxu0 0.0
        %3134 = vmatprep.mubr.f32.mxu0 0.0
        %3135 = vmatmul.mubr.f32.gmra.mrb[0].mxu0 %v2991
        %v3136 = vpop.f32.mrb[0].mxu0
        %v3137 = vadd.f32 0.0, %v3136
        %v3138 = vpop.f32.mrb[0].mxu0
        %3139 = vdwg.mxu0
        %v3140 = vadd.f32 %v2977, %v3066
        %v3141 = vadd.f32 %v2978, %v3068
        %v3142 = vadd.f32 %v2979, %v3137
        %s3143 = scalar_lea.vmem %s2, 28
        %v3144 = vld [vmem:[%s3143] sm:$0xf]
        %3145 = vrot.lane.b32.xlu0 %v1995, 110
        %v3146 = vpop.permute.xlu0 %3145
        %3147 = vrot.lane.b32.xlu0 %v1996, 110
        %v3148 = vpop.permute.xlu0 %3147
        %3149 = vrot.lane.b32.xlu0 %v2000, 110
        %v3150 = vpop.permute.xlu0 %3149
        %v3151 = vsel %vm1370, %v3146, %v3148
        %v3152 = vsel %vm1370, %v3148, %v3150
        %v3154 = vsel %vm236, %v3144, 0
        %v3156 = vsel %vm240, %v3151, 0
        %v3158 = vsel %vm240, %v3152, 0
        %v3160 = vsel %vm240, %v3150, 0
        %3162 = vmatprep.subr.mxu0 %v3158
        %3163 = vmatpush1.msra.mxu0 %v3156
        %3164 = vmatprep.subr.mxu0 0.0
        %3165 = vmatpush1.msra.mxu0 0.0
        %3166 = vmatprep.subr.mxu0 0.0
        %3167 = vmatpush1.msra.mxu0 0.0
        %3168 = vmatprep.subr.mxu0 0.0
        %3169 = vmatpush1.msra.mxu0 0.0
        %3170 = vmatprep.subr.mxu0 0.0
        %3171 = vmatpush1.msra.mxu0 0.0
        %3172 = vmatprep.subr.mxu0 0.0
        %3173 = vmatpush1.msra.mxu0 0.0
        %3174 = vmatprep.subr.mxu0 0.0
        %3175 = vmatpush1.msra.mxu0 0.0
        %3176 = vmatprep.subr.mxu0 0.0
        %3177 = vmatpush1.msra.mxu0 0.0
        %3178 = vmatprep.subr.mxu0 0.0
        %3179 = vmatpush1.msra.mxu0 0.0
        %3180 = vmatprep.subr.mxu0 0.0
        %3181 = vmatpush1.msra.mxu0 0.0
        %3182 = vmatprep.subr.mxu0 0.0
        %3183 = vmatpush1.msra.mxu0 0.0
        %3184 = vmatprep.subr.mxu0 0.0
        %3185 = vmatpush1.msra.mxu0 0.0
        %3186 = vmatprep.subr.mxu0 0.0
        %3187 = vmatpush1.msra.mxu0 0.0
        %3188 = vmatprep.subr.mxu0 0.0
        %3189 = vmatpush1.msra.mxu0 0.0
        %3190 = vmatprep.subr.mxu0 0.0
        %3191 = vmatpush1.msra.mxu0 0.0
        %3192 = vmatprep.subr.mxu0 0.0
        %3193 = vmatpush1.msra.mxu0 0.0
        %3194 = vmatprep.subr.mxu0 0.0
        %3195 = vmatpush1.msra.mxu0 0.0
        %3196 = vmatprep.subr.mxu0 0.0
        %3197 = vmatpush1.msra.mxu0 0.0
        %3198 = vmatprep.subr.mxu0 0.0
        %3199 = vmatpush1.msra.mxu0 0.0
        %3200 = vmatprep.subr.mxu0 0.0
        %3201 = vmatpush1.msra.mxu0 0.0
        %3202 = vmatprep.subr.mxu0 0.0
        %3203 = vmatpush1.msra.mxu0 0.0
        %3204 = vmatprep.subr.mxu0 0.0
        %3205 = vmatpush1.msra.mxu0 0.0
        %3206 = vmatprep.subr.mxu0 0.0
        %3207 = vmatpush1.msra.mxu0 0.0
        %3208 = vmatprep.subr.mxu0 0.0
        %3209 = vmatpush1.msra.mxu0 0.0
        %3210 = vmatprep.subr.mxu0 0.0
        %3211 = vmatpush1.msra.mxu0 0.0
        %3212 = vmatprep.subr.mxu0 0.0
        %3213 = vmatpush1.msra.mxu0 0.0
        %3214 = vmatprep.subr.mxu0 0.0
        %3215 = vmatpush1.msra.mxu0 0.0
        %3216 = vmatprep.subr.mxu0 0.0
        %3217 = vmatpush1.msra.mxu0 0.0
        %3218 = vmatprep.subr.mxu0 0.0
        %3219 = vmatpush1.msra.mxu0 0.0
        %3220 = vmatprep.subr.mxu0 0.0
        %3221 = vmatpush1.msra.mxu0 0.0
        %3222 = vmatprep.subr.mxu0 0.0
        %3223 = vmatpush1.msra.mxu0 0.0
        %3224 = vmatprep.subr.mxu0 0.0
        %3225 = vmatpush1.msra.mxu0 0.0
        %3226 = vmatprep.mubr.f32.mxu0 0.0
        %3227 = vmatmul.mubr.f32.gmra.mrb[0].mxu0 %v3154
        %v3228 = vpop.f32.mrb[0].mxu0
        %v3229 = vadd.f32 0.0, %v3228
        %v3230 = vpop.f32.mrb[0].mxu0
        %v3231 = vadd.f32 0.0, %v3230
        %3232 = vdwg.mxu0
        %3233 = vmatprep.subr.mxu0 0.0
        %3234 = vmatpush1.msra.mxu0 %v3160
        %3235 = vmatprep.subr.mxu0 0.0
        %3236 = vmatpush1.msra.mxu0 0.0
        %3237 = vmatprep.subr.mxu0 0.0
        %3238 = vmatpush1.msra.mxu0 0.0
        %3239 = vmatprep.subr.mxu0 0.0
        %3240 = vmatpush1.msra.mxu0 0.0
        %3241 = vmatprep.subr.mxu0 0.0
        %3242 = vmatpush1.msra.mxu0 0.0
        %3243 = vmatprep.subr.mxu0 0.0
        %3244 = vmatpush1.msra.mxu0 0.0
        %3245 = vmatprep.subr.mxu0 0.0
        %3246 = vmatpush1.msra.mxu0 0.0
        %3247 = vmatprep.subr.mxu0 0.0
        %3248 = vmatpush1.msra.mxu0 0.0
        %3249 = vmatprep.subr.mxu0 0.0
        %3250 = vmatpush1.msra.mxu0 0.0
        %3251 = vmatprep.subr.mxu0 0.0
        %3252 = vmatpush1.msra.mxu0 0.0
        %3253 = vmatprep.subr.mxu0 0.0
        %3254 = vmatpush1.msra.mxu0 0.0
        %3255 = vmatprep.subr.mxu0 0.0
        %3256 = vmatpush1.msra.mxu0 0.0
        %3257 = vmatprep.subr.mxu0 0.0
        %3258 = vmatpush1.msra.mxu0 0.0
        %3259 = vmatprep.subr.mxu0 0.0
        %3260 = vmatpush1.msra.mxu0 0.0
        %3261 = vmatprep.subr.mxu0 0.0
        %3262 = vmatpush1.msra.mxu0 0.0
        %3263 = vmatprep.subr.mxu0 0.0
        %3264 = vmatpush1.msra.mxu0 0.0
        %3265 = vmatprep.subr.mxu0 0.0
        %3266 = vmatpush1.msra.mxu0 0.0
        %3267 = vmatprep.subr.mxu0 0.0
        %3268 = vmatpush1.msra.mxu0 0.0
        %3269 = vmatprep.subr.mxu0 0.0
        %3270 = vmatpush1.msra.mxu0 0.0
        %3271 = vmatprep.subr.mxu0 0.0
        %3272 = vmatpush1.msra.mxu0 0.0
        %3273 = vmatprep.subr.mxu0 0.0
        %3274 = vmatpush1.msra.mxu0 0.0
        %3275 = vmatprep.subr.mxu0 0.0
        %3276 = vmatpush1.msra.mxu0 0.0
        %3277 = vmatprep.subr.mxu0 0.0
        %3278 = vmatpush1.msra.mxu0 0.0
        %3279 = vmatprep.subr.mxu0 0.0
        %3280 = vmatpush1.msra.mxu0 0.0
        %3281 = vmatprep.subr.mxu0 0.0
        %3282 = vmatpush1.msra.mxu0 0.0
        %3283 = vmatprep.subr.mxu0 0.0
        %3284 = vmatpush1.msra.mxu0 0.0
        %3285 = vmatprep.subr.mxu0 0.0
        %3286 = vmatpush1.msra.mxu0 0.0
        %3287 = vmatprep.subr.mxu0 0.0
        %3288 = vmatpush1.msra.mxu0 0.0
        %3289 = vmatprep.subr.mxu0 0.0
        %3290 = vmatpush1.msra.mxu0 0.0
        %3291 = vmatprep.subr.mxu0 0.0
        %3292 = vmatpush1.msra.mxu0 0.0
        %3293 = vmatprep.subr.mxu0 0.0
        %3294 = vmatpush1.msra.mxu0 0.0
        %3295 = vmatprep.subr.mxu0 0.0
        %3296 = vmatpush1.msra.mxu0 0.0
        %3297 = vmatprep.mubr.f32.mxu0 0.0
        %3298 = vmatmul.mubr.f32.gmra.mrb[0].mxu0 %v3154
        %v3299 = vpop.f32.mrb[0].mxu0
        %v3300 = vadd.f32 0.0, %v3299
        %v3301 = vpop.f32.mrb[0].mxu0
        %3302 = vdwg.mxu0
        %v3303 = vadd.f32 %v3140, %v3229
        %v3304 = vadd.f32 %v3141, %v3231
        %v3305 = vadd.f32 %v3142, %v3300
        %s3306 = scalar_lea.vmem %s2, 32
        %v3307 = vld [vmem:[%s3306] sm:$0xf]
        %3308 = vrot.lane.b32.xlu0 %v1995, 109
        %v3309 = vpop.permute.xlu0 %3308
        %3310 = vrot.lane.b32.xlu0 %v1996, 109
        %v3311 = vpop.permute.xlu0 %3310
        %3312 = vrot.lane.b32.xlu0 %v2000, 109
        %v3313 = vpop.permute.xlu0 %3312
        %v3314 = vsel %vm1534, %v3309, %v3311
        %v3315 = vsel %vm1534, %v3311, %v3313
        %v3317 = vsel %vm236, %v3307, 0
        %v3319 = vsel %vm240, %v3314, 0
        %v3321 = vsel %vm240, %v3315, 0
        %v3323 = vsel %vm240, %v3313, 0
        %3325 = vmatprep.subr.mxu0 %v3321
        %3326 = vmatpush1.msra.mxu0 %v3319
        %3327 = vmatprep.subr.mxu0 0.0
        %3328 = vmatpush1.msra.mxu0 0.0
        %3329 = vmatprep.subr.mxu0 0.0
        %3330 = vmatpush1.msra.mxu0 0.0
        %3331 = vmatprep.subr.mxu0 0.0
        %3332 = vmatpush1.msra.mxu0 0.0
        %3333 = vmatprep.subr.mxu0 0.0
        %3334 = vmatpush1.msra.mxu0 0.0
        %3335 = vmatprep.subr.mxu0 0.0
        %3336 = vmatpush1.msra.mxu0 0.0
        %3337 = vmatprep.subr.mxu0 0.0
        %3338 = vmatpush1.msra.mxu0 0.0
        %3339 = vmatprep.subr.mxu0 0.0
        %3340 = vmatpush1.msra.mxu0 0.0
        %3341 = vmatprep.subr.mxu0 0.0
        %3342 = vmatpush1.msra.mxu0 0.0
        %3343 = vmatprep.subr.mxu0 0.0
        %3344 = vmatpush1.msra.mxu0 0.0
        %3345 = vmatprep.subr.mxu0 0.0
        %3346 = vmatpush1.msra.mxu0 0.0
        %3347 = vmatprep.subr.mxu0 0.0
        %3348 = vmatpush1.msra.mxu0 0.0
        %3349 = vmatprep.subr.mxu0 0.0
        %3350 = vmatpush1.msra.mxu0 0.0
        %3351 = vmatprep.subr.mxu0 0.0
        %3352 = vmatpush1.msra.mxu0 0.0
        %3353 = vmatprep.subr.mxu0 0.0
        %3354 = vmatpush1.msra.mxu0 0.0
        %3355 = vmatprep.subr.mxu0 0.0
        %3356 = vmatpush1.msra.mxu0 0.0
        %3357 = vmatprep.subr.mxu0 0.0
        %3358 = vmatpush1.msra.mxu0 0.0
        %3359 = vmatprep.subr.mxu0 0.0
        %3360 = vmatpush1.msra.mxu0 0.0
        %3361 = vmatprep.subr.mxu0 0.0
        %3362 = vmatpush1.msra.mxu0 0.0
        %3363 = vmatprep.subr.mxu0 0.0
        %3364 = vmatpush1.msra.mxu0 0.0
        %3365 = vmatprep.subr.mxu0 0.0
        %3366 = vmatpush1.msra.mxu0 0.0
        %3367 = vmatprep.subr.mxu0 0.0
        %3368 = vmatpush1.msra.mxu0 0.0
        %3369 = vmatprep.subr.mxu0 0.0
        %3370 = vmatpush1.msra.mxu0 0.0
        %3371 = vmatprep.subr.mxu0 0.0
        %3372 = vmatpush1.msra.mxu0 0.0
        %3373 = vmatprep.subr.mxu0 0.0
        %3374 = vmatpush1.msra.mxu0 0.0
        %3375 = vmatprep.subr.mxu0 0.0
        %3376 = vmatpush1.msra.mxu0 0.0
        %3377 = vmatprep.subr.mxu0 0.0
        %3378 = vmatpush1.msra.mxu0 0.0
        %3379 = vmatprep.subr.mxu0 0.0
        %3380 = vmatpush1.msra.mxu0 0.0
        %3381 = vmatprep.subr.mxu0 0.0
        %3382 = vmatpush1.msra.mxu0 0.0
        %3383 = vmatprep.subr.mxu0 0.0
        %3384 = vmatpush1.msra.mxu0 0.0
        %3385 = vmatprep.subr.mxu0 0.0
        %3386 = vmatpush1.msra.mxu0 0.0
        %3387 = vmatprep.subr.mxu0 0.0
        %3388 = vmatpush1.msra.mxu0 0.0
        %3389 = vmatprep.mubr.f32.mxu0 0.0
        %3390 = vmatmul.mubr.f32.gmra.mrb[0].mxu0 %v3317
        %v3391 = vpop.f32.mrb[0].mxu0
        %v3392 = vadd.f32 0.0, %v3391
        %v3393 = vpop.f32.mrb[0].mxu0
        %v3394 = vadd.f32 0.0, %v3393
        %3395 = vdwg.mxu0
        %3396 = vmatprep.subr.mxu0 0.0
        %3397 = vmatpush1.msra.mxu0 %v3323
        %3398 = vmatprep.subr.mxu0 0.0
        %3399 = vmatpush1.msra.mxu0 0.0
        %3400 = vmatprep.subr.mxu0 0.0
        %3401 = vmatpush1.msra.mxu0 0.0
        %3402 = vmatprep.subr.mxu0 0.0
        %3403 = vmatpush1.msra.mxu0 0.0
        %3404 = vmatprep.subr.mxu0 0.0
        %3405 = vmatpush1.msra.mxu0 0.0
        %3406 = vmatprep.subr.mxu0 0.0
        %3407 = vmatpush1.msra.mxu0 0.0
        %3408 = vmatprep.subr.mxu0 0.0
        %3409 = vmatpush1.msra.mxu0 0.0
        %3410 = vmatprep.subr.mxu0 0.0
        %3411 = vmatpush1.msra.mxu0 0.0
        %3412 = vmatprep.subr.mxu0 0.0
        %3413 = vmatpush1.msra.mxu0 0.0
        %3414 = vmatprep.subr.mxu0 0.0
        %3415 = vmatpush1.msra.mxu0 0.0
        %3416 = vmatprep.subr.mxu0 0.0
        %3417 = vmatpush1.msra.mxu0 0.0
        %3418 = vmatprep.subr.mxu0 0.0
        %3419 = vmatpush1.msra.mxu0 0.0
        %3420 = vmatprep.subr.mxu0 0.0
        %3421 = vmatpush1.msra.mxu0 0.0
        %3422 = vmatprep.subr.mxu0 0.0
        %3423 = vmatpush1.msra.mxu0 0.0
        %3424 = vmatprep.subr.mxu0 0.0
        %3425 = vmatpush1.msra.mxu0 0.0
        %3426 = vmatprep.subr.mxu0 0.0
        %3427 = vmatpush1.msra.mxu0 0.0
        %3428 = vmatprep.subr.mxu0 0.0
        %3429 = vmatpush1.msra.mxu0 0.0
        %3430 = vmatprep.subr.mxu0 0.0
        %3431 = vmatpush1.msra.mxu0 0.0
        %3432 = vmatprep.subr.mxu0 0.0
        %3433 = vmatpush1.msra.mxu0 0.0
        %3434 = vmatprep.subr.mxu0 0.0
        %3435 = vmatpush1.msra.mxu0 0.0
        %3436 = vmatprep.subr.mxu0 0.0
        %3437 = vmatpush1.msra.mxu0 0.0
        %3438 = vmatprep.subr.mxu0 0.0
        %3439 = vmatpush1.msra.mxu0 0.0
        %3440 = vmatprep.subr.mxu0 0.0
        %3441 = vmatpush1.msra.mxu0 0.0
        %3442 = vmatprep.subr.mxu0 0.0
        %3443 = vmatpush1.msra.mxu0 0.0
        %3444 = vmatprep.subr.mxu0 0.0
        %3445 = vmatpush1.msra.mxu0 0.0
        %3446 = vmatprep.subr.mxu0 0.0
        %3447 = vmatpush1.msra.mxu0 0.0
        %3448 = vmatprep.subr.mxu0 0.0
        %3449 = vmatpush1.msra.mxu0 0.0
        %3450 = vmatprep.subr.mxu0 0.0
        %3451 = vmatpush1.msra.mxu0 0.0
        %3452 = vmatprep.subr.mxu0 0.0
        %3453 = vmatpush1.msra.mxu0 0.0
        %3454 = vmatprep.subr.mxu0 0.0
        %3455 = vmatpush1.msra.mxu0 0.0
        %3456 = vmatprep.subr.mxu0 0.0
        %3457 = vmatpush1.msra.mxu0 0.0
        %3458 = vmatprep.subr.mxu0 0.0
        %3459 = vmatpush1.msra.mxu0 0.0
        %3460 = vmatprep.mubr.f32.mxu0 0.0
        %3461 = vmatmul.mubr.f32.gmra.mrb[0].mxu0 %v3317
        %v3462 = vpop.f32.mrb[0].mxu0
        %v3463 = vadd.f32 0.0, %v3462
        %v3464 = vpop.f32.mrb[0].mxu0
        %3465 = vdwg.mxu0
        %v3466 = vadd.f32 %v3303, %v3392
        %v3467 = vadd.f32 %v3304, %v3394
        %v3468 = vadd.f32 %v3305, %v3463
        %v3469 = vmul.f32 %v3466, %v1694
        %v3470 = vmul.f32 %v3467, %v1698
        %v3471 = vmul.f32 %v3468, %v1702
        %v3472 = vsel %vm240, %v3469, 0.0
        %v3473 = vsel %vm240, %v3470, 0.0
        %v3474 = vadd.f32 %v3472, %v3473
        %v3475 = vsel %vm1712, %v3471, 0.0
        %v3476 = vadd.f32 %v3474, %v3475
        %3477 = vadd.xlane.f32.xlu0 %v3476
        %v3478 = vpop.xlane.xlu0 %3477
        %v3479 = vmul.f32 %v3469, %v3466
        %v3480 = vmul.f32 %v3470, %v3467
        %v3481 = vmul.f32 %v3471, %v3468
        %v3482 = vsel %vm240, %v3479, 0.0
        %v3483 = vsel %vm240, %v3480, 0.0
        %v3484 = vadd.f32 %v3482, %v3483
        %v3485 = vsel %vm1712, %v3481, 0.0
        %v3486 = vadd.f32 %v3484, %v3485
        %3487 = vadd.xlane.f32.xlu0 %v3486
        %v3488 = vpop.xlane.xlu0 %3487
        %v3489 = vmul.f32 %v3478, 0.00390625
        %v3490 = vmul.f32 %v3488, 0.00390625
        %v3491 = vmul.f32 %v3489, %v3489
        %v3492 = vsub.f32 %v3490, %v3491
        %v3493 = vsub.f32 %v3466, %v3489
        %v3494 = vsub.f32 %v3467, %v3489
        %v3495 = vsub.f32 %v3468, %v3489
        %v3496 = vadd.f32 %v3492, 1e-05
        %v3497 = vrsqrt.pop %v3496
        %v3498 = vmul.f32 %v3493, %v3497
        %v3499 = vmul.f32 %v3494, %v3497
        %v3500 = vmul.f32 %v3495, %v3497
        %v3503 = vcombine.low %v3498, %v3499
        %v3505 = vadd.f32 %v196, %v3503
        %v3506 = vadd.f32 %v197, %v3500
        %3507 = vst [vmem:[%s190] sm:$0xff] %v3505
        %3508 = vst.msk [vmem:[%s190 + $0x8] sm:$0xf] %vm1712, %v3506
        %s3509 = sand.u32 %s115, 1
        %s3510 = scalar_lea.sflag [#allocation3], %s3509
        %s3511 = sand.u32 %s115, 1
        %s3512 = smul.addr %s3511, 12
        %s3513 = scalar_lea.vmem [#allocation2], %s3512
        // Predicated region
        $region37: #{tpu_custom_call.1} parent=35 // pred_check
          %p3514 = pneg %p125
        $region38: #{tpu_custom_call.1} parent=35 // pred_check_branch
          %3516 = sbr.rel (%p3514) target = $region40
        $region39: #{tpu_custom_call.1} parent=35 // pred_region
          %s3518 = ssub.s32 192, 192
          %3519 = vsyncadd %s3510, %s3518
          %s3520 = smul.addr %s18, 3
          %s3521 = smul.addr %s3520, 64
          %s3522 = scalar_lea.hbm %s4, %s3521
          %s3524 = sshll.u32 %s3513, 4
          %s3525 = int_to_ptr.vmem [resolvable:$true] %s3524
          %3527 = dma.vmem_to_hbm [thread:$0]  %s3525, 192, %s3522, %s3510
        $region40: #{tpu_custom_call.1} parent=35 // pred_fallthru
          _
      $region36: #{tpu_custom_call.1} parent=5 // pred_fallthru
        _
      %p3528 = scmp.le.s32.totalorder 2, %s13
      // Predicated region
      $region41: #{tpu_custom_call.1} parent=5 // pred_check
        %p3529 = pneg %p3528
      $region42: #{tpu_custom_call.1} parent=5 // pred_check_branch
        %3531 = sbr.rel (%p3529) target = $region44
      $region43: #{tpu_custom_call.1} parent=5 // pred_region
        %s3532 = ssub.s32 %s13, 2
        // Predicated region
        $region45: #{tpu_custom_call.1} parent=43 // pred_check
          %p3533 = pneg %p131
        $region46: #{tpu_custom_call.1} parent=43 // pred_check_branch
          %3535 = sbr.rel (%p3533) target = $region48
        $region47: #{tpu_custom_call.1} parent=43 // pred_region
          %s3536 = sand.u32 %s116, 1
          %s3537 = scalar_lea.sflag [#allocation3], %s3536
          %s3538 = sand.u32 %s116, 1
          %s3539 = smul.addr %s3538, 12
          %s3540 = scalar_lea.vmem [#allocation2], %s3539
          %3541 = dma.done %s3537, 192
        $region48: #{tpu_custom_call.1} parent=43 // pred_fallthru
          _
      $region44: #{tpu_custom_call.1} parent=5 // pred_fallthru
        _
    $region6: #{tpu_custom_call.1} parent=1 // loop_footer
      %s17 = sadd.s32 1, %s13
    $region7: #{tpu_custom_call.1} parent=1 // loop_footer_branch
      %12 = sbr.rel target = $region3
    $region8: #{tpu_custom_call.1} parent=1 // loop_exit
      _
    %3542 = vsyncpa [#allocation3], 1
    %s3543 = scalar_lea.sflag [#allocation3], 1
    %3544 = vsyncpa %s3543, 1

</llo_original>
